<compile_context>
chip_gen: v7x
topology: tpu7x:2x2x1
jax: 0.10.0
libtpu: 0.0.40
codegen_flags: <defaults>
</compile_context>

<pallas_src>
import functools

import jax
import jax.numpy as jnp
import numpy as np
from jax.experimental import pallas as pl
from jax.experimental.pallas import tpu as pltpu

_EPS = 1e-6


def _basic_block_kernel(
    x_ref,
    g1_ref, be1_ref,
    w1_ref, b1_ref,
    w2_ref, b2_ref,
    gcoef_ref,
    g2_ref, be2_ref,
    w4_ref, b4_ref,
    w5_ref, b5_ref,
    beta_ref,
    out_ref,
    pad_ref,
    *, H, W, C,
):
    HW = H * W
    P = W + 1                                     # halo rows on each end

    x = x_ref[0, :, :].astype(jnp.float32)        # (HW, C), one image

    # ---- norm1: LayerNorm2d over the channel dim ----
    mu = jnp.mean(x, axis=1, keepdims=True)
    var = jnp.mean((x - mu) ** 2, axis=1, keepdims=True)
    xn = (x - mu) * jax.lax.rsqrt(var + _EPS) * g1_ref[...] + be1_ref[...]

    # ---- conv1 (1x1, c -> 2c), both SimpleGate halves in a single matmul ----
    y12 = jnp.dot(xn, w1_ref[...], preferred_element_type=jnp.float32) + b1_ref[...]

    # ---- conv2 (3x3 depthwise, padding=1) on the packed flattened slab ----
    # Zero only the halo rows; the interior [P, P+HW) is fully overwritten.
    pad_ref[0:P, :] = jnp.zeros((P, 2 * C), jnp.float32)
    pad_ref[P + HW:P + HW + P, :] = jnp.zeros((P, 2 * C), jnp.float32)
    pad_ref[P:P + HW, :] = y12

    # In-kernel coordinates / boundary masks (hoisted out of the tap loop).
    ridx = jax.lax.broadcasted_iota(jnp.int32, (HW, 1), 0)     # flat pixel index
    if (W & (W - 1)) == 0:                                      # fast path: W power of 2
        wc = ridx & (W - 1)
    else:
        wc = ridx % W
    hmask = {
        -1: (ridx >= W).astype(jnp.float32),          # h - 1 >= 0
        0: None,
        1: (ridx < (H - 1) * W).astype(jnp.float32),  # h + 1 <  H
    }
    wmask = {
        -1: (wc >= 1).astype(jnp.float32),            # w - 1 >= 0
        0: None,
        1: (wc < W - 1).astype(jnp.float32),          # w + 1 <  W
    }

    w2 = w2_ref[...]                                  # (9, 2C) depthwise taps (packed)
    z = jnp.zeros((HW, 2 * C), jnp.float32)
    for dh in (-1, 0, 1):
        for dw in (-1, 0, 1):
            k = (dh + 1) * 3 + (dw + 1)
            off = P + dh * W + dw
            mh, mw = hmask[dh], wmask[dw]
            if mh is not None and mw is not None:
                m = mh * mw
            else:
                m = mh if mh is not None else mw
            term = pad_ref[off:off + HW, :]
            if m is not None:
                term = term * m                        # mask-multiply, not where()
            z = z + term * w2[k:k + 1, :]
    z = z + b2_ref[...]

    # ---- SimpleGate + (identity Glayer/Llayer) fused channel coefficient ----
    g = z[:, :C] * z[:, C:]
    y = x + g * gcoef_ref[...]                         # dropout1 identity (p = 0)

    # ---- norm2 + conv4 (fused halves) + SimpleGate + conv5 ----
    mu2 = jnp.mean(y, axis=1, keepdims=True)
    var2 = jnp.mean((y - mu2) ** 2, axis=1, keepdims=True)
    yn = (y - mu2) * jax.lax.rsqrt(var2 + _EPS) * g2_ref[...] + be2_ref[...]
    f12 = jnp.dot(yn, w4_ref[...], preferred_element_type=jnp.float32) + b4_ref[...]
    fg = f12[:, :C] * f12[:, C:]
    f = jnp.dot(fg, w5_ref[...], preferred_element_type=jnp.float32) + b5_ref[...]

    # ---- final residual (dropout2 identity) ----
    out_ref[0, :, :] = (y + f * beta_ref[...]).astype(out_ref.dtype)


def basic_block_forward(x_nchw, params):
    """Pallas forward. Input/output are NCHW float32 (PyTorch convention)."""
    B, C, H, W = x_nchw.shape
    HW = H * W
    x3 = jnp.transpose(x_nchw, (0, 2, 3, 1)).reshape(B, HW, C).astype(jnp.float32)

    # Fuse the two SimpleGate halves of conv1/conv2/conv4 along the lane axis,
    # and fold the (identity-branch) channel coefficients into one vector.
    w1 = jnp.concatenate([params["w1a"], params["w1b"]], axis=1)   # (C, 2C)
    b1 = jnp.concatenate([params["b1a"], params["b1b"]], axis=1)   # (1, 2C)
    w2 = jnp.concatenate([params["w2a"], params["w2b"]], axis=1)   # (9, 2C)
    b2 = jnp.concatenate([params["b2a"], params["b2b"]], axis=1)   # (1, 2C)
    w4 = jnp.concatenate([params["w4a"], params["w4b"]], axis=1)   # (C, 2C)
    b4 = jnp.concatenate([params["b4a"], params["b4b"]], axis=1)   # (1, 2C)
    gcoef = (params["ia"] + 1.0) * params["lg"] + params["ll"]     # (1, C)

    weights = [
        params["g1"], params["be1"],
        w1, b1, w2, b2,
        gcoef,
        params["g2"], params["be2"],
        w4, b4,
        params["w5"], params["b5"],
        params["beta"],
    ]

    def _const_spec(p):
        zeros = (0,) * p.ndim
        return pl.BlockSpec(p.shape, lambda b, _z=zeros: _z)

    img_spec = pl.BlockSpec((1, HW, C), lambda b: (b, 0, 0))
    pad_rows = HW + 2 * (W + 1)

    out3 = pl.pallas_call(
        functools.partial(_basic_block_kernel, H=H, W=W, C=C),
        out_shape=jax.ShapeDtypeStruct((B, HW, C), jnp.float32),
        grid_spec=pltpu.PrefetchScalarGridSpec(
            num_scalar_prefetch=0,
            grid=(B,),
            in_specs=[img_spec] + [_const_spec(p) for p in weights],
            out_specs=img_spec,
            scratch_shapes=[pltpu.VMEM((pad_rows, 2 * C), jnp.float32)],
        ),
        compiler_params=pltpu.CompilerParams(
            dimension_semantics=("parallel",),
            vmem_limit_bytes=32 * 1024 * 1024,
        ),
    )(x3, *weights)

    return jnp.transpose(out3.reshape(B, H, W, C), (0, 3, 1, 2))


def init_params(key, c):
    """Deterministic synthetic parameters matching BasicBlock.__init__ shapes."""
    dw = 2 * c
    ks = jax.random.split(key, 16)

    def n(k, shape, s=0.1):
        return (s * jax.random.normal(k, shape)).astype(jnp.float32)

    W1 = n(ks[0], (dw, c))            # conv1 weight (2c, c, 1, 1) squeezed
    B1 = n(ks[1], (dw,))
    W2 = n(ks[2], (dw, 3, 3))         # conv2 depthwise weight (2c, 1, 3, 3) squeezed
    B2 = n(ks[3], (dw,))
    W4 = n(ks[4], (dw, c))            # conv4 weight (2c, c, 1, 1) squeezed
    B4 = n(ks[5], (dw,))
    W5 = n(ks[6], (c, c))             # conv5 weight (c, c, 1, 1) squeezed
    B5 = n(ks[7], (c,))

    return {
        "g1": (1.0 + n(ks[8], (c,))).reshape(1, c),
        "be1": n(ks[9], (c,)).reshape(1, c),
        "w1a": W1[:c].T, "w1b": W1[c:].T,
        "b1a": B1[:c].reshape(1, c), "b1b": B1[c:].reshape(1, c),
        "w2a": jnp.transpose(W2[:c], (1, 2, 0)).reshape(9, c),
        "w2b": jnp.transpose(W2[c:], (1, 2, 0)).reshape(9, c),
        "b2a": B2[:c].reshape(1, c), "b2b": B2[c:].reshape(1, c),
        "ia": n(ks[10], (c,)).reshape(1, c),    # inside_all (c,1,1)
        "lg": n(ks[11], (c,)).reshape(1, c),    # lamb_g (c,)
        "ll": n(ks[12], (c,)).reshape(1, c),    # lamb_l (c,)
        "g2": (1.0 + n(ks[13], (c,))).reshape(1, c),
        "be2": n(ks[14], (c,)).reshape(1, c),
        "w4a": W4[:c].T, "w4b": W4[c:].T,
        "b4a": B4[:c].reshape(1, c), "b4b": B4[c:].reshape(1, c),
        "w5": W5.T, "b5": B5.reshape(1, c),
        "beta": n(ks[15], (c,)).reshape(1, c),  # beta (1, c, 1, 1)
    }


def ref_forward(x_nchw, p):
    """Plain-JAX reference of the same forward pass (NHWC internally)."""
    x = jnp.transpose(x_nchw, (0, 2, 3, 1)).astype(jnp.float32)
    B, H, W, C = x.shape

    def ln(v, g, b):
        mu = v.mean(-1, keepdims=True)
        var = ((v - mu) ** 2).mean(-1, keepdims=True)
        return (v - mu) * jax.lax.rsqrt(var + _EPS) * g + b

    xn = ln(x, p["g1"][0], p["be1"][0])
    ya = xn @ p["w1a"] + p["b1a"][0]
    yb = xn @ p["w1b"] + p["b1b"][0]
    pa = jnp.pad(ya, ((0, 0), (1, 1), (1, 1), (0, 0)))
    pb = jnp.pad(yb, ((0, 0), (1, 1), (1, 1), (0, 0)))
    za = jnp.zeros_like(ya)
    zb = jnp.zeros_like(yb)
    for kh in range(3):
        for kw in range(3):
            k = kh * 3 + kw
            za = za + pa[:, kh:kh + H, kw:kw + W, :] * p["w2a"][k]
            zb = zb + pb[:, kh:kh + H, kw:kw + W, :] * p["w2b"][k]
    za = za + p["b2a"][0]
    zb = zb + p["b2b"][0]
    g = za * zb
    y = x + g * (p["ia"][0] + 1.0) * p["lg"][0] + g * p["ll"][0]
    yn = ln(y, p["g2"][0], p["be2"][0])
    fa = yn @ p["w4a"] + p["b4a"][0]
    fb = yn @ p["w4b"] + p["b4b"][0]
    f = (fa * fb) @ p["w5"] + p["b5"][0]
    out = y + f * p["beta"][0]
    return jnp.transpose(out, (0, 3, 1, 2))


if __name__ == "__main__":
    key = jax.random.PRNGKey(0)
    kx, kp = jax.random.split(key)
    c = 4
    x = jax.random.normal(kx, (2, c, 16, 16), dtype=jnp.float32)  # NCHW
    params = init_params(kp, c)

    out = basic_block_forward(x, params)
    out = jax.block_until_ready(out)

    ref = ref_forward(x, params)
    assert out.shape == x.shape and out.dtype == jnp.float32
    np.testing.assert_allclose(np.asarray(out), np.asarray(ref), rtol=1e-4, atol=1e-4)
    print("KERNEL_OK")
</pallas_src>

<mosaic_0001>
module attributes {stable_mosaic.version = 11 : i64} {
  func.func @_basic_block_kernel(%arg0: i32, %arg1: memref<1x256x4xf32, #tpu.memory_space<vmem>>, %arg2: memref<1x4xf32, #tpu.memory_space<vmem>>, %arg3: memref<1x4xf32, #tpu.memory_space<vmem>>, %arg4: memref<4x8xf32, #tpu.memory_space<vmem>>, %arg5: memref<1x8xf32, #tpu.memory_space<vmem>>, %arg6: memref<9x8xf32, #tpu.memory_space<vmem>>, %arg7: memref<1x8xf32, #tpu.memory_space<vmem>>, %arg8: memref<1x4xf32, #tpu.memory_space<vmem>>, %arg9: memref<1x4xf32, #tpu.memory_space<vmem>>, %arg10: memref<1x4xf32, #tpu.memory_space<vmem>>, %arg11: memref<4x8xf32, #tpu.memory_space<vmem>>, %arg12: memref<1x8xf32, #tpu.memory_space<vmem>>, %arg13: memref<4x4xf32, #tpu.memory_space<vmem>>, %arg14: memref<1x4xf32, #tpu.memory_space<vmem>>, %arg15: memref<1x4xf32, #tpu.memory_space<vmem>>, %arg16: memref<1x256x4xf32, #tpu.memory_space<vmem>>, %arg17: memref<290x8xf32, #tpu.memory_space<vmem>>) attributes {dimension_semantics = [#tpu.dimension_semantics<parallel>], iteration_bounds = array<i64: 2>, scalar_prefetch = 0 : i64, scratch_operands = 1 : i64, tpu.core_type = #tpu.core_type<tc>, window_params = [{transform_indices = @transform_0, window_bounds = array<i64: 1, 256, 4>}, {pipeline_mode = #tpu.pipeline_mode<synchronous>, transform_indices = @transform_1, window_bounds = array<i64: 1, 4>}, {pipeline_mode = #tpu.pipeline_mode<synchronous>, transform_indices = @transform_2, window_bounds = array<i64: 1, 4>}, {pipeline_mode = #tpu.pipeline_mode<synchronous>, transform_indices = @transform_3, window_bounds = array<i64: 4, 8>}, {pipeline_mode = #tpu.pipeline_mode<synchronous>, transform_indices = @transform_4, window_bounds = array<i64: 1, 8>}, {pipeline_mode = #tpu.pipeline_mode<synchronous>, transform_indices = @transform_5, window_bounds = array<i64: 9, 8>}, {pipeline_mode = #tpu.pipeline_mode<synchronous>, transform_indices = @transform_6, window_bounds = array<i64: 1, 8>}, {pipeline_mode = #tpu.pipeline_mode<synchronous>, transform_indices = @transform_7, window_bounds = array<i64: 1, 4>}, {pipeline_mode = #tpu.pipeline_mode<synchronous>, transform_indices = @transform_8, window_bounds = array<i64: 1, 4>}, {pipeline_mode = #tpu.pipeline_mode<synchronous>, transform_indices = @transform_9, window_bounds = array<i64: 1, 4>}, {pipeline_mode = #tpu.pipeline_mode<synchronous>, transform_indices = @transform_10, window_bounds = array<i64: 4, 8>}, {pipeline_mode = #tpu.pipeline_mode<synchronous>, transform_indices = @transform_11, window_bounds = array<i64: 1, 8>}, {pipeline_mode = #tpu.pipeline_mode<synchronous>, transform_indices = @transform_12, window_bounds = array<i64: 4, 4>}, {pipeline_mode = #tpu.pipeline_mode<synchronous>, transform_indices = @transform_13, window_bounds = array<i64: 1, 4>}, {pipeline_mode = #tpu.pipeline_mode<synchronous>, transform_indices = @transform_14, window_bounds = array<i64: 1, 4>}, {transform_indices = @transform_15, window_bounds = array<i64: 1, 256, 4>}]} {
    %c0 = arith.constant 0 : index
    %c0_0 = arith.constant 0 : index
    %c0_1 = arith.constant 0 : index
    %0 = vector.load %arg1[%c0, %c0_0, %c0_1] : memref<1x256x4xf32, #tpu.memory_space<vmem>>, vector<1x256x4xf32>
    %1 = vector.shape_cast %0 : vector<1x256x4xf32> to vector<256x4xf32>
    %cst = arith.constant dense<0.000000e+00> : vector<256xf32>
    %2 = vector.multi_reduction <add>, %1, %cst [1] : vector<256x4xf32> to vector<256xf32>
    %3 = vector.shape_cast %2 : vector<256xf32> to vector<256x1xf32>
    %cst_2 = arith.constant 4.000000e+00 : f32
    %4 = vector.broadcast %cst_2 : f32 to vector<256x1xf32>
    %5 = arith.divf %3, %4 : vector<256x1xf32>
    %6 = vector.broadcast %5 : vector<256x1xf32> to vector<256x4xf32>
    %7 = arith.subf %1, %6 : vector<256x4xf32>
    %8 = arith.mulf %7, %7 : vector<256x4xf32>
    %cst_3 = arith.constant dense<0.000000e+00> : vector<256xf32>
    %9 = vector.multi_reduction <add>, %8, %cst_3 [1] : vector<256x4xf32> to vector<256xf32>
    %10 = vector.shape_cast %9 : vector<256xf32> to vector<256x1xf32>
    %cst_4 = arith.constant 4.000000e+00 : f32
    %11 = vector.broadcast %cst_4 : f32 to vector<256x1xf32>
    %12 = arith.divf %10, %11 : vector<256x1xf32>
    %13 = vector.broadcast %5 : vector<256x1xf32> to vector<256x4xf32>
    %14 = arith.subf %1, %13 : vector<256x4xf32>
    %cst_5 = arith.constant 9.99999997E-7 : f32
    %15 = vector.broadcast %cst_5 : f32 to vector<256x1xf32>
    %16 = arith.addf %12, %15 : vector<256x1xf32>
    %17 = math.rsqrt %16 : vector<256x1xf32>
    %18 = vector.broadcast %17 : vector<256x1xf32> to vector<256x4xf32>
    %19 = arith.mulf %14, %18 : vector<256x4xf32>
    %c0_6 = arith.constant 0 : index
    %c0_7 = arith.constant 0 : index
    %20 = vector.load %arg2[%c0_6, %c0_7] : memref<1x4xf32, #tpu.memory_space<vmem>>, vector<1x4xf32>
    %21 = vector.broadcast %20 : vector<1x4xf32> to vector<256x4xf32>
    %22 = arith.mulf %19, %21 : vector<256x4xf32>
    %c0_8 = arith.constant 0 : index
    %c0_9 = arith.constant 0 : index
    %23 = vector.load %arg3[%c0_8, %c0_9] : memref<1x4xf32, #tpu.memory_space<vmem>>, vector<1x4xf32>
    %24 = vector.broadcast %23 : vector<1x4xf32> to vector<256x4xf32>
    %25 = arith.addf %22, %24 : vector<256x4xf32>
    %c0_10 = arith.constant 0 : index
    %c0_11 = arith.constant 0 : index
    %26 = vector.load %arg4[%c0_10, %c0_11] : memref<4x8xf32, #tpu.memory_space<vmem>>, vector<4x8xf32>
    %cst_12 = arith.constant dense<0.000000e+00> : vector<256x8xf32>
    %27 = tpu.matmul %25, %26, %cst_12 {dimension_numbers = #tpu.dot_dimension_numbers<[1], [0], [0], [1], [0, 0, 1, 1], [], []>} : vector<256x4xf32>, vector<4x8xf32>, vector<256x8xf32> -> vector<256x8xf32>
    %c0_13 = arith.constant 0 : index
    %c0_14 = arith.constant 0 : index
    %28 = vector.load %arg5[%c0_13, %c0_14] : memref<1x8xf32, #tpu.memory_space<vmem>>, vector<1x8xf32>
    %29 = vector.broadcast %28 : vector<1x8xf32> to vector<256x8xf32>
    %30 = arith.addf %27, %29 : vector<256x8xf32>
    %cst_15 = arith.constant 0.000000e+00 : f32
    %31 = vector.broadcast %cst_15 : f32 to vector<17x8xf32>
    %c0_16 = arith.constant 0 : index
    %c0_17 = arith.constant 0 : index
    %32 = vector.load %arg17[%c0_16, %c0_17] : memref<290x8xf32, #tpu.memory_space<vmem>>, vector<17x8xf32>
    tpu.vector_store %arg17[%c0_16, %c0_17], %31 {strides = array<i32>} : memref<290x8xf32, #tpu.memory_space<vmem>>, vector<17x8xf32>,
    %cst_18 = arith.constant 0.000000e+00 : f32
    %33 = vector.broadcast %cst_18 : f32 to vector<17x8xf32>
    %c273 = arith.constant 273 : index
    %c0_19 = arith.constant 0 : index
    %34 = vector.load %arg17[%c273, %c0_19] : memref<290x8xf32, #tpu.memory_space<vmem>>, vector<17x8xf32>
    tpu.vector_store %arg17[%c273, %c0_19], %33 {strides = array<i32>} : memref<290x8xf32, #tpu.memory_space<vmem>>, vector<17x8xf32>,
    %c17 = arith.constant 17 : index
    %c0_20 = arith.constant 0 : index
    %35 = vector.load %arg17[%c17, %c0_20] : memref<290x8xf32, #tpu.memory_space<vmem>>, vector<256x8xf32>
    tpu.vector_store %arg17[%c17, %c0_20], %30 {strides = array<i32>} : memref<290x8xf32, #tpu.memory_space<vmem>>, vector<256x8xf32>,
    %36 = tpu.iota {dimensions = array<i32: 0>} : vector<256x1xi32>
    %c15_i32 = arith.constant 15 : i32
    %37 = vector.broadcast %c15_i32 : i32 to vector<256x1xi32>
    %38 = arith.andi %36, %37 : vector<256x1xi32>
    %c16_i32 = arith.constant 16 : i32
    %39 = vector.broadcast %c16_i32 : i32 to vector<256x1xi32>
    %40 = arith.cmpi sge, %36, %39 : vector<256x1xi32>
    %41 = arith.extui %40 : vector<256x1xi1> to vector<256x1xi32>
    %42 = arith.sitofp %41 : vector<256x1xi32> to vector<256x1xf32>
    %c240_i32 = arith.constant 240 : i32
    %43 = vector.broadcast %c240_i32 : i32 to vector<256x1xi32>
    %44 = arith.cmpi slt, %36, %43 : vector<256x1xi32>
    %45 = arith.extui %44 : vector<256x1xi1> to vector<256x1xi32>
    %46 = arith.sitofp %45 : vector<256x1xi32> to vector<256x1xf32>
    %c1_i32 = arith.constant 1 : i32
    %47 = vector.broadcast %c1_i32 : i32 to vector<256x1xi32>
    %48 = arith.cmpi sge, %38, %47 : vector<256x1xi32>
    %49 = arith.extui %48 : vector<256x1xi1> to vector<256x1xi32>
    %50 = arith.sitofp %49 : vector<256x1xi32> to vector<256x1xf32>
    %c15_i32_21 = arith.constant 15 : i32
    %51 = vector.broadcast %c15_i32_21 : i32 to vector<256x1xi32>
    %52 = arith.cmpi slt, %38, %51 : vector<256x1xi32>
    %53 = arith.extui %52 : vector<256x1xi1> to vector<256x1xi32>
    %54 = arith.sitofp %53 : vector<256x1xi32> to vector<256x1xf32>
    %c0_22 = arith.constant 0 : index
    %c0_23 = arith.constant 0 : index
    %55 = vector.load %arg6[%c0_22, %c0_23] : memref<9x8xf32, #tpu.memory_space<vmem>>, vector<9x8xf32>
    %cst_24 = arith.constant 0.000000e+00 : f32
    %56 = vector.broadcast %cst_24 : f32 to vector<256x8xf32>
    %57 = arith.mulf %42, %50 : vector<256x1xf32>
    %c0_25 = arith.constant 0 : index
    %c0_26 = arith.constant 0 : index
    %58 = vector.load %arg17[%c0_25, %c0_26] : memref<290x8xf32, #tpu.memory_space<vmem>>, vector<256x8xf32>
    %59 = vector.broadcast %57 : vector<256x1xf32> to vector<256x8xf32>
    %60 = arith.mulf %58, %59 : vector<256x8xf32>
    %61 = vector.extract_strided_slice %55 {offsets = [0, 0], sizes = [1, 8], strides = [1, 1]} : vector<9x8xf32> to vector<1x8xf32>
    %62 = vector.broadcast %61 : vector<1x8xf32> to vector<256x8xf32>
    %63 = arith.mulf %60, %62 : vector<256x8xf32>
    %64 = arith.addf %56, %63 : vector<256x8xf32>
    %c1 = arith.constant 1 : index
    %c0_27 = arith.constant 0 : index
    %65 = vector.load %arg17[%c1, %c0_27] : memref<290x8xf32, #tpu.memory_space<vmem>>, vector<256x8xf32>
    %66 = vector.broadcast %42 : vector<256x1xf32> to vector<256x8xf32>
    %67 = arith.mulf %65, %66 : vector<256x8xf32>
    %68 = vector.extract_strided_slice %55 {offsets = [1, 0], sizes = [1, 8], strides = [1, 1]} : vector<9x8xf32> to vector<1x8xf32>
    %69 = vector.broadcast %68 : vector<1x8xf32> to vector<256x8xf32>
    %70 = arith.mulf %67, %69 : vector<256x8xf32>
    %71 = arith.addf %64, %70 : vector<256x8xf32>
    %72 = arith.mulf %42, %54 : vector<256x1xf32>
    %c2 = arith.constant 2 : index
    %c0_28 = arith.constant 0 : index
    %73 = vector.load %arg17[%c2, %c0_28] : memref<290x8xf32, #tpu.memory_space<vmem>>, vector<256x8xf32>
    %74 = vector.broadcast %72 : vector<256x1xf32> to vector<256x8xf32>
    %75 = arith.mulf %73, %74 : vector<256x8xf32>
    %76 = vector.extract_strided_slice %55 {offsets = [2, 0], sizes = [1, 8], strides = [1, 1]} : vector<9x8xf32> to vector<1x8xf32>
    %77 = vector.broadcast %76 : vector<1x8xf32> to vector<256x8xf32>
    %78 = arith.mulf %75, %77 : vector<256x8xf32>
    %79 = arith.addf %71, %78 : vector<256x8xf32>
    %c16 = arith.constant 16 : index
    %c0_29 = arith.constant 0 : index
    %80 = vector.load %arg17[%c16, %c0_29] : memref<290x8xf32, #tpu.memory_space<vmem>>, vector<256x8xf32>
    %81 = vector.broadcast %50 : vector<256x1xf32> to vector<256x8xf32>
    %82 = arith.mulf %80, %81 : vector<256x8xf32>
    %83 = vector.extract_strided_slice %55 {offsets = [3, 0], sizes = [1, 8], strides = [1, 1]} : vector<9x8xf32> to vector<1x8xf32>
    %84 = vector.broadcast %83 : vector<1x8xf32> to vector<256x8xf32>
    %85 = arith.mulf %82, %84 : vector<256x8xf32>
    %86 = arith.addf %79, %85 : vector<256x8xf32>
    %c17_30 = arith.constant 17 : index
    %c0_31 = arith.constant 0 : index
    %87 = vector.load %arg17[%c17_30, %c0_31] : memref<290x8xf32, #tpu.memory_space<vmem>>, vector<256x8xf32>
    %88 = vector.extract_strided_slice %55 {offsets = [4, 0], sizes = [1, 8], strides = [1, 1]} : vector<9x8xf32> to vector<1x8xf32>
    %89 = vector.broadcast %88 : vector<1x8xf32> to vector<256x8xf32>
    %90 = arith.mulf %87, %89 : vector<256x8xf32>
    %91 = arith.addf %86, %90 : vector<256x8xf32>
    %c18 = arith.constant 18 : index
    %c0_32 = arith.constant 0 : index
    %92 = vector.load %arg17[%c18, %c0_32] : memref<290x8xf32, #tpu.memory_space<vmem>>, vector<256x8xf32>
    %93 = vector.broadcast %54 : vector<256x1xf32> to vector<256x8xf32>
    %94 = arith.mulf %92, %93 : vector<256x8xf32>
    %95 = vector.extract_strided_slice %55 {offsets = [5, 0], sizes = [1, 8], strides = [1, 1]} : vector<9x8xf32> to vector<1x8xf32>
    %96 = vector.broadcast %95 : vector<1x8xf32> to vector<256x8xf32>
    %97 = arith.mulf %94, %96 : vector<256x8xf32>
    %98 = arith.addf %91, %97 : vector<256x8xf32>
    %99 = arith.mulf %46, %50 : vector<256x1xf32>
    %c32 = arith.constant 32 : index
    %c0_33 = arith.constant 0 : index
    %100 = vector.load %arg17[%c32, %c0_33] : memref<290x8xf32, #tpu.memory_space<vmem>>, vector<256x8xf32>
    %101 = vector.broadcast %99 : vector<256x1xf32> to vector<256x8xf32>
    %102 = arith.mulf %100, %101 : vector<256x8xf32>
    %103 = vector.extract_strided_slice %55 {offsets = [6, 0], sizes = [1, 8], strides = [1, 1]} : vector<9x8xf32> to vector<1x8xf32>
    %104 = vector.broadcast %103 : vector<1x8xf32> to vector<256x8xf32>
    %105 = arith.mulf %102, %104 : vector<256x8xf32>
    %106 = arith.addf %98, %105 : vector<256x8xf32>
    %c33 = arith.constant 33 : index
    %c0_34 = arith.constant 0 : index
    %107 = vector.load %arg17[%c33, %c0_34] : memref<290x8xf32, #tpu.memory_space<vmem>>, vector<256x8xf32>
    %108 = vector.broadcast %46 : vector<256x1xf32> to vector<256x8xf32>
    %109 = arith.mulf %107, %108 : vector<256x8xf32>
    %110 = vector.extract_strided_slice %55 {offsets = [7, 0], sizes = [1, 8], strides = [1, 1]} : vector<9x8xf32> to vector<1x8xf32>
    %111 = vector.broadcast %110 : vector<1x8xf32> to vector<256x8xf32>
    %112 = arith.mulf %109, %111 : vector<256x8xf32>
    %113 = arith.addf %106, %112 : vector<256x8xf32>
    %114 = arith.mulf %46, %54 : vector<256x1xf32>
    %c34 = arith.constant 34 : index
    %c0_35 = arith.constant 0 : index
    %115 = vector.load %arg17[%c34, %c0_35] : memref<290x8xf32, #tpu.memory_space<vmem>>, vector<256x8xf32>
    %116 = vector.broadcast %114 : vector<256x1xf32> to vector<256x8xf32>
    %117 = arith.mulf %115, %116 : vector<256x8xf32>
    %118 = vector.extract_strided_slice %55 {offsets = [8, 0], sizes = [1, 8], strides = [1, 1]} : vector<9x8xf32> to vector<1x8xf32>
    %119 = vector.broadcast %118 : vector<1x8xf32> to vector<256x8xf32>
    %120 = arith.mulf %117, %119 : vector<256x8xf32>
    %121 = arith.addf %113, %120 : vector<256x8xf32>
    %c0_36 = arith.constant 0 : index
    %c0_37 = arith.constant 0 : index
    %122 = vector.load %arg7[%c0_36, %c0_37] : memref<1x8xf32, #tpu.memory_space<vmem>>, vector<1x8xf32>
    %123 = vector.broadcast %122 : vector<1x8xf32> to vector<256x8xf32>
    %124 = arith.addf %121, %123 : vector<256x8xf32>
    %125 = vector.extract_strided_slice %124 {offsets = [0, 0], sizes = [256, 4], strides = [1, 1]} : vector<256x8xf32> to vector<256x4xf32>
    %126 = vector.extract_strided_slice %124 {offsets = [0, 4], sizes = [256, 4], strides = [1, 1]} : vector<256x8xf32> to vector<256x4xf32>
    %127 = arith.mulf %125, %126 : vector<256x4xf32>
    %c0_38 = arith.constant 0 : index
    %c0_39 = arith.constant 0 : index
    %128 = vector.load %arg8[%c0_38, %c0_39] : memref<1x4xf32, #tpu.memory_space<vmem>>, vector<1x4xf32>
    %129 = vector.broadcast %128 : vector<1x4xf32> to vector<256x4xf32>
    %130 = arith.mulf %127, %129 : vector<256x4xf32>
    %131 = arith.addf %1, %130 : vector<256x4xf32>
    %cst_40 = arith.constant dense<0.000000e+00> : vector<256xf32>
    %132 = vector.multi_reduction <add>, %131, %cst_40 [1] : vector<256x4xf32> to vector<256xf32>
    %133 = vector.shape_cast %132 : vector<256xf32> to vector<256x1xf32>
    %cst_41 = arith.constant 4.000000e+00 : f32
    %134 = vector.broadcast %cst_41 : f32 to vector<256x1xf32>
    %135 = arith.divf %133, %134 : vector<256x1xf32>
    %136 = vector.broadcast %135 : vector<256x1xf32> to vector<256x4xf32>
    %137 = arith.subf %131, %136 : vector<256x4xf32>
    %138 = arith.mulf %137, %137 : vector<256x4xf32>
    %cst_42 = arith.constant dense<0.000000e+00> : vector<256xf32>
    %139 = vector.multi_reduction <add>, %138, %cst_42 [1] : vector<256x4xf32> to vector<256xf32>
    %140 = vector.shape_cast %139 : vector<256xf32> to vector<256x1xf32>
    %cst_43 = arith.constant 4.000000e+00 : f32
    %141 = vector.broadcast %cst_43 : f32 to vector<256x1xf32>
    %142 = arith.divf %140, %141 : vector<256x1xf32>
    %143 = vector.broadcast %135 : vector<256x1xf32> to vector<256x4xf32>
    %144 = arith.subf %131, %143 : vector<256x4xf32>
    %cst_44 = arith.constant 9.99999997E-7 : f32
    %145 = vector.broadcast %cst_44 : f32 to vector<256x1xf32>
    %146 = arith.addf %142, %145 : vector<256x1xf32>
    %147 = math.rsqrt %146 : vector<256x1xf32>
    %148 = vector.broadcast %147 : vector<256x1xf32> to vector<256x4xf32>
    %149 = arith.mulf %144, %148 : vector<256x4xf32>
    %c0_45 = arith.constant 0 : index
    %c0_46 = arith.constant 0 : index
    %150 = vector.load %arg9[%c0_45, %c0_46] : memref<1x4xf32, #tpu.memory_space<vmem>>, vector<1x4xf32>
    %151 = vector.broadcast %150 : vector<1x4xf32> to vector<256x4xf32>
    %152 = arith.mulf %149, %151 : vector<256x4xf32>
    %c0_47 = arith.constant 0 : index
    %c0_48 = arith.constant 0 : index
    %153 = vector.load %arg10[%c0_47, %c0_48] : memref<1x4xf32, #tpu.memory_space<vmem>>, vector<1x4xf32>
    %154 = vector.broadcast %153 : vector<1x4xf32> to vector<256x4xf32>
    %155 = arith.addf %152, %154 : vector<256x4xf32>
    %c0_49 = arith.constant 0 : index
    %c0_50 = arith.constant 0 : index
    %156 = vector.load %arg11[%c0_49, %c0_50] : memref<4x8xf32, #tpu.memory_space<vmem>>, vector<4x8xf32>
    %cst_51 = arith.constant dense<0.000000e+00> : vector<256x8xf32>
    %157 = tpu.matmul %155, %156, %cst_51 {dimension_numbers = #tpu.dot_dimension_numbers<[1], [0], [0], [1], [0, 0, 1, 1], [], []>} : vector<256x4xf32>, vector<4x8xf32>, vector<256x8xf32> -> vector<256x8xf32>
    %c0_52 = arith.constant 0 : index
    %c0_53 = arith.constant 0 : index
    %158 = vector.load %arg12[%c0_52, %c0_53] : memref<1x8xf32, #tpu.memory_space<vmem>>, vector<1x8xf32>
    %159 = vector.broadcast %158 : vector<1x8xf32> to vector<256x8xf32>
    %160 = arith.addf %157, %159 : vector<256x8xf32>
    %161 = vector.extract_strided_slice %160 {offsets = [0, 0], sizes = [256, 4], strides = [1, 1]} : vector<256x8xf32> to vector<256x4xf32>
    %162 = vector.extract_strided_slice %160 {offsets = [0, 4], sizes = [256, 4], strides = [1, 1]} : vector<256x8xf32> to vector<256x4xf32>
    %163 = arith.mulf %161, %162 : vector<256x4xf32>
    %c0_54 = arith.constant 0 : index
    %c0_55 = arith.constant 0 : index
    %164 = vector.load %arg13[%c0_54, %c0_55] : memref<4x4xf32, #tpu.memory_space<vmem>>, vector<4x4xf32>
    %cst_56 = arith.constant dense<0.000000e+00> : vector<256x4xf32>
    %165 = tpu.matmul %163, %164, %cst_56 {dimension_numbers = #tpu.dot_dimension_numbers<[1], [0], [0], [1], [0, 0, 1, 1], [], []>} : vector<256x4xf32>, vector<4x4xf32>, vector<256x4xf32> -> vector<256x4xf32>
    %c0_57 = arith.constant 0 : index
    %c0_58 = arith.constant 0 : index
    %166 = vector.load %arg14[%c0_57, %c0_58] : memref<1x4xf32, #tpu.memory_space<vmem>>, vector<1x4xf32>
    %167 = vector.broadcast %166 : vector<1x4xf32> to vector<256x4xf32>
    %168 = arith.addf %165, %167 : vector<256x4xf32>
    %c0_59 = arith.constant 0 : index
    %c0_60 = arith.constant 0 : index
    %169 = vector.load %arg15[%c0_59, %c0_60] : memref<1x4xf32, #tpu.memory_space<vmem>>, vector<1x4xf32>
    %170 = vector.broadcast %169 : vector<1x4xf32> to vector<256x4xf32>
    %171 = arith.mulf %168, %170 : vector<256x4xf32>
    %172 = arith.addf %131, %171 : vector<256x4xf32>
    %c0_61 = arith.constant 0 : index
    %c0_62 = arith.constant 0 : index
    %c0_63 = arith.constant 0 : index
    %173 = vector.load %arg16[%c0_61, %c0_62, %c0_63] : memref<1x256x4xf32, #tpu.memory_space<vmem>>, vector<1x256x4xf32>
    %174 = vector.shape_cast %173 : vector<1x256x4xf32> to vector<256x4xf32>
    %175 = vector.shape_cast %172 : vector<256x4xf32> to vector<1x256x4xf32>
    tpu.vector_store %arg16[%c0_61, %c0_62, %c0_63], %175 {strides = array<i32>} : memref<1x256x4xf32, #tpu.memory_space<vmem>>, vector<1x256x4xf32>,
    return
  }
  func.func @transform_0(%arg0: i32) -> (i32, i32, i32) {
    %c0_i32 = arith.constant 0 : i32
    %c0_i32_0 = arith.constant 0 : i32
    %c0_i32_1 = arith.constant 0 : i32
    return %arg0, %c0_i32, %c0_i32_0 : i32, i32, i32
  }
  func.func @transform_1(%arg0: i32) -> (i32, i32) {
    %c0_i32 = arith.constant 0 : i32
    %c0_i32_0 = arith.constant 0 : i32
    %c0_i32_1 = arith.constant 0 : i32
    return %c0_i32, %c0_i32_0 : i32, i32
  }
  func.func @transform_2(%arg0: i32) -> (i32, i32) {
    %c0_i32 = arith.constant 0 : i32
    %c0_i32_0 = arith.constant 0 : i32
    %c0_i32_1 = arith.constant 0 : i32
    return %c0_i32, %c0_i32_0 : i32, i32
  }
  func.func @transform_3(%arg0: i32) -> (i32, i32) {
    %c0_i32 = arith.constant 0 : i32
    %c0_i32_0 = arith.constant 0 : i32
    %c0_i32_1 = arith.constant 0 : i32
    return %c0_i32, %c0_i32_0 : i32, i32
  }
  func.func @transform_4(%arg0: i32) -> (i32, i32) {
    %c0_i32 = arith.constant 0 : i32
    %c0_i32_0 = arith.constant 0 : i32
    %c0_i32_1 = arith.constant 0 : i32
    return %c0_i32, %c0_i32_0 : i32, i32
  }
  func.func @transform_5(%arg0: i32) -> (i32, i32) {
    %c0_i32 = arith.constant 0 : i32
    %c0_i32_0 = arith.constant 0 : i32
    %c0_i32_1 = arith.constant 0 : i32
    return %c0_i32, %c0_i32_0 : i32, i32
  }
  func.func @transform_6(%arg0: i32) -> (i32, i32) {
    %c0_i32 = arith.constant 0 : i32
    %c0_i32_0 = arith.constant 0 : i32
    %c0_i32_1 = arith.constant 0 : i32
    return %c0_i32, %c0_i32_0 : i32, i32
  }
  func.func @transform_7(%arg0: i32) -> (i32, i32) {
    %c0_i32 = arith.constant 0 : i32
    %c0_i32_0 = arith.constant 0 : i32
    %c0_i32_1 = arith.constant 0 : i32
    return %c0_i32, %c0_i32_0 : i32, i32
  }
  func.func @transform_8(%arg0: i32) -> (i32, i32) {
    %c0_i32 = arith.constant 0 : i32
    %c0_i32_0 = arith.constant 0 : i32
    %c0_i32_1 = arith.constant 0 : i32
    return %c0_i32, %c0_i32_0 : i32, i32
  }
  func.func @transform_9(%arg0: i32) -> (i32, i32) {
    %c0_i32 = arith.constant 0 : i32
    %c0_i32_0 = arith.constant 0 : i32
    %c0_i32_1 = arith.constant 0 : i32
    return %c0_i32, %c0_i32_0 : i32, i32
  }
  func.func @transform_10(%arg0: i32) -> (i32, i32) {
    %c0_i32 = arith.constant 0 : i32
    %c0_i32_0 = arith.constant 0 : i32
    %c0_i32_1 = arith.constant 0 : i32
    return %c0_i32, %c0_i32_0 : i32, i32
  }
  func.func @transform_11(%arg0: i32) -> (i32, i32) {
    %c0_i32 = arith.constant 0 : i32
    %c0_i32_0 = arith.constant 0 : i32
    %c0_i32_1 = arith.constant 0 : i32
    return %c0_i32, %c0_i32_0 : i32, i32
  }
  func.func @transform_12(%arg0: i32) -> (i32, i32) {
    %c0_i32 = arith.constant 0 : i32
    %c0_i32_0 = arith.constant 0 : i32
    %c0_i32_1 = arith.constant 0 : i32
    return %c0_i32, %c0_i32_0 : i32, i32
  }
  func.func @transform_13(%arg0: i32) -> (i32, i32) {
    %c0_i32 = arith.constant 0 : i32
    %c0_i32_0 = arith.constant 0 : i32
    %c0_i32_1 = arith.constant 0 : i32
    return %c0_i32, %c0_i32_0 : i32, i32
  }
  func.func @transform_14(%arg0: i32) -> (i32, i32) {
    %c0_i32 = arith.constant 0 : i32
    %c0_i32_0 = arith.constant 0 : i32
    %c0_i32_1 = arith.constant 0 : i32
    return %c0_i32, %c0_i32_0 : i32, i32
  }
  func.func @transform_15(%arg0: i32) -> (i32, i32, i32) {
    %c0_i32 = arith.constant 0 : i32
    %c0_i32_0 = arith.constant 0 : i32
    %c0_i32_1 = arith.constant 0 : i32
    return %arg0, %c0_i32, %c0_i32_0 : i32, i32, i32
  }
}

</mosaic_0001>

<llo_original>
// kernel: tpu_custom_call.1
$region0: #{tpu_custom_call.1}
  #allocation0 [shape = 'u32[]', space=smem, size = 0x4, offset = 0x4, fixed_abs, tag = 'smem constant byte address 0x4 - core index']
  #allocation1 [shape = 'u32[144,128]{1,0:T(1,128)}', space=vmem, size = 0x12000, scoped, tag = 'internal scratch']
  #allocation2 [shape = 'f32[290,8]{1,0:T(8,128)}', space=vmem, size = 0x25000, scoped, tag = 'scratch operand']
  %s0 = inlined_call_operand.vmem [shape: f32[2,256,4], index: 0, kind: input, shape index: {}]
  %s1 = inlined_call_operand.vmem [shape: f32[1,4], index: 1, kind: input, shape index: {}]
  %s2 = inlined_call_operand.vmem [shape: f32[1,4], index: 2, kind: input, shape index: {}]
  %s3 = inlined_call_operand.vmem [shape: f32[4,8], index: 3, kind: input, shape index: {}]
  %s4 = inlined_call_operand.vmem [shape: f32[1,8], index: 4, kind: input, shape index: {}]
  %s5 = inlined_call_operand.vmem [shape: f32[9,8], index: 5, kind: input, shape index: {}]
  %s6 = inlined_call_operand.vmem [shape: f32[1,8], index: 6, kind: input, shape index: {}]
  %s7 = inlined_call_operand.vmem [shape: f32[1,4], index: 7, kind: input, shape index: {}]
  %s8 = inlined_call_operand.vmem [shape: f32[1,4], index: 8, kind: input, shape index: {}]
  %s9 = inlined_call_operand.vmem [shape: f32[1,4], index: 9, kind: input, shape index: {}]
  %s10 = inlined_call_operand.vmem [shape: f32[4,8], index: 10, kind: input, shape index: {}]
  %s11 = inlined_call_operand.vmem [shape: f32[1,8], index: 11, kind: input, shape index: {}]
  %s12 = inlined_call_operand.vmem [shape: f32[4,4], index: 12, kind: input, shape index: {}]
  %s13 = inlined_call_operand.vmem [shape: f32[1,4], index: 13, kind: input, shape index: {}]
  %s14 = inlined_call_operand.vmem [shape: f32[1,4], index: 14, kind: input, shape index: {}]
  %s15 = inlined_call_operand.vmem [shape: f32[2,256,4], index: 15, kind: output, shape index: {}]
  %s16 = sld [smem:[#allocation0]]
  $region93: #{tpu_custom_call.1} parent=0
    _
  %s18 = ssub.s32 1, %s16
  %s19 = scalar_select 0, %s18, %s16
  loop: start=0, step=1, limit=4
  $region2: #{tpu_custom_call.1} parent=0 // loop_pre_header
    _
  $region3: #{tpu_custom_call.1} parent=0 // loop_header
    %s21 = sphi 0, %s25
    %p22 = scmp.ge.s32.totalorder %s21, 4
    %s31 = sphi 0, %s33
    %s34 = sphi 0, %s31
    %s35 = sphi 0, %s34
    %s51 = sphi 0, %s35
    %s55 = sphi 0, %s55
    %s57 = sphi 0, %s55
    %s58 = sphi 0, %s57
    %s72 = sphi 0, %s58
    %s76 = sphi 0, %s76
    %s78 = sphi 0, %s76
    %s79 = sphi 0, %s78
    %s93 = sphi 0, %s79
    %s97 = sphi 0, %s97
    %s99 = sphi 0, %s97
    %s100 = sphi 0, %s99
    %s114 = sphi 0, %s100
    %s118 = sphi 0, %s118
    %s120 = sphi 0, %s118
    %s121 = sphi 0, %s120
    %s135 = sphi 0, %s121
    %s139 = sphi 0, %s139
    %s141 = sphi 0, %s139
    %s142 = sphi 0, %s141
    %s156 = sphi 0, %s142
    %s160 = sphi 0, %s160
    %s162 = sphi 0, %s160
    %s163 = sphi 0, %s162
    %s177 = sphi 0, %s163
    %s181 = sphi 0, %s181
    %s183 = sphi 0, %s181
    %s184 = sphi 0, %s183
    %s198 = sphi 0, %s184
    %s202 = sphi 0, %s202
    %s204 = sphi 0, %s202
    %s205 = sphi 0, %s204
    %s219 = sphi 0, %s205
    %s223 = sphi 0, %s223
    %s225 = sphi 0, %s223
    %s226 = sphi 0, %s225
    %s240 = sphi 0, %s226
    %s244 = sphi 0, %s244
    %s246 = sphi 0, %s244
    %s247 = sphi 0, %s246
    %s261 = sphi 0, %s247
    %s265 = sphi 0, %s265
    %s267 = sphi 0, %s265
    %s268 = sphi 0, %s267
    %s282 = sphi 0, %s268
    %s286 = sphi 0, %s286
    %s288 = sphi 0, %s286
    %s289 = sphi 0, %s288
    %s303 = sphi 0, %s289
    %s307 = sphi 0, %s307
    %s309 = sphi 0, %s307
    %s310 = sphi 0, %s309
    %s324 = sphi 0, %s310
    %s328 = sphi 0, %s328
    %s330 = sphi 0, %s328
    %s331 = sphi 0, %s330
    %s345 = sphi 0, %s331
    %s351 = sphi 0, %s353
    %s354 = sphi 0, %s351
    %s355 = sphi 0, %s354
    %s371 = sphi 0, %s355
  $region4: #{tpu_custom_call.1} parent=0 // loop_header_branch
    %24 = sbr.rel (%p22) target = $region8
  $region5: #{tpu_custom_call.1} parent=0 // loop_body
    %s26 = ssub.s32 %s21, 1
    %s27 = ssub.s32 %s21, 2
    %s28 = sadd.s32 %s21, 1
    %s29 = ssub.s32 %s21, %s28
    %p30 = scmp.eq.s32.totalorder %s29, 0
    %s32 = sadd.s32 %s31, 1
    %s33 = scalar_select %p30, %s31, %s32
    %p36 = pneg %p30
    %p37 = scmp.eq.s32.totalorder %s21, 1
    %p38 = por %p36, %p37
    %p39 = scmp.ne.s32.totalorder %s31, %s34
    %p40 = scmp.eq.s32.totalorder %s21, 0
    %p41 = por %p39, %p40
    %p42 = scmp.ne.s32.totalorder %s31, %s34
    %p43 = scmp.eq.s32.totalorder %s26, 1
    %p44 = por %p42, %p43
    %p45 = scmp.ne.s32.totalorder %s34, %s35
    %p46 = scmp.eq.s32.totalorder %s26, 0
    %p47 = por %p45, %p46
    %p48 = scmp.ne.s32.totalorder %s34, %s35
    %p49 = scmp.eq.s32.totalorder %s27, 1
    %p50 = por %p48, %p49
    %p52 = scmp.ne.s32.totalorder %s35, %s51
    %p53 = scmp.eq.s32.totalorder %s27, 0
    %p54 = por %p52, %p53
    %s56 = sadd.s32 %s55, 1
    %p59 = scmp.eq.s32.totalorder %s21, 1
    %p60 = scmp.ne.s32.totalorder %s55, %s57
    %p61 = scmp.eq.s32.totalorder %s21, 0
    %p62 = por %p60, %p61
    %p63 = scmp.ne.s32.totalorder %s55, %s57
    %p64 = scmp.eq.s32.totalorder %s26, 1
    %p65 = por %p63, %p64
    %p66 = scmp.ne.s32.totalorder %s57, %s58
    %p67 = scmp.eq.s32.totalorder %s26, 0
    %p68 = por %p66, %p67
    %p69 = scmp.ne.s32.totalorder %s57, %s58
    %p70 = scmp.eq.s32.totalorder %s27, 1
    %p71 = por %p69, %p70
    %p73 = scmp.ne.s32.totalorder %s58, %s72
    %p74 = scmp.eq.s32.totalorder %s27, 0
    %p75 = por %p73, %p74
    %s77 = sadd.s32 %s76, 1
    %p80 = scmp.eq.s32.totalorder %s21, 1
    %p81 = scmp.ne.s32.totalorder %s76, %s78
    %p82 = scmp.eq.s32.totalorder %s21, 0
    %p83 = por %p81, %p82
    %p84 = scmp.ne.s32.totalorder %s76, %s78
    %p85 = scmp.eq.s32.totalorder %s26, 1
    %p86 = por %p84, %p85
    %p87 = scmp.ne.s32.totalorder %s78, %s79
    %p88 = scmp.eq.s32.totalorder %s26, 0
    %p89 = por %p87, %p88
    %p90 = scmp.ne.s32.totalorder %s78, %s79
    %p91 = scmp.eq.s32.totalorder %s27, 1
    %p92 = por %p90, %p91
    %p94 = scmp.ne.s32.totalorder %s79, %s93
    %p95 = scmp.eq.s32.totalorder %s27, 0
    %p96 = por %p94, %p95
    %s98 = sadd.s32 %s97, 1
    %p101 = scmp.eq.s32.totalorder %s21, 1
    %p102 = scmp.ne.s32.totalorder %s97, %s99
    %p103 = scmp.eq.s32.totalorder %s21, 0
    %p104 = por %p102, %p103
    %p105 = scmp.ne.s32.totalorder %s97, %s99
    %p106 = scmp.eq.s32.totalorder %s26, 1
    %p107 = por %p105, %p106
    %p108 = scmp.ne.s32.totalorder %s99, %s100
    %p109 = scmp.eq.s32.totalorder %s26, 0
    %p110 = por %p108, %p109
    %p111 = scmp.ne.s32.totalorder %s99, %s100
    %p112 = scmp.eq.s32.totalorder %s27, 1
    %p113 = por %p111, %p112
    %p115 = scmp.ne.s32.totalorder %s100, %s114
    %p116 = scmp.eq.s32.totalorder %s27, 0
    %p117 = por %p115, %p116
    %s119 = sadd.s32 %s118, 1
    %p122 = scmp.eq.s32.totalorder %s21, 1
    %p123 = scmp.ne.s32.totalorder %s118, %s120
    %p124 = scmp.eq.s32.totalorder %s21, 0
    %p125 = por %p123, %p124
    %p126 = scmp.ne.s32.totalorder %s118, %s120
    %p127 = scmp.eq.s32.totalorder %s26, 1
    %p128 = por %p126, %p127
    %p129 = scmp.ne.s32.totalorder %s120, %s121
    %p130 = scmp.eq.s32.totalorder %s26, 0
    %p131 = por %p129, %p130
    %p132 = scmp.ne.s32.totalorder %s120, %s121
    %p133 = scmp.eq.s32.totalorder %s27, 1
    %p134 = por %p132, %p133
    %p136 = scmp.ne.s32.totalorder %s121, %s135
    %p137 = scmp.eq.s32.totalorder %s27, 0
    %p138 = por %p136, %p137
    %s140 = sadd.s32 %s139, 1
    %p143 = scmp.eq.s32.totalorder %s21, 1
    %p144 = scmp.ne.s32.totalorder %s139, %s141
    %p145 = scmp.eq.s32.totalorder %s21, 0
    %p146 = por %p144, %p145
    %p147 = scmp.ne.s32.totalorder %s139, %s141
    %p148 = scmp.eq.s32.totalorder %s26, 1
    %p149 = por %p147, %p148
    %p150 = scmp.ne.s32.totalorder %s141, %s142
    %p151 = scmp.eq.s32.totalorder %s26, 0
    %p152 = por %p150, %p151
    %p153 = scmp.ne.s32.totalorder %s141, %s142
    %p154 = scmp.eq.s32.totalorder %s27, 1
    %p155 = por %p153, %p154
    %p157 = scmp.ne.s32.totalorder %s142, %s156
    %p158 = scmp.eq.s32.totalorder %s27, 0
    %p159 = por %p157, %p158
    %s161 = sadd.s32 %s160, 1
    %p164 = scmp.eq.s32.totalorder %s21, 1
    %p165 = scmp.ne.s32.totalorder %s160, %s162
    %p166 = scmp.eq.s32.totalorder %s21, 0
    %p167 = por %p165, %p166
    %p168 = scmp.ne.s32.totalorder %s160, %s162
    %p169 = scmp.eq.s32.totalorder %s26, 1
    %p170 = por %p168, %p169
    %p171 = scmp.ne.s32.totalorder %s162, %s163
    %p172 = scmp.eq.s32.totalorder %s26, 0
    %p173 = por %p171, %p172
    %p174 = scmp.ne.s32.totalorder %s162, %s163
    %p175 = scmp.eq.s32.totalorder %s27, 1
    %p176 = por %p174, %p175
    %p178 = scmp.ne.s32.totalorder %s163, %s177
    %p179 = scmp.eq.s32.totalorder %s27, 0
    %p180 = por %p178, %p179
    %s182 = sadd.s32 %s181, 1
    %p185 = scmp.eq.s32.totalorder %s21, 1
    %p186 = scmp.ne.s32.totalorder %s181, %s183
    %p187 = scmp.eq.s32.totalorder %s21, 0
    %p188 = por %p186, %p187
    %p189 = scmp.ne.s32.totalorder %s181, %s183
    %p190 = scmp.eq.s32.totalorder %s26, 1
    %p191 = por %p189, %p190
    %p192 = scmp.ne.s32.totalorder %s183, %s184
    %p193 = scmp.eq.s32.totalorder %s26, 0
    %p194 = por %p192, %p193
    %p195 = scmp.ne.s32.totalorder %s183, %s184
    %p196 = scmp.eq.s32.totalorder %s27, 1
    %p197 = por %p195, %p196
    %p199 = scmp.ne.s32.totalorder %s184, %s198
    %p200 = scmp.eq.s32.totalorder %s27, 0
    %p201 = por %p199, %p200
    %s203 = sadd.s32 %s202, 1
    %p206 = scmp.eq.s32.totalorder %s21, 1
    %p207 = scmp.ne.s32.totalorder %s202, %s204
    %p208 = scmp.eq.s32.totalorder %s21, 0
    %p209 = por %p207, %p208
    %p210 = scmp.ne.s32.totalorder %s202, %s204
    %p211 = scmp.eq.s32.totalorder %s26, 1
    %p212 = por %p210, %p211
    %p213 = scmp.ne.s32.totalorder %s204, %s205
    %p214 = scmp.eq.s32.totalorder %s26, 0
    %p215 = por %p213, %p214
    %p216 = scmp.ne.s32.totalorder %s204, %s205
    %p217 = scmp.eq.s32.totalorder %s27, 1
    %p218 = por %p216, %p217
    %p220 = scmp.ne.s32.totalorder %s205, %s219
    %p221 = scmp.eq.s32.totalorder %s27, 0
    %p222 = por %p220, %p221
    %s224 = sadd.s32 %s223, 1
    %p227 = scmp.eq.s32.totalorder %s21, 1
    %p228 = scmp.ne.s32.totalorder %s223, %s225
    %p229 = scmp.eq.s32.totalorder %s21, 0
    %p230 = por %p228, %p229
    %p231 = scmp.ne.s32.totalorder %s223, %s225
    %p232 = scmp.eq.s32.totalorder %s26, 1
    %p233 = por %p231, %p232
    %p234 = scmp.ne.s32.totalorder %s225, %s226
    %p235 = scmp.eq.s32.totalorder %s26, 0
    %p236 = por %p234, %p235
    %p237 = scmp.ne.s32.totalorder %s225, %s226
    %p238 = scmp.eq.s32.totalorder %s27, 1
    %p239 = por %p237, %p238
    %p241 = scmp.ne.s32.totalorder %s226, %s240
    %p242 = scmp.eq.s32.totalorder %s27, 0
    %p243 = por %p241, %p242
    %s245 = sadd.s32 %s244, 1
    %p248 = scmp.eq.s32.totalorder %s21, 1
    %p249 = scmp.ne.s32.totalorder %s244, %s246
    %p250 = scmp.eq.s32.totalorder %s21, 0
    %p251 = por %p249, %p250
    %p252 = scmp.ne.s32.totalorder %s244, %s246
    %p253 = scmp.eq.s32.totalorder %s26, 1
    %p254 = por %p252, %p253
    %p255 = scmp.ne.s32.totalorder %s246, %s247
    %p256 = scmp.eq.s32.totalorder %s26, 0
    %p257 = por %p255, %p256
    %p258 = scmp.ne.s32.totalorder %s246, %s247
    %p259 = scmp.eq.s32.totalorder %s27, 1
    %p260 = por %p258, %p259
    %p262 = scmp.ne.s32.totalorder %s247, %s261
    %p263 = scmp.eq.s32.totalorder %s27, 0
    %p264 = por %p262, %p263
    %s266 = sadd.s32 %s265, 1
    %p269 = scmp.eq.s32.totalorder %s21, 1
    %p270 = scmp.ne.s32.totalorder %s265, %s267
    %p271 = scmp.eq.s32.totalorder %s21, 0
    %p272 = por %p270, %p271
    %p273 = scmp.ne.s32.totalorder %s265, %s267
    %p274 = scmp.eq.s32.totalorder %s26, 1
    %p275 = por %p273, %p274
    %p276 = scmp.ne.s32.totalorder %s267, %s268
    %p277 = scmp.eq.s32.totalorder %s26, 0
    %p278 = por %p276, %p277
    %p279 = scmp.ne.s32.totalorder %s267, %s268
    %p280 = scmp.eq.s32.totalorder %s27, 1
    %p281 = por %p279, %p280
    %p283 = scmp.ne.s32.totalorder %s268, %s282
    %p284 = scmp.eq.s32.totalorder %s27, 0
    %p285 = por %p283, %p284
    %s287 = sadd.s32 %s286, 1
    %p290 = scmp.eq.s32.totalorder %s21, 1
    %p291 = scmp.ne.s32.totalorder %s286, %s288
    %p292 = scmp.eq.s32.totalorder %s21, 0
    %p293 = por %p291, %p292
    %p294 = scmp.ne.s32.totalorder %s286, %s288
    %p295 = scmp.eq.s32.totalorder %s26, 1
    %p296 = por %p294, %p295
    %p297 = scmp.ne.s32.totalorder %s288, %s289
    %p298 = scmp.eq.s32.totalorder %s26, 0
    %p299 = por %p297, %p298
    %p300 = scmp.ne.s32.totalorder %s288, %s289
    %p301 = scmp.eq.s32.totalorder %s27, 1
    %p302 = por %p300, %p301
    %p304 = scmp.ne.s32.totalorder %s289, %s303
    %p305 = scmp.eq.s32.totalorder %s27, 0
    %p306 = por %p304, %p305
    %s308 = sadd.s32 %s307, 1
    %p311 = scmp.eq.s32.totalorder %s21, 1
    %p312 = scmp.ne.s32.totalorder %s307, %s309
    %p313 = scmp.eq.s32.totalorder %s21, 0
    %p314 = por %p312, %p313
    %p315 = scmp.ne.s32.totalorder %s307, %s309
    %p316 = scmp.eq.s32.totalorder %s26, 1
    %p317 = por %p315, %p316
    %p318 = scmp.ne.s32.totalorder %s309, %s310
    %p319 = scmp.eq.s32.totalorder %s26, 0
    %p320 = por %p318, %p319
    %p321 = scmp.ne.s32.totalorder %s309, %s310
    %p322 = scmp.eq.s32.totalorder %s27, 1
    %p323 = por %p321, %p322
    %p325 = scmp.ne.s32.totalorder %s310, %s324
    %p326 = scmp.eq.s32.totalorder %s27, 0
    %p327 = por %p325, %p326
    %s329 = sadd.s32 %s328, 1
    %p332 = scmp.eq.s32.totalorder %s21, 1
    %p333 = scmp.ne.s32.totalorder %s328, %s330
    %p334 = scmp.eq.s32.totalorder %s21, 0
    %p335 = por %p333, %p334
    %p336 = scmp.ne.s32.totalorder %s328, %s330
    %p337 = scmp.eq.s32.totalorder %s26, 1
    %p338 = por %p336, %p337
    %p339 = scmp.ne.s32.totalorder %s330, %s331
    %p340 = scmp.eq.s32.totalorder %s26, 0
    %p341 = por %p339, %p340
    %p342 = scmp.ne.s32.totalorder %s330, %s331
    %p343 = scmp.eq.s32.totalorder %s27, 1
    %p344 = por %p342, %p343
    %p346 = scmp.ne.s32.totalorder %s331, %s345
    %p347 = scmp.eq.s32.totalorder %s27, 0
    %p348 = por %p346, %p347
    %s349 = ssub.s32 %s21, %s28
    %p350 = scmp.eq.s32.totalorder %s349, 0
    %s352 = sadd.s32 %s351, 1
    %s353 = scalar_select %p350, %s351, %s352
    %p356 = pneg %p350
    %p357 = scmp.eq.s32.totalorder %s21, 1
    %p358 = por %p356, %p357
    %p359 = scmp.ne.s32.totalorder %s351, %s354
    %p360 = scmp.eq.s32.totalorder %s21, 0
    %p361 = por %p359, %p360
    %p362 = scmp.ne.s32.totalorder %s351, %s354
    %p363 = scmp.eq.s32.totalorder %s26, 1
    %p364 = por %p362, %p363
    %p365 = scmp.ne.s32.totalorder %s354, %s355
    %p366 = scmp.eq.s32.totalorder %s26, 0
    %p367 = por %p365, %p366
    %p368 = scmp.ne.s32.totalorder %s354, %s355
    %p369 = scmp.eq.s32.totalorder %s27, 1
    %p370 = por %p368, %p369
    %p372 = scmp.ne.s32.totalorder %s355, %s371
    %p373 = scmp.eq.s32.totalorder %s27, 0
    %p374 = por %p372, %p373
    %p375 = scmp.le.s32.totalorder 1, %s21
    %p376 = scmp.lt.s32.totalorder %s21, 3
    %p377 = pnand %p375, %p376
    %p378 = pneg %p377
    // Predicated region
    $region9: #{tpu_custom_call.1} parent=5 // pred_check
      _
    $region10: #{tpu_custom_call.1} parent=5 // pred_check_branch
      %380 = sbr.rel (%p377) target = $region12
    $region11: #{tpu_custom_call.1} parent=5 // pred_region
      %s381 = ssub.s32 %s21, 1
      // Predicated region
      $region13: #{tpu_custom_call.1} parent=11 // pred_check
        %p382 = pneg %p68
      $region14: #{tpu_custom_call.1} parent=11 // pred_check_branch
        %384 = sbr.rel (%p382) target = $region16
      $region15: #{tpu_custom_call.1} parent=11 // pred_region
        _
      $region16: #{tpu_custom_call.1} parent=11 // pred_fallthru
        _
      // Predicated region
      $region17: #{tpu_custom_call.1} parent=11 // pred_check
        %p385 = pneg %p89
      $region18: #{tpu_custom_call.1} parent=11 // pred_check_branch
        %387 = sbr.rel (%p385) target = $region20
      $region19: #{tpu_custom_call.1} parent=11 // pred_region
        _
      $region20: #{tpu_custom_call.1} parent=11 // pred_fallthru
        _
      // Predicated region
      $region21: #{tpu_custom_call.1} parent=11 // pred_check
        %p388 = pneg %p110
      $region22: #{tpu_custom_call.1} parent=11 // pred_check_branch
        %390 = sbr.rel (%p388) target = $region24
      $region23: #{tpu_custom_call.1} parent=11 // pred_region
        _
      $region24: #{tpu_custom_call.1} parent=11 // pred_fallthru
        _
      // Predicated region
      $region25: #{tpu_custom_call.1} parent=11 // pred_check
        %p391 = pneg %p131
      $region26: #{tpu_custom_call.1} parent=11 // pred_check_branch
        %393 = sbr.rel (%p391) target = $region28
      $region27: #{tpu_custom_call.1} parent=11 // pred_region
        _
      $region28: #{tpu_custom_call.1} parent=11 // pred_fallthru
        _
      // Predicated region
      $region29: #{tpu_custom_call.1} parent=11 // pred_check
        %p394 = pneg %p152
      $region30: #{tpu_custom_call.1} parent=11 // pred_check_branch
        %396 = sbr.rel (%p394) target = $region32
      $region31: #{tpu_custom_call.1} parent=11 // pred_region
        _
      $region32: #{tpu_custom_call.1} parent=11 // pred_fallthru
        _
      // Predicated region
      $region33: #{tpu_custom_call.1} parent=11 // pred_check
        %p397 = pneg %p173
      $region34: #{tpu_custom_call.1} parent=11 // pred_check_branch
        %399 = sbr.rel (%p397) target = $region36
      $region35: #{tpu_custom_call.1} parent=11 // pred_region
        _
      $region36: #{tpu_custom_call.1} parent=11 // pred_fallthru
        _
      // Predicated region
      $region37: #{tpu_custom_call.1} parent=11 // pred_check
        %p400 = pneg %p194
      $region38: #{tpu_custom_call.1} parent=11 // pred_check_branch
        %402 = sbr.rel (%p400) target = $region40
      $region39: #{tpu_custom_call.1} parent=11 // pred_region
        _
      $region40: #{tpu_custom_call.1} parent=11 // pred_fallthru
        _
      // Predicated region
      $region41: #{tpu_custom_call.1} parent=11 // pred_check
        %p403 = pneg %p215
      $region42: #{tpu_custom_call.1} parent=11 // pred_check_branch
        %405 = sbr.rel (%p403) target = $region44
      $region43: #{tpu_custom_call.1} parent=11 // pred_region
        _
      $region44: #{tpu_custom_call.1} parent=11 // pred_fallthru
        _
      // Predicated region
      $region45: #{tpu_custom_call.1} parent=11 // pred_check
        %p406 = pneg %p236
      $region46: #{tpu_custom_call.1} parent=11 // pred_check_branch
        %408 = sbr.rel (%p406) target = $region48
      $region47: #{tpu_custom_call.1} parent=11 // pred_region
        _
      $region48: #{tpu_custom_call.1} parent=11 // pred_fallthru
        _
      // Predicated region
      $region49: #{tpu_custom_call.1} parent=11 // pred_check
        %p409 = pneg %p257
      $region50: #{tpu_custom_call.1} parent=11 // pred_check_branch
        %411 = sbr.rel (%p409) target = $region52
      $region51: #{tpu_custom_call.1} parent=11 // pred_region
        _
      $region52: #{tpu_custom_call.1} parent=11 // pred_fallthru
        _
      // Predicated region
      $region53: #{tpu_custom_call.1} parent=11 // pred_check
        %p412 = pneg %p278
      $region54: #{tpu_custom_call.1} parent=11 // pred_check_branch
        %414 = sbr.rel (%p412) target = $region56
      $region55: #{tpu_custom_call.1} parent=11 // pred_region
        _
      $region56: #{tpu_custom_call.1} parent=11 // pred_fallthru
        _
      // Predicated region
      $region57: #{tpu_custom_call.1} parent=11 // pred_check
        %p415 = pneg %p299
      $region58: #{tpu_custom_call.1} parent=11 // pred_check_branch
        %417 = sbr.rel (%p415) target = $region60
      $region59: #{tpu_custom_call.1} parent=11 // pred_region
        _
      $region60: #{tpu_custom_call.1} parent=11 // pred_fallthru
        _
      // Predicated region
      $region61: #{tpu_custom_call.1} parent=11 // pred_check
        %p418 = pneg %p320
      $region62: #{tpu_custom_call.1} parent=11 // pred_check_branch
        %420 = sbr.rel (%p418) target = $region64
      $region63: #{tpu_custom_call.1} parent=11 // pred_region
        _
      $region64: #{tpu_custom_call.1} parent=11 // pred_fallthru
        _
      // Predicated region
      $region65: #{tpu_custom_call.1} parent=11 // pred_check
        %p421 = pneg %p341
      $region66: #{tpu_custom_call.1} parent=11 // pred_check_branch
        %423 = sbr.rel (%p421) target = $region68
      $region67: #{tpu_custom_call.1} parent=11 // pred_region
        _
      $region68: #{tpu_custom_call.1} parent=11 // pred_fallthru
        _
    $region12: #{tpu_custom_call.1} parent=5 // pred_fallthru
      _
    %p424 = scmp.lt.s32.totalorder %s21, 2
    // Predicated region
    $region69: #{tpu_custom_call.1} parent=5 // pred_check
      %p425 = pneg %p424
    $region70: #{tpu_custom_call.1} parent=5 // pred_check_branch
      %427 = sbr.rel (%p425) target = $region72
    $region71: #{tpu_custom_call.1} parent=5 // pred_region
      // Predicated region
      $region73: #{tpu_custom_call.1} parent=71 // pred_check
        %p428 = pneg %p41
      $region74: #{tpu_custom_call.1} parent=71 // pred_check_branch
        %430 = sbr.rel (%p428) target = $region76
      $region75: #{tpu_custom_call.1} parent=71 // pred_region
        %p431 = scmp.lt.s32.totalorder %s21, 1
        %s432 = scalar_select %p431, %s21, 1
        %s433 = smul.addr %s432, 32
        %s434 = smul.addr %s433, 8
        %s435 = scalar_lea.vmem %s0, %s434
      $region76: #{tpu_custom_call.1} parent=71 // pred_fallthru
        _
    $region72: #{tpu_custom_call.1} parent=5 // pred_fallthru
      _
    %p436 = scmp.le.s32.totalorder 1, %s21
    %p437 = scmp.lt.s32.totalorder %s21, 3
    %p438 = pnand %p436, %p437
    %p439 = pneg %p438
    // Predicated region
    $region77: #{tpu_custom_call.1} parent=5 // pred_check
      _
    $region78: #{tpu_custom_call.1} parent=5 // pred_check_branch
      %441 = sbr.rel (%p438) target = $region80
    $region79: #{tpu_custom_call.1} parent=5 // pred_region
      %s442 = ssub.s32 %s21, 1
      %p443 = scmp.lt.s32.totalorder %s26, 1
      %s444 = scalar_select %p443, %s26, 1
      %s445 = smul.addr %s444, 32
      %s446 = smul.addr %s445, 8
      %s447 = scalar_lea.vmem %s0, %s446
      %p448 = pneg %p47
      %p449 = pneg %p44
      %p450 = pneg %p68
      %p451 = pneg %p65
      %p452 = pneg %p89
      %p453 = pneg %p86
      %p454 = pneg %p110
      %p455 = pneg %p107
      %p456 = pneg %p131
      %p457 = pneg %p128
      %p458 = pneg %p152
      %p459 = pneg %p149
      %p460 = pneg %p173
      %p461 = pneg %p170
      %p462 = pneg %p194
      %p463 = pneg %p191
      %p464 = pneg %p215
      %p465 = pneg %p212
      %p466 = pneg %p236
      %p467 = pneg %p233
      %p468 = pneg %p257
      %p469 = pneg %p254
      %p470 = pneg %p278
      %p471 = pneg %p275
      %p472 = pneg %p299
      %p473 = pneg %p296
      %p474 = pneg %p320
      %p475 = pneg %p317
      %p476 = pneg %p341
      %p477 = pneg %p338
      %p478 = pneg %p367
      %p479 = pneg %p364
      %p480 = scmp.lt.s32.totalorder %s26, 1
      %s481 = scalar_select %p480, %s26, 1
      %s482 = smul.addr %s481, 32
      %s483 = smul.addr %s482, 8
      %s484 = scalar_lea.vmem %s15, %s483
      %p485 = scmp.lt.s32.totalorder %s26, 1
      %s486 = scalar_select %p485, %s26, 1
      %s487 = smul.addr %s486, 32
      %s488 = smul.addr %s487, 8
      %s489 = scalar_lea.vmem %s0, %s488
      %p490 = scmp.lt.s32.totalorder %s26, 1
      %s491 = scalar_select %p490, %s26, 1
      %s492 = smul.addr %s491, 32
      %s493 = smul.addr %s492, 8
      %s494 = scalar_lea.vmem %s15, %s493
      %v495 = vld [vmem:[%s489] sm:$0xff]
      %v496 = vld [vmem:[%s489 + $0x8] sm:$0xff]
      %v497 = vld [vmem:[%s489 + $0x10] sm:$0xff]
      %v498 = vld [vmem:[%s489 + $0x18] sm:$0xff]
      %v499 = vld [vmem:[%s489 + $0x20] sm:$0xff]
      %v500 = vld [vmem:[%s489 + $0x28] sm:$0xff]
      %v501 = vld [vmem:[%s489 + $0x30] sm:$0xff]
      %v502 = vld [vmem:[%s489 + $0x38] sm:$0xff]
      %v503 = vld [vmem:[%s489 + $0x40] sm:$0xff]
      %v504 = vld [vmem:[%s489 + $0x48] sm:$0xff]
      %v505 = vld [vmem:[%s489 + $0x50] sm:$0xff]
      %v506 = vld [vmem:[%s489 + $0x58] sm:$0xff]
      %v507 = vld [vmem:[%s489 + $0x60] sm:$0xff]
      %v508 = vld [vmem:[%s489 + $0x68] sm:$0xff]
      %v509 = vld [vmem:[%s489 + $0x70] sm:$0xff]
      %v510 = vld [vmem:[%s489 + $0x78] sm:$0xff]
      %v511 = vld [vmem:[%s489 + $0x80] sm:$0xff]
      %v512 = vld [vmem:[%s489 + $0x88] sm:$0xff]
      %v513 = vld [vmem:[%s489 + $0x90] sm:$0xff]
      %v514 = vld [vmem:[%s489 + $0x98] sm:$0xff]
      %v515 = vld [vmem:[%s489 + $0xa0] sm:$0xff]
      %v516 = vld [vmem:[%s489 + $0xa8] sm:$0xff]
      %v517 = vld [vmem:[%s489 + $0xb0] sm:$0xff]
      %v518 = vld [vmem:[%s489 + $0xb8] sm:$0xff]
      %v519 = vld [vmem:[%s489 + $0xc0] sm:$0xff]
      %v520 = vld [vmem:[%s489 + $0xc8] sm:$0xff]
      %v521 = vld [vmem:[%s489 + $0xd0] sm:$0xff]
      %v522 = vld [vmem:[%s489 + $0xd8] sm:$0xff]
      %v523 = vld [vmem:[%s489 + $0xe0] sm:$0xff]
      %v524 = vld [vmem:[%s489 + $0xe8] sm:$0xff]
      %v525 = vld [vmem:[%s489 + $0xf0] sm:$0xff]
      %v526 = vld [vmem:[%s489 + $0xf8] sm:$0xff]
      %vm527 = vcmask 31744
      %v528 = vsel %vm527, %v495, 0.0
      %529 = vadd.xlane.f32.xlu0 %v528
      %v530 = vpop.xlane.xlu0 %529
      %v531 = vsel %vm527, %v496, 0.0
      %532 = vadd.xlane.f32.xlu0 %v531
      %v533 = vpop.xlane.xlu0 %532
      %v534 = vsel %vm527, %v497, 0.0
      %535 = vadd.xlane.f32.xlu0 %v534
      %v536 = vpop.xlane.xlu0 %535
      %v537 = vsel %vm527, %v498, 0.0
      %538 = vadd.xlane.f32.xlu0 %v537
      %v539 = vpop.xlane.xlu0 %538
      %v540 = vsel %vm527, %v499, 0.0
      %541 = vadd.xlane.f32.xlu0 %v540
      %v542 = vpop.xlane.xlu0 %541
      %v543 = vsel %vm527, %v500, 0.0
      %544 = vadd.xlane.f32.xlu0 %v543
      %v545 = vpop.xlane.xlu0 %544
      %v546 = vsel %vm527, %v501, 0.0
      %547 = vadd.xlane.f32.xlu0 %v546
      %v548 = vpop.xlane.xlu0 %547
      %v549 = vsel %vm527, %v502, 0.0
      %550 = vadd.xlane.f32.xlu0 %v549
      %v551 = vpop.xlane.xlu0 %550
      %v552 = vsel %vm527, %v503, 0.0
      %553 = vadd.xlane.f32.xlu0 %v552
      %v554 = vpop.xlane.xlu0 %553
      %v555 = vsel %vm527, %v504, 0.0
      %556 = vadd.xlane.f32.xlu0 %v555
      %v557 = vpop.xlane.xlu0 %556
      %v558 = vsel %vm527, %v505, 0.0
      %559 = vadd.xlane.f32.xlu0 %v558
      %v560 = vpop.xlane.xlu0 %559
      %v561 = vsel %vm527, %v506, 0.0
      %562 = vadd.xlane.f32.xlu0 %v561
      %v563 = vpop.xlane.xlu0 %562
      %v564 = vsel %vm527, %v507, 0.0
      %565 = vadd.xlane.f32.xlu0 %v564
      %v566 = vpop.xlane.xlu0 %565
      %v567 = vsel %vm527, %v508, 0.0
      %568 = vadd.xlane.f32.xlu0 %v567
      %v569 = vpop.xlane.xlu0 %568
      %v570 = vsel %vm527, %v509, 0.0
      %571 = vadd.xlane.f32.xlu0 %v570
      %v572 = vpop.xlane.xlu0 %571
      %v573 = vsel %vm527, %v510, 0.0
      %574 = vadd.xlane.f32.xlu0 %v573
      %v575 = vpop.xlane.xlu0 %574
      %v576 = vsel %vm527, %v511, 0.0
      %577 = vadd.xlane.f32.xlu0 %v576
      %v578 = vpop.xlane.xlu0 %577
      %v579 = vsel %vm527, %v512, 0.0
      %580 = vadd.xlane.f32.xlu0 %v579
      %v581 = vpop.xlane.xlu0 %580
      %v582 = vsel %vm527, %v513, 0.0
      %583 = vadd.xlane.f32.xlu0 %v582
      %v584 = vpop.xlane.xlu0 %583
      %v585 = vsel %vm527, %v514, 0.0
      %586 = vadd.xlane.f32.xlu0 %v585
      %v587 = vpop.xlane.xlu0 %586
      %v588 = vsel %vm527, %v515, 0.0
      %589 = vadd.xlane.f32.xlu0 %v588
      %v590 = vpop.xlane.xlu0 %589
      %v591 = vsel %vm527, %v516, 0.0
      %592 = vadd.xlane.f32.xlu0 %v591
      %v593 = vpop.xlane.xlu0 %592
      %v594 = vsel %vm527, %v517, 0.0
      %595 = vadd.xlane.f32.xlu0 %v594
      %v596 = vpop.xlane.xlu0 %595
      %v597 = vsel %vm527, %v518, 0.0
      %598 = vadd.xlane.f32.xlu0 %v597
      %v599 = vpop.xlane.xlu0 %598
      %v600 = vsel %vm527, %v519, 0.0
      %601 = vadd.xlane.f32.xlu0 %v600
      %v602 = vpop.xlane.xlu0 %601
      %v603 = vsel %vm527, %v520, 0.0
      %604 = vadd.xlane.f32.xlu0 %v603
      %v605 = vpop.xlane.xlu0 %604
      %v606 = vsel %vm527, %v521, 0.0
      %607 = vadd.xlane.f32.xlu0 %v606
      %v608 = vpop.xlane.xlu0 %607
      %v609 = vsel %vm527, %v522, 0.0
      %610 = vadd.xlane.f32.xlu0 %v609
      %v611 = vpop.xlane.xlu0 %610
      %v612 = vsel %vm527, %v523, 0.0
      %613 = vadd.xlane.f32.xlu0 %v612
      %v614 = vpop.xlane.xlu0 %613
      %v615 = vsel %vm527, %v524, 0.0
      %616 = vadd.xlane.f32.xlu0 %v615
      %v617 = vpop.xlane.xlu0 %616
      %v618 = vsel %vm527, %v525, 0.0
      %619 = vadd.xlane.f32.xlu0 %v618
      %v620 = vpop.xlane.xlu0 %619
      %v621 = vsel %vm527, %v526, 0.0
      %622 = vadd.xlane.f32.xlu0 %v621
      %v623 = vpop.xlane.xlu0 %622
      %v624 = vrcp.pop 4.0
      %v625 = vmul.f32 %v530, %v624
      %v626 = vmul.f32 %v533, %v624
      %v627 = vmul.f32 %v536, %v624
      %v628 = vmul.f32 %v539, %v624
      %v629 = vmul.f32 %v542, %v624
      %v630 = vmul.f32 %v545, %v624
      %v631 = vmul.f32 %v548, %v624
      %v632 = vmul.f32 %v551, %v624
      %v633 = vmul.f32 %v554, %v624
      %v634 = vmul.f32 %v557, %v624
      %v635 = vmul.f32 %v560, %v624
      %v636 = vmul.f32 %v563, %v624
      %v637 = vmul.f32 %v566, %v624
      %v638 = vmul.f32 %v569, %v624
      %v639 = vmul.f32 %v572, %v624
      %v640 = vmul.f32 %v575, %v624
      %v641 = vmul.f32 %v578, %v624
      %v642 = vmul.f32 %v581, %v624
      %v643 = vmul.f32 %v584, %v624
      %v644 = vmul.f32 %v587, %v624
      %v645 = vmul.f32 %v590, %v624
      %v646 = vmul.f32 %v593, %v624
      %v647 = vmul.f32 %v596, %v624
      %v648 = vmul.f32 %v599, %v624
      %v649 = vmul.f32 %v602, %v624
      %v650 = vmul.f32 %v605, %v624
      %v651 = vmul.f32 %v608, %v624
      %v652 = vmul.f32 %v611, %v624
      %v653 = vmul.f32 %v614, %v624
      %v654 = vmul.f32 %v617, %v624
      %v655 = vmul.f32 %v620, %v624
      %v656 = vmul.f32 %v623, %v624
      %v657 = vsub.f32 %v495, %v625
      %v658 = vsub.f32 %v496, %v626
      %v659 = vsub.f32 %v497, %v627
      %v660 = vsub.f32 %v498, %v628
      %v661 = vsub.f32 %v499, %v629
      %v662 = vsub.f32 %v500, %v630
      %v663 = vsub.f32 %v501, %v631
      %v664 = vsub.f32 %v502, %v632
      %v665 = vsub.f32 %v503, %v633
      %v666 = vsub.f32 %v504, %v634
      %v667 = vsub.f32 %v505, %v635
      %v668 = vsub.f32 %v506, %v636
      %v669 = vsub.f32 %v507, %v637
      %v670 = vsub.f32 %v508, %v638
      %v671 = vsub.f32 %v509, %v639
      %v672 = vsub.f32 %v510, %v640
      %v673 = vsub.f32 %v511, %v641
      %v674 = vsub.f32 %v512, %v642
      %v675 = vsub.f32 %v513, %v643
      %v676 = vsub.f32 %v514, %v644
      %v677 = vsub.f32 %v515, %v645
      %v678 = vsub.f32 %v516, %v646
      %v679 = vsub.f32 %v517, %v647
      %v680 = vsub.f32 %v518, %v648
      %v681 = vsub.f32 %v519, %v649
      %v682 = vsub.f32 %v520, %v650
      %v683 = vsub.f32 %v521, %v651
      %v684 = vsub.f32 %v522, %v652
      %v685 = vsub.f32 %v523, %v653
      %v686 = vsub.f32 %v524, %v654
      %v687 = vsub.f32 %v525, %v655
      %v688 = vsub.f32 %v526, %v656
      %v689 = vmul.f32 %v657, %v657
      %v690 = vmul.f32 %v658, %v658
      %v691 = vmul.f32 %v659, %v659
      %v692 = vmul.f32 %v660, %v660
      %v693 = vmul.f32 %v661, %v661
      %v694 = vmul.f32 %v662, %v662
      %v695 = vmul.f32 %v663, %v663
      %v696 = vmul.f32 %v664, %v664
      %v697 = vmul.f32 %v665, %v665
      %v698 = vmul.f32 %v666, %v666
      %v699 = vmul.f32 %v667, %v667
      %v700 = vmul.f32 %v668, %v668
      %v701 = vmul.f32 %v669, %v669
      %v702 = vmul.f32 %v670, %v670
      %v703 = vmul.f32 %v671, %v671
      %v704 = vmul.f32 %v672, %v672
      %v705 = vmul.f32 %v673, %v673
      %v706 = vmul.f32 %v674, %v674
      %v707 = vmul.f32 %v675, %v675
      %v708 = vmul.f32 %v676, %v676
      %v709 = vmul.f32 %v677, %v677
      %v710 = vmul.f32 %v678, %v678
      %v711 = vmul.f32 %v679, %v679
      %v712 = vmul.f32 %v680, %v680
      %v713 = vmul.f32 %v681, %v681
      %v714 = vmul.f32 %v682, %v682
      %v715 = vmul.f32 %v683, %v683
      %v716 = vmul.f32 %v684, %v684
      %v717 = vmul.f32 %v685, %v685
      %v718 = vmul.f32 %v686, %v686
      %v719 = vmul.f32 %v687, %v687
      %v720 = vmul.f32 %v688, %v688
      %v721 = vsel %vm527, %v689, 0.0
      %722 = vadd.xlane.f32.xlu0 %v721
      %v723 = vpop.xlane.xlu0 %722
      %v724 = vsel %vm527, %v690, 0.0
      %725 = vadd.xlane.f32.xlu0 %v724
      %v726 = vpop.xlane.xlu0 %725
      %v727 = vsel %vm527, %v691, 0.0
      %728 = vadd.xlane.f32.xlu0 %v727
      %v729 = vpop.xlane.xlu0 %728
      %v730 = vsel %vm527, %v692, 0.0
      %731 = vadd.xlane.f32.xlu0 %v730
      %v732 = vpop.xlane.xlu0 %731
      %v733 = vsel %vm527, %v693, 0.0
      %734 = vadd.xlane.f32.xlu0 %v733
      %v735 = vpop.xlane.xlu0 %734
      %v736 = vsel %vm527, %v694, 0.0
      %737 = vadd.xlane.f32.xlu0 %v736
      %v738 = vpop.xlane.xlu0 %737
      %v739 = vsel %vm527, %v695, 0.0
      %740 = vadd.xlane.f32.xlu0 %v739
      %v741 = vpop.xlane.xlu0 %740
      %v742 = vsel %vm527, %v696, 0.0
      %743 = vadd.xlane.f32.xlu0 %v742
      %v744 = vpop.xlane.xlu0 %743
      %v745 = vsel %vm527, %v697, 0.0
      %746 = vadd.xlane.f32.xlu0 %v745
      %v747 = vpop.xlane.xlu0 %746
      %v748 = vsel %vm527, %v698, 0.0
      %749 = vadd.xlane.f32.xlu0 %v748
      %v750 = vpop.xlane.xlu0 %749
      %v751 = vsel %vm527, %v699, 0.0
      %752 = vadd.xlane.f32.xlu0 %v751
      %v753 = vpop.xlane.xlu0 %752
      %v754 = vsel %vm527, %v700, 0.0
      %755 = vadd.xlane.f32.xlu0 %v754
      %v756 = vpop.xlane.xlu0 %755
      %v757 = vsel %vm527, %v701, 0.0
      %758 = vadd.xlane.f32.xlu0 %v757
      %v759 = vpop.xlane.xlu0 %758
      %v760 = vsel %vm527, %v702, 0.0
      %761 = vadd.xlane.f32.xlu0 %v760
      %v762 = vpop.xlane.xlu0 %761
      %v763 = vsel %vm527, %v703, 0.0
      %764 = vadd.xlane.f32.xlu0 %v763
      %v765 = vpop.xlane.xlu0 %764
      %v766 = vsel %vm527, %v704, 0.0
      %767 = vadd.xlane.f32.xlu0 %v766
      %v768 = vpop.xlane.xlu0 %767
      %v769 = vsel %vm527, %v705, 0.0
      %770 = vadd.xlane.f32.xlu0 %v769
      %v771 = vpop.xlane.xlu0 %770
      %v772 = vsel %vm527, %v706, 0.0
      %773 = vadd.xlane.f32.xlu0 %v772
      %v774 = vpop.xlane.xlu0 %773
      %v775 = vsel %vm527, %v707, 0.0
      %776 = vadd.xlane.f32.xlu0 %v775
      %v777 = vpop.xlane.xlu0 %776
      %v778 = vsel %vm527, %v708, 0.0
      %779 = vadd.xlane.f32.xlu0 %v778
      %v780 = vpop.xlane.xlu0 %779
      %v781 = vsel %vm527, %v709, 0.0
      %782 = vadd.xlane.f32.xlu0 %v781
      %v783 = vpop.xlane.xlu0 %782
      %v784 = vsel %vm527, %v710, 0.0
      %785 = vadd.xlane.f32.xlu0 %v784
      %v786 = vpop.xlane.xlu0 %785
      %v787 = vsel %vm527, %v711, 0.0
      %788 = vadd.xlane.f32.xlu0 %v787
      %v789 = vpop.xlane.xlu0 %788
      %v790 = vsel %vm527, %v712, 0.0
      %791 = vadd.xlane.f32.xlu0 %v790
      %v792 = vpop.xlane.xlu0 %791
      %v793 = vsel %vm527, %v713, 0.0
      %794 = vadd.xlane.f32.xlu0 %v793
      %v795 = vpop.xlane.xlu0 %794
      %v796 = vsel %vm527, %v714, 0.0
      %797 = vadd.xlane.f32.xlu0 %v796
      %v798 = vpop.xlane.xlu0 %797
      %v799 = vsel %vm527, %v715, 0.0
      %800 = vadd.xlane.f32.xlu0 %v799
      %v801 = vpop.xlane.xlu0 %800
      %v802 = vsel %vm527, %v716, 0.0
      %803 = vadd.xlane.f32.xlu0 %v802
      %v804 = vpop.xlane.xlu0 %803
      %v805 = vsel %vm527, %v717, 0.0
      %806 = vadd.xlane.f32.xlu0 %v805
      %v807 = vpop.xlane.xlu0 %806
      %v808 = vsel %vm527, %v718, 0.0
      %809 = vadd.xlane.f32.xlu0 %v808
      %v810 = vpop.xlane.xlu0 %809
      %v811 = vsel %vm527, %v719, 0.0
      %812 = vadd.xlane.f32.xlu0 %v811
      %v813 = vpop.xlane.xlu0 %812
      %v814 = vsel %vm527, %v720, 0.0
      %815 = vadd.xlane.f32.xlu0 %v814
      %v816 = vpop.xlane.xlu0 %815
      %v817 = vmul.f32 %v723, %v624
      %v818 = vmul.f32 %v726, %v624
      %v819 = vmul.f32 %v729, %v624
      %v820 = vmul.f32 %v732, %v624
      %v821 = vmul.f32 %v735, %v624
      %v822 = vmul.f32 %v738, %v624
      %v823 = vmul.f32 %v741, %v624
      %v824 = vmul.f32 %v744, %v624
      %v825 = vmul.f32 %v747, %v624
      %v826 = vmul.f32 %v750, %v624
      %v827 = vmul.f32 %v753, %v624
      %v828 = vmul.f32 %v756, %v624
      %v829 = vmul.f32 %v759, %v624
      %v830 = vmul.f32 %v762, %v624
      %v831 = vmul.f32 %v765, %v624
      %v832 = vmul.f32 %v768, %v624
      %v833 = vmul.f32 %v771, %v624
      %v834 = vmul.f32 %v774, %v624
      %v835 = vmul.f32 %v777, %v624
      %v836 = vmul.f32 %v780, %v624
      %v837 = vmul.f32 %v783, %v624
      %v838 = vmul.f32 %v786, %v624
      %v839 = vmul.f32 %v789, %v624
      %v840 = vmul.f32 %v792, %v624
      %v841 = vmul.f32 %v795, %v624
      %v842 = vmul.f32 %v798, %v624
      %v843 = vmul.f32 %v801, %v624
      %v844 = vmul.f32 %v804, %v624
      %v845 = vmul.f32 %v807, %v624
      %v846 = vmul.f32 %v810, %v624
      %v847 = vmul.f32 %v813, %v624
      %v848 = vmul.f32 %v816, %v624
      %v849 = vadd.f32 %v817, 1e-06
      %v850 = vadd.f32 %v818, 1e-06
      %v851 = vadd.f32 %v819, 1e-06
      %v852 = vadd.f32 %v820, 1e-06
      %v853 = vadd.f32 %v821, 1e-06
      %v854 = vadd.f32 %v822, 1e-06
      %v855 = vadd.f32 %v823, 1e-06
      %v856 = vadd.f32 %v824, 1e-06
      %v857 = vadd.f32 %v825, 1e-06
      %v858 = vadd.f32 %v826, 1e-06
      %v859 = vadd.f32 %v827, 1e-06
      %v860 = vadd.f32 %v828, 1e-06
      %v861 = vadd.f32 %v829, 1e-06
      %v862 = vadd.f32 %v830, 1e-06
      %v863 = vadd.f32 %v831, 1e-06
      %v864 = vadd.f32 %v832, 1e-06
      %v865 = vadd.f32 %v833, 1e-06
      %v866 = vadd.f32 %v834, 1e-06
      %v867 = vadd.f32 %v835, 1e-06
      %v868 = vadd.f32 %v836, 1e-06
      %v869 = vadd.f32 %v837, 1e-06
      %v870 = vadd.f32 %v838, 1e-06
      %v871 = vadd.f32 %v839, 1e-06
      %v872 = vadd.f32 %v840, 1e-06
      %v873 = vadd.f32 %v841, 1e-06
      %v874 = vadd.f32 %v842, 1e-06
      %v875 = vadd.f32 %v843, 1e-06
      %v876 = vadd.f32 %v844, 1e-06
      %v877 = vadd.f32 %v845, 1e-06
      %v878 = vadd.f32 %v846, 1e-06
      %v879 = vadd.f32 %v847, 1e-06
      %v880 = vadd.f32 %v848, 1e-06
      %v881 = vrsqrt.pop %v849
      %v882 = vrsqrt.pop %v850
      %v883 = vrsqrt.pop %v851
      %v884 = vrsqrt.pop %v852
      %v885 = vrsqrt.pop %v853
      %v886 = vrsqrt.pop %v854
      %v887 = vrsqrt.pop %v855
      %v888 = vrsqrt.pop %v856
      %v889 = vrsqrt.pop %v857
      %v890 = vrsqrt.pop %v858
      %v891 = vrsqrt.pop %v859
      %v892 = vrsqrt.pop %v860
      %v893 = vrsqrt.pop %v861
      %v894 = vrsqrt.pop %v862
      %v895 = vrsqrt.pop %v863
      %v896 = vrsqrt.pop %v864
      %v897 = vrsqrt.pop %v865
      %v898 = vrsqrt.pop %v866
      %v899 = vrsqrt.pop %v867
      %v900 = vrsqrt.pop %v868
      %v901 = vrsqrt.pop %v869
      %v902 = vrsqrt.pop %v870
      %v903 = vrsqrt.pop %v871
      %v904 = vrsqrt.pop %v872
      %v905 = vrsqrt.pop %v873
      %v906 = vrsqrt.pop %v874
      %v907 = vrsqrt.pop %v875
      %v908 = vrsqrt.pop %v876
      %v909 = vrsqrt.pop %v877
      %v910 = vrsqrt.pop %v878
      %v911 = vrsqrt.pop %v879
      %v912 = vrsqrt.pop %v880
      %v913 = vmul.f32 %v657, %v881
      %v914 = vmul.f32 %v658, %v882
      %v915 = vmul.f32 %v659, %v883
      %v916 = vmul.f32 %v660, %v884
      %v917 = vmul.f32 %v661, %v885
      %v918 = vmul.f32 %v662, %v886
      %v919 = vmul.f32 %v663, %v887
      %v920 = vmul.f32 %v664, %v888
      %v921 = vmul.f32 %v665, %v889
      %v922 = vmul.f32 %v666, %v890
      %v923 = vmul.f32 %v667, %v891
      %v924 = vmul.f32 %v668, %v892
      %v925 = vmul.f32 %v669, %v893
      %v926 = vmul.f32 %v670, %v894
      %v927 = vmul.f32 %v671, %v895
      %v928 = vmul.f32 %v672, %v896
      %v929 = vmul.f32 %v673, %v897
      %v930 = vmul.f32 %v674, %v898
      %v931 = vmul.f32 %v675, %v899
      %v932 = vmul.f32 %v676, %v900
      %v933 = vmul.f32 %v677, %v901
      %v934 = vmul.f32 %v678, %v902
      %v935 = vmul.f32 %v679, %v903
      %v936 = vmul.f32 %v680, %v904
      %v937 = vmul.f32 %v681, %v905
      %v938 = vmul.f32 %v682, %v906
      %v939 = vmul.f32 %v683, %v907
      %v940 = vmul.f32 %v684, %v908
      %v941 = vmul.f32 %v685, %v909
      %v942 = vmul.f32 %v686, %v910
      %v943 = vmul.f32 %v687, %v911
      %v944 = vmul.f32 %v688, %v912
      %v945 = vld [vmem:[%s1] sm:$0x1]
      %v947 = vlaneseq
      %v948 = vshrl.u32 %v947, 7
      %v949 = vsub.s32 0, %v948
      %v950 = vrot.slane %v945, %v949
      %v952 = vmul.f32 %v913, %v950
      %v953 = vmul.f32 %v914, %v950
      %v954 = vmul.f32 %v915, %v950
      %v955 = vmul.f32 %v916, %v950
      %v956 = vmul.f32 %v917, %v950
      %v957 = vmul.f32 %v918, %v950
      %v958 = vmul.f32 %v919, %v950
      %v959 = vmul.f32 %v920, %v950
      %v960 = vmul.f32 %v921, %v950
      %v961 = vmul.f32 %v922, %v950
      %v962 = vmul.f32 %v923, %v950
      %v963 = vmul.f32 %v924, %v950
      %v964 = vmul.f32 %v925, %v950
      %v965 = vmul.f32 %v926, %v950
      %v966 = vmul.f32 %v927, %v950
      %v967 = vmul.f32 %v928, %v950
      %v968 = vmul.f32 %v929, %v950
      %v969 = vmul.f32 %v930, %v950
      %v970 = vmul.f32 %v931, %v950
      %v971 = vmul.f32 %v932, %v950
      %v972 = vmul.f32 %v933, %v950
      %v973 = vmul.f32 %v934, %v950
      %v974 = vmul.f32 %v935, %v950
      %v975 = vmul.f32 %v936, %v950
      %v976 = vmul.f32 %v937, %v950
      %v977 = vmul.f32 %v938, %v950
      %v978 = vmul.f32 %v939, %v950
      %v979 = vmul.f32 %v940, %v950
      %v980 = vmul.f32 %v941, %v950
      %v981 = vmul.f32 %v942, %v950
      %v982 = vmul.f32 %v943, %v950
      %v983 = vmul.f32 %v944, %v950
      %v984 = vld [vmem:[%s2] sm:$0x1]
      %v986 = vlaneseq
      %v987 = vshrl.u32 %v986, 7
      %v988 = vsub.s32 0, %v987
      %v989 = vrot.slane %v984, %v988
      %v991 = vadd.f32 %v952, %v989
      %v992 = vadd.f32 %v953, %v989
      %v993 = vadd.f32 %v954, %v989
      %v994 = vadd.f32 %v955, %v989
      %v995 = vadd.f32 %v956, %v989
      %v996 = vadd.f32 %v957, %v989
      %v997 = vadd.f32 %v958, %v989
      %v998 = vadd.f32 %v959, %v989
      %v999 = vadd.f32 %v960, %v989
      %v1000 = vadd.f32 %v961, %v989
      %v1001 = vadd.f32 %v962, %v989
      %v1002 = vadd.f32 %v963, %v989
      %v1003 = vadd.f32 %v964, %v989
      %v1004 = vadd.f32 %v965, %v989
      %v1005 = vadd.f32 %v966, %v989
      %v1006 = vadd.f32 %v967, %v989
      %v1007 = vadd.f32 %v968, %v989
      %v1008 = vadd.f32 %v969, %v989
      %v1009 = vadd.f32 %v970, %v989
      %v1010 = vadd.f32 %v971, %v989
      %v1011 = vadd.f32 %v972, %v989
      %v1012 = vadd.f32 %v973, %v989
      %v1013 = vadd.f32 %v974, %v989
      %v1014 = vadd.f32 %v975, %v989
      %v1015 = vadd.f32 %v976, %v989
      %v1016 = vadd.f32 %v977, %v989
      %v1017 = vadd.f32 %v978, %v989
      %v1018 = vadd.f32 %v979, %v989
      %v1019 = vadd.f32 %v980, %v989
      %v1020 = vadd.f32 %v981, %v989
      %v1021 = vadd.f32 %v982, %v989
      %v1022 = vadd.f32 %v983, %v989
      %v1023 = vld [vmem:[%s3] sm:$0xf]
      %v1024 = vld [vmem:[%s4] sm:$0x1]
      %v1026 = vlaneseq
      %v1027 = vshrl.u32 %v1026, 7
      %v1028 = vsub.s32 0, %v1027
      %v1029 = vrot.slane %v1024, %v1028
      %v1032 = vsel %vm527, %v991, 0
      %v1035 = vsel %vm527, %v992, 0
      %v1038 = vsel %vm527, %v993, 0
      %v1041 = vsel %vm527, %v994, 0
      %v1044 = vsel %vm527, %v995, 0
      %v1047 = vsel %vm527, %v996, 0
      %v1050 = vsel %vm527, %v997, 0
      %v1053 = vsel %vm527, %v998, 0
      %v1056 = vsel %vm527, %v999, 0
      %v1059 = vsel %vm527, %v1000, 0
      %v1062 = vsel %vm527, %v1001, 0
      %v1065 = vsel %vm527, %v1002, 0
      %v1068 = vsel %vm527, %v1003, 0
      %v1071 = vsel %vm527, %v1004, 0
      %v1074 = vsel %vm527, %v1005, 0
      %v1077 = vsel %vm527, %v1006, 0
      %v1080 = vsel %vm527, %v1007, 0
      %v1083 = vsel %vm527, %v1008, 0
      %v1086 = vsel %vm527, %v1009, 0
      %v1089 = vsel %vm527, %v1010, 0
      %v1092 = vsel %vm527, %v1011, 0
      %v1095 = vsel %vm527, %v1012, 0
      %v1098 = vsel %vm527, %v1013, 0
      %v1101 = vsel %vm527, %v1014, 0
      %v1104 = vsel %vm527, %v1015, 0
      %v1107 = vsel %vm527, %v1016, 0
      %v1110 = vsel %vm527, %v1017, 0
      %v1113 = vsel %vm527, %v1018, 0
      %v1116 = vsel %vm527, %v1019, 0
      %v1119 = vsel %vm527, %v1020, 0
      %v1122 = vsel %vm527, %v1021, 0
      %v1125 = vsel %vm527, %v1022, 0
      %vm1127 = vcmask 1043456
      %v1129 = vsel %vm1127, %v1023, 0
      %1131 = vmatprep.subr.mxu0 0.0
      %1132 = vmatpush1.msra.mxu0 %v1129
      %1133 = vmatprep.subr.mxu0 0.0
      %1134 = vmatpush1.msra.mxu0 0.0
      %1135 = vmatprep.subr.mxu0 0.0
      %1136 = vmatpush1.msra.mxu0 0.0
      %1137 = vmatprep.subr.mxu0 0.0
      %1138 = vmatpush1.msra.mxu0 0.0
      %1139 = vmatprep.subr.mxu0 0.0
      %1140 = vmatpush1.msra.mxu0 0.0
      %1141 = vmatprep.subr.mxu0 0.0
      %1142 = vmatpush1.msra.mxu0 0.0
      %1143 = vmatprep.subr.mxu0 0.0
      %1144 = vmatpush1.msra.mxu0 0.0
      %1145 = vmatprep.subr.mxu0 0.0
      %1146 = vmatpush1.msra.mxu0 0.0
      %1147 = vmatprep.subr.mxu0 0.0
      %1148 = vmatpush1.msra.mxu0 0.0
      %1149 = vmatprep.subr.mxu0 0.0
      %1150 = vmatpush1.msra.mxu0 0.0
      %1151 = vmatprep.subr.mxu0 0.0
      %1152 = vmatpush1.msra.mxu0 0.0
      %1153 = vmatprep.subr.mxu0 0.0
      %1154 = vmatpush1.msra.mxu0 0.0
      %1155 = vmatprep.subr.mxu0 0.0
      %1156 = vmatpush1.msra.mxu0 0.0
      %1157 = vmatprep.subr.mxu0 0.0
      %1158 = vmatpush1.msra.mxu0 0.0
      %1159 = vmatprep.subr.mxu0 0.0
      %1160 = vmatpush1.msra.mxu0 0.0
      %1161 = vmatprep.subr.mxu0 0.0
      %1162 = vmatpush1.msra.mxu0 0.0
      %1163 = vmatprep.subr.mxu0 0.0
      %1164 = vmatpush1.msra.mxu0 0.0
      %1165 = vmatprep.subr.mxu0 0.0
      %1166 = vmatpush1.msra.mxu0 0.0
      %1167 = vmatprep.subr.mxu0 0.0
      %1168 = vmatpush1.msra.mxu0 0.0
      %1169 = vmatprep.subr.mxu0 0.0
      %1170 = vmatpush1.msra.mxu0 0.0
      %1171 = vmatprep.subr.mxu0 0.0
      %1172 = vmatpush1.msra.mxu0 0.0
      %1173 = vmatprep.subr.mxu0 0.0
      %1174 = vmatpush1.msra.mxu0 0.0
      %1175 = vmatprep.subr.mxu0 0.0
      %1176 = vmatpush1.msra.mxu0 0.0
      %1177 = vmatprep.subr.mxu0 0.0
      %1178 = vmatpush1.msra.mxu0 0.0
      %1179 = vmatprep.subr.mxu0 0.0
      %1180 = vmatpush1.msra.mxu0 0.0
      %1181 = vmatprep.subr.mxu0 0.0
      %1182 = vmatpush1.msra.mxu0 0.0
      %1183 = vmatprep.subr.mxu0 0.0
      %1184 = vmatpush1.msra.mxu0 0.0
      %1185 = vmatprep.subr.mxu0 0.0
      %1186 = vmatpush1.msra.mxu0 0.0
      %1187 = vmatprep.subr.mxu0 0.0
      %1188 = vmatpush1.msra.mxu0 0.0
      %1189 = vmatprep.subr.mxu0 0.0
      %1190 = vmatpush1.msra.mxu0 0.0
      %1191 = vmatprep.subr.mxu0 0.0
      %1192 = vmatpush1.msra.mxu0 0.0
      %1193 = vmatprep.subr.mxu0 0.0
      %1194 = vmatpush1.msra.mxu0 0.0
      %1195 = vmatprep.mubr.f32.mxu0 0.0
      %1196 = vmatmul.mubr.f32.gmra.mrb[0].mxu0 %v1032
      %v1197 = vpop.f32.mrb[0].mxu0
      %v1198 = vadd.f32 %v1029, %v1197
      %v1199 = vpop.f32.mrb[0].mxu0
      %1200 = vmatprep.mubr.f32.mxu0 0.0
      %1201 = vmatmul.mubr.f32.gmra.mrb[0].mxu0 %v1035
      %v1202 = vpop.f32.mrb[0].mxu0
      %v1203 = vadd.f32 %v1029, %v1202
      %v1204 = vpop.f32.mrb[0].mxu0
      %1205 = vmatprep.mubr.f32.mxu0 0.0
      %1206 = vmatmul.mubr.f32.gmra.mrb[0].mxu0 %v1038
      %v1207 = vpop.f32.mrb[0].mxu0
      %v1208 = vadd.f32 %v1029, %v1207
      %v1209 = vpop.f32.mrb[0].mxu0
      %1210 = vmatprep.mubr.f32.mxu0 0.0
      %1211 = vmatmul.mubr.f32.gmra.mrb[0].mxu0 %v1041
      %v1212 = vpop.f32.mrb[0].mxu0
      %v1213 = vadd.f32 %v1029, %v1212
      %v1214 = vpop.f32.mrb[0].mxu0
      %1215 = vmatprep.mubr.f32.mxu0 0.0
      %1216 = vmatmul.mubr.f32.gmra.mrb[0].mxu0 %v1044
      %v1217 = vpop.f32.mrb[0].mxu0
      %v1218 = vadd.f32 %v1029, %v1217
      %v1219 = vpop.f32.mrb[0].mxu0
      %1220 = vmatprep.mubr.f32.mxu0 0.0
      %1221 = vmatmul.mubr.f32.gmra.mrb[0].mxu0 %v1047
      %v1222 = vpop.f32.mrb[0].mxu0
      %v1223 = vadd.f32 %v1029, %v1222
      %v1224 = vpop.f32.mrb[0].mxu0
      %1225 = vmatprep.mubr.f32.mxu0 0.0
      %1226 = vmatmul.mubr.f32.gmra.mrb[0].mxu0 %v1050
      %v1227 = vpop.f32.mrb[0].mxu0
      %v1228 = vadd.f32 %v1029, %v1227
      %v1229 = vpop.f32.mrb[0].mxu0
      %1230 = vmatprep.mubr.f32.mxu0 0.0
      %1231 = vmatmul.mubr.f32.gmra.mrb[0].mxu0 %v1053
      %v1232 = vpop.f32.mrb[0].mxu0
      %v1233 = vadd.f32 %v1029, %v1232
      %v1234 = vpop.f32.mrb[0].mxu0
      %1235 = vmatprep.mubr.f32.mxu0 0.0
      %1236 = vmatmul.mubr.f32.gmra.mrb[0].mxu0 %v1056
      %v1237 = vpop.f32.mrb[0].mxu0
      %v1238 = vadd.f32 %v1029, %v1237
      %v1239 = vpop.f32.mrb[0].mxu0
      %1240 = vmatprep.mubr.f32.mxu0 0.0
      %1241 = vmatmul.mubr.f32.gmra.mrb[0].mxu0 %v1059
      %v1242 = vpop.f32.mrb[0].mxu0
      %v1243 = vadd.f32 %v1029, %v1242
      %v1244 = vpop.f32.mrb[0].mxu0
      %1245 = vmatprep.mubr.f32.mxu0 0.0
      %1246 = vmatmul.mubr.f32.gmra.mrb[0].mxu0 %v1062
      %v1247 = vpop.f32.mrb[0].mxu0
      %v1248 = vadd.f32 %v1029, %v1247
      %v1249 = vpop.f32.mrb[0].mxu0
      %1250 = vmatprep.mubr.f32.mxu0 0.0
      %1251 = vmatmul.mubr.f32.gmra.mrb[0].mxu0 %v1065
      %v1252 = vpop.f32.mrb[0].mxu0
      %v1253 = vadd.f32 %v1029, %v1252
      %v1254 = vpop.f32.mrb[0].mxu0
      %1255 = vmatprep.mubr.f32.mxu0 0.0
      %1256 = vmatmul.mubr.f32.gmra.mrb[0].mxu0 %v1068
      %v1257 = vpop.f32.mrb[0].mxu0
      %v1258 = vadd.f32 %v1029, %v1257
      %v1259 = vpop.f32.mrb[0].mxu0
      %1260 = vmatprep.mubr.f32.mxu0 0.0
      %1261 = vmatmul.mubr.f32.gmra.mrb[0].mxu0 %v1071
      %v1262 = vpop.f32.mrb[0].mxu0
      %v1263 = vadd.f32 %v1029, %v1262
      %v1264 = vpop.f32.mrb[0].mxu0
      %1265 = vmatprep.mubr.f32.mxu0 0.0
      %1266 = vmatmul.mubr.f32.gmra.mrb[0].mxu0 %v1074
      %v1267 = vpop.f32.mrb[0].mxu0
      %v1268 = vadd.f32 %v1029, %v1267
      %v1269 = vpop.f32.mrb[0].mxu0
      %1270 = vmatprep.mubr.f32.mxu0 0.0
      %1271 = vmatmul.mubr.f32.gmra.mrb[0].mxu0 %v1077
      %v1272 = vpop.f32.mrb[0].mxu0
      %v1273 = vadd.f32 %v1029, %v1272
      %v1274 = vpop.f32.mrb[0].mxu0
      %1275 = vmatprep.mubr.f32.mxu0 0.0
      %1276 = vmatmul.mubr.f32.gmra.mrb[0].mxu0 %v1080
      %v1277 = vpop.f32.mrb[0].mxu0
      %v1278 = vadd.f32 %v1029, %v1277
      %v1279 = vpop.f32.mrb[0].mxu0
      %1280 = vmatprep.mubr.f32.mxu0 0.0
      %1281 = vmatmul.mubr.f32.gmra.mrb[0].mxu0 %v1083
      %v1282 = vpop.f32.mrb[0].mxu0
      %v1283 = vadd.f32 %v1029, %v1282
      %v1284 = vpop.f32.mrb[0].mxu0
      %1285 = vmatprep.mubr.f32.mxu0 0.0
      %1286 = vmatmul.mubr.f32.gmra.mrb[0].mxu0 %v1086
      %v1287 = vpop.f32.mrb[0].mxu0
      %v1288 = vadd.f32 %v1029, %v1287
      %v1289 = vpop.f32.mrb[0].mxu0
      %1290 = vmatprep.mubr.f32.mxu0 0.0
      %1291 = vmatmul.mubr.f32.gmra.mrb[0].mxu0 %v1089
      %v1292 = vpop.f32.mrb[0].mxu0
      %v1293 = vadd.f32 %v1029, %v1292
      %v1294 = vpop.f32.mrb[0].mxu0
      %1295 = vmatprep.mubr.f32.mxu0 0.0
      %1296 = vmatmul.mubr.f32.gmra.mrb[0].mxu0 %v1092
      %v1297 = vpop.f32.mrb[0].mxu0
      %v1298 = vadd.f32 %v1029, %v1297
      %v1299 = vpop.f32.mrb[0].mxu0
      %1300 = vmatprep.mubr.f32.mxu0 0.0
      %1301 = vmatmul.mubr.f32.gmra.mrb[0].mxu0 %v1095
      %v1302 = vpop.f32.mrb[0].mxu0
      %v1303 = vadd.f32 %v1029, %v1302
      %v1304 = vpop.f32.mrb[0].mxu0
      %1305 = vmatprep.mubr.f32.mxu0 0.0
      %1306 = vmatmul.mubr.f32.gmra.mrb[0].mxu0 %v1098
      %v1307 = vpop.f32.mrb[0].mxu0
      %v1308 = vadd.f32 %v1029, %v1307
      %v1309 = vpop.f32.mrb[0].mxu0
      %1310 = vmatprep.mubr.f32.mxu0 0.0
      %1311 = vmatmul.mubr.f32.gmra.mrb[0].mxu0 %v1101
      %v1312 = vpop.f32.mrb[0].mxu0
      %v1313 = vadd.f32 %v1029, %v1312
      %v1314 = vpop.f32.mrb[0].mxu0
      %1315 = vmatprep.mubr.f32.mxu0 0.0
      %1316 = vmatmul.mubr.f32.gmra.mrb[0].mxu0 %v1104
      %v1317 = vpop.f32.mrb[0].mxu0
      %v1318 = vadd.f32 %v1029, %v1317
      %v1319 = vpop.f32.mrb[0].mxu0
      %1320 = vmatprep.mubr.f32.mxu0 0.0
      %1321 = vmatmul.mubr.f32.gmra.mrb[0].mxu0 %v1107
      %v1322 = vpop.f32.mrb[0].mxu0
      %v1323 = vadd.f32 %v1029, %v1322
      %v1324 = vpop.f32.mrb[0].mxu0
      %1325 = vmatprep.mubr.f32.mxu0 0.0
      %1326 = vmatmul.mubr.f32.gmra.mrb[0].mxu0 %v1110
      %v1327 = vpop.f32.mrb[0].mxu0
      %v1328 = vadd.f32 %v1029, %v1327
      %v1329 = vpop.f32.mrb[0].mxu0
      %1330 = vmatprep.mubr.f32.mxu0 0.0
      %1331 = vmatmul.mubr.f32.gmra.mrb[0].mxu0 %v1113
      %v1332 = vpop.f32.mrb[0].mxu0
      %v1333 = vadd.f32 %v1029, %v1332
      %v1334 = vpop.f32.mrb[0].mxu0
      %1335 = vmatprep.mubr.f32.mxu0 0.0
      %1336 = vmatmul.mubr.f32.gmra.mrb[0].mxu0 %v1116
      %v1337 = vpop.f32.mrb[0].mxu0
      %v1338 = vadd.f32 %v1029, %v1337
      %v1339 = vpop.f32.mrb[0].mxu0
      %1340 = vmatprep.mubr.f32.mxu0 0.0
      %1341 = vmatmul.mubr.f32.gmra.mrb[0].mxu0 %v1119
      %v1342 = vpop.f32.mrb[0].mxu0
      %v1343 = vadd.f32 %v1029, %v1342
      %v1344 = vpop.f32.mrb[0].mxu0
      %1345 = vmatprep.mubr.f32.mxu0 0.0
      %1346 = vmatmul.mubr.f32.gmra.mrb[0].mxu0 %v1122
      %v1347 = vpop.f32.mrb[0].mxu0
      %v1348 = vadd.f32 %v1029, %v1347
      %v1349 = vpop.f32.mrb[0].mxu0
      %1350 = vmatprep.mubr.f32.mxu0 0.0
      %1351 = vmatmul.mubr.f32.gmra.mrb[0].mxu0 %v1125
      %v1352 = vpop.f32.mrb[0].mxu0
      %v1353 = vadd.f32 %v1029, %v1352
      %v1354 = vpop.f32.mrb[0].mxu0
      %1355 = vdwg.mxu0
      %vm1356 = vcmask 64512
      %1357 = vst.msk [vmem:[#allocation2] sm:$0xff] %vm1356, 0.0
      %1358 = vst.msk [vmem:[#allocation2 + $0x8] sm:$0xff] %vm1356, 0.0
      %vm1359 = vcmask 57344
      %1360 = vst.msk [vmem:[#allocation2 + $0x10] sm:$0x1] %vm1359, 0.0
      %1361 = vst.msk [vmem:[#allocation2 + $0x111] sm:$0xff] %vm1356, 0.0
      %1362 = vst.msk [vmem:[#allocation2 + $0x119] sm:$0xff] %vm1356, 0.0
      %1363 = vst.msk [vmem:[#allocation2 + $0x121] sm:$0x1] %vm1359, 0.0
      %1364 = vst.msk [vmem:[#allocation2 + $0x11] sm:$0xff] %vm1356, %v1198
      %1365 = vst.msk [vmem:[#allocation2 + $0x19] sm:$0xff] %vm1356, %v1203
      %1366 = vst.msk [vmem:[#allocation2 + $0x21] sm:$0xff] %vm1356, %v1208
      %1367 = vst.msk [vmem:[#allocation2 + $0x29] sm:$0xff] %vm1356, %v1213
      %1368 = vst.msk [vmem:[#allocation2 + $0x31] sm:$0xff] %vm1356, %v1218
      %1369 = vst.msk [vmem:[#allocation2 + $0x39] sm:$0xff] %vm1356, %v1223
      %1370 = vst.msk [vmem:[#allocation2 + $0x41] sm:$0xff] %vm1356, %v1228
      %1371 = vst.msk [vmem:[#allocation2 + $0x49] sm:$0xff] %vm1356, %v1233
      %1372 = vst.msk [vmem:[#allocation2 + $0x51] sm:$0xff] %vm1356, %v1238
      %1373 = vst.msk [vmem:[#allocation2 + $0x59] sm:$0xff] %vm1356, %v1243
      %1374 = vst.msk [vmem:[#allocation2 + $0x61] sm:$0xff] %vm1356, %v1248
      %1375 = vst.msk [vmem:[#allocation2 + $0x69] sm:$0xff] %vm1356, %v1253
      %1376 = vst.msk [vmem:[#allocation2 + $0x71] sm:$0xff] %vm1356, %v1258
      %1377 = vst.msk [vmem:[#allocation2 + $0x79] sm:$0xff] %vm1356, %v1263
      %1378 = vst.msk [vmem:[#allocation2 + $0x81] sm:$0xff] %vm1356, %v1268
      %1379 = vst.msk [vmem:[#allocation2 + $0x89] sm:$0xff] %vm1356, %v1273
      %1380 = vst.msk [vmem:[#allocation2 + $0x91] sm:$0xff] %vm1356, %v1278
      %1381 = vst.msk [vmem:[#allocation2 + $0x99] sm:$0xff] %vm1356, %v1283
      %1382 = vst.msk [vmem:[#allocation2 + $0xa1] sm:$0xff] %vm1356, %v1288
      %1383 = vst.msk [vmem:[#allocation2 + $0xa9] sm:$0xff] %vm1356, %v1293
      %1384 = vst.msk [vmem:[#allocation2 + $0xb1] sm:$0xff] %vm1356, %v1298
      %1385 = vst.msk [vmem:[#allocation2 + $0xb9] sm:$0xff] %vm1356, %v1303
      %1386 = vst.msk [vmem:[#allocation2 + $0xc1] sm:$0xff] %vm1356, %v1308
      %1387 = vst.msk [vmem:[#allocation2 + $0xc9] sm:$0xff] %vm1356, %v1313
      %1388 = vst.msk [vmem:[#allocation2 + $0xd1] sm:$0xff] %vm1356, %v1318
      %1389 = vst.msk [vmem:[#allocation2 + $0xd9] sm:$0xff] %vm1356, %v1323
      %1390 = vst.msk [vmem:[#allocation2 + $0xe1] sm:$0xff] %vm1356, %v1328
      %1391 = vst.msk [vmem:[#allocation2 + $0xe9] sm:$0xff] %vm1356, %v1333
      %1392 = vst.msk [vmem:[#allocation2 + $0xf1] sm:$0xff] %vm1356, %v1338
      %1393 = vst.msk [vmem:[#allocation2 + $0xf9] sm:$0xff] %vm1356, %v1343
      %1394 = vst.msk [vmem:[#allocation2 + $0x101] sm:$0xff] %vm1356, %v1348
      %1395 = vst.msk [vmem:[#allocation2 + $0x109] sm:$0xff] %vm1356, %v1353
      %v1396 = vlaneseq
      %v1397 = vshrl.u32 %v1396, 7
      %v1398 = vadd.s32 %v1397, 8
      %v1399 = vadd.s32 %v1397, 16
      %v1400 = vadd.s32 %v1397, 24
      %v1401 = vadd.s32 %v1397, 32
      %v1402 = vadd.s32 %v1397, 40
      %v1403 = vadd.s32 %v1397, 48
      %v1404 = vadd.s32 %v1397, 56
      %v1405 = vadd.s32 %v1397, 64
      %v1406 = vadd.s32 %v1397, 72
      %v1407 = vadd.s32 %v1397, 80
      %v1408 = vadd.s32 %v1397, 88
      %v1409 = vadd.s32 %v1397, 96
      %v1410 = vadd.s32 %v1397, 104
      %v1411 = vadd.s32 %v1397, 112
      %v1412 = vadd.s32 %v1397, 120
      %v1413 = vadd.s32 %v1397, 128
      %v1414 = vadd.s32 %v1397, 136
      %v1415 = vadd.s32 %v1397, 144
      %v1416 = vadd.s32 %v1397, 152
      %v1417 = vadd.s32 %v1397, 160
      %v1418 = vadd.s32 %v1397, 168
      %v1419 = vadd.s32 %v1397, 176
      %v1420 = vadd.s32 %v1397, 184
      %v1421 = vadd.s32 %v1397, 192
      %v1422 = vadd.s32 %v1397, 200
      %v1423 = vadd.s32 %v1397, 208
      %v1424 = vadd.s32 %v1397, 216
      %v1425 = vadd.s32 %v1397, 224
      %v1426 = vadd.s32 %v1397, 232
      %v1427 = vadd.s32 %v1397, 240
      %v1428 = vadd.s32 %v1397, 248
      %v1429 = vand.u32 %v1397, 15
      %v1430 = vand.u32 %v1398, 15
      %v1431 = vand.u32 %v1399, 15
      %v1432 = vand.u32 %v1400, 15
      %v1433 = vand.u32 %v1401, 15
      %v1434 = vand.u32 %v1402, 15
      %v1435 = vand.u32 %v1403, 15
      %v1436 = vand.u32 %v1404, 15
      %v1437 = vand.u32 %v1405, 15
      %v1438 = vand.u32 %v1406, 15
      %v1439 = vand.u32 %v1407, 15
      %v1440 = vand.u32 %v1408, 15
      %v1441 = vand.u32 %v1409, 15
      %v1442 = vand.u32 %v1410, 15
      %v1443 = vand.u32 %v1411, 15
      %v1444 = vand.u32 %v1412, 15
      %v1445 = vand.u32 %v1413, 15
      %v1446 = vand.u32 %v1414, 15
      %v1447 = vand.u32 %v1415, 15
      %v1448 = vand.u32 %v1416, 15
      %v1449 = vand.u32 %v1417, 15
      %v1450 = vand.u32 %v1418, 15
      %v1451 = vand.u32 %v1419, 15
      %v1452 = vand.u32 %v1420, 15
      %v1453 = vand.u32 %v1421, 15
      %v1454 = vand.u32 %v1422, 15
      %v1455 = vand.u32 %v1423, 15
      %v1456 = vand.u32 %v1424, 15
      %v1457 = vand.u32 %v1425, 15
      %v1458 = vand.u32 %v1426, 15
      %v1459 = vand.u32 %v1427, 15
      %v1460 = vand.u32 %v1428, 15
      %vm1461 = vcmp.ge.s32.totalorder %v1397, 16
      %vm1462 = vcmp.ge.s32.totalorder %v1398, 16
      %vm1463 = vcmp.ge.s32.totalorder %v1399, 16
      %vm1464 = vcmp.ge.s32.totalorder %v1400, 16
      %vm1465 = vcmp.ge.s32.totalorder %v1401, 16
      %vm1466 = vcmp.ge.s32.totalorder %v1402, 16
      %vm1467 = vcmp.ge.s32.totalorder %v1403, 16
      %vm1468 = vcmp.ge.s32.totalorder %v1404, 16
      %vm1469 = vcmp.ge.s32.totalorder %v1405, 16
      %vm1470 = vcmp.ge.s32.totalorder %v1406, 16
      %vm1471 = vcmp.ge.s32.totalorder %v1407, 16
      %vm1472 = vcmp.ge.s32.totalorder %v1408, 16
      %vm1473 = vcmp.ge.s32.totalorder %v1409, 16
      %vm1474 = vcmp.ge.s32.totalorder %v1410, 16
      %vm1475 = vcmp.ge.s32.totalorder %v1411, 16
      %vm1476 = vcmp.ge.s32.totalorder %v1412, 16
      %vm1477 = vcmp.ge.s32.totalorder %v1413, 16
      %vm1478 = vcmp.ge.s32.totalorder %v1414, 16
      %vm1479 = vcmp.ge.s32.totalorder %v1415, 16
      %vm1480 = vcmp.ge.s32.totalorder %v1416, 16
      %vm1481 = vcmp.ge.s32.totalorder %v1417, 16
      %vm1482 = vcmp.ge.s32.totalorder %v1418, 16
      %vm1483 = vcmp.ge.s32.totalorder %v1419, 16
      %vm1484 = vcmp.ge.s32.totalorder %v1420, 16
      %vm1485 = vcmp.ge.s32.totalorder %v1421, 16
      %vm1486 = vcmp.ge.s32.totalorder %v1422, 16
      %vm1487 = vcmp.ge.s32.totalorder %v1423, 16
      %vm1488 = vcmp.ge.s32.totalorder %v1424, 16
      %vm1489 = vcmp.ge.s32.totalorder %v1425, 16
      %vm1490 = vcmp.ge.s32.totalorder %v1426, 16
      %vm1491 = vcmp.ge.s32.totalorder %v1427, 16
      %vm1492 = vcmp.ge.s32.totalorder %v1428, 16
      %v1493 = vsel %vm1461, 1, 0
      %v1494 = vsel %vm1462, 1, 0
      %v1495 = vsel %vm1463, 1, 0
      %v1496 = vsel %vm1464, 1, 0
      %v1497 = vsel %vm1465, 1, 0
      %v1498 = vsel %vm1466, 1, 0
      %v1499 = vsel %vm1467, 1, 0
      %v1500 = vsel %vm1468, 1, 0
      %v1501 = vsel %vm1469, 1, 0
      %v1502 = vsel %vm1470, 1, 0
      %v1503 = vsel %vm1471, 1, 0
      %v1504 = vsel %vm1472, 1, 0
      %v1505 = vsel %vm1473, 1, 0
      %v1506 = vsel %vm1474, 1, 0
      %v1507 = vsel %vm1475, 1, 0
      %v1508 = vsel %vm1476, 1, 0
      %v1509 = vsel %vm1477, 1, 0
      %v1510 = vsel %vm1478, 1, 0
      %v1511 = vsel %vm1479, 1, 0
      %v1512 = vsel %vm1480, 1, 0
      %v1513 = vsel %vm1481, 1, 0
      %v1514 = vsel %vm1482, 1, 0
      %v1515 = vsel %vm1483, 1, 0
      %v1516 = vsel %vm1484, 1, 0
      %v1517 = vsel %vm1485, 1, 0
      %v1518 = vsel %vm1486, 1, 0
      %v1519 = vsel %vm1487, 1, 0
      %v1520 = vsel %vm1488, 1, 0
      %v1521 = vsel %vm1489, 1, 0
      %v1522 = vsel %vm1490, 1, 0
      %v1523 = vsel %vm1491, 1, 0
      %v1524 = vsel %vm1492, 1, 0
      %v1525 = vcvt.s32.f32 %v1493
      %v1526 = vcvt.s32.f32 %v1494
      %v1527 = vcvt.s32.f32 %v1495
      %v1528 = vcvt.s32.f32 %v1496
      %v1529 = vcvt.s32.f32 %v1497
      %v1530 = vcvt.s32.f32 %v1498
      %v1531 = vcvt.s32.f32 %v1499
      %v1532 = vcvt.s32.f32 %v1500
      %v1533 = vcvt.s32.f32 %v1501
      %v1534 = vcvt.s32.f32 %v1502
      %v1535 = vcvt.s32.f32 %v1503
      %v1536 = vcvt.s32.f32 %v1504
      %v1537 = vcvt.s32.f32 %v1505
      %v1538 = vcvt.s32.f32 %v1506
      %v1539 = vcvt.s32.f32 %v1507
      %v1540 = vcvt.s32.f32 %v1508
      %v1541 = vcvt.s32.f32 %v1509
      %v1542 = vcvt.s32.f32 %v1510
      %v1543 = vcvt.s32.f32 %v1511
      %v1544 = vcvt.s32.f32 %v1512
      %v1545 = vcvt.s32.f32 %v1513
      %v1546 = vcvt.s32.f32 %v1514
      %v1547 = vcvt.s32.f32 %v1515
      %v1548 = vcvt.s32.f32 %v1516
      %v1549 = vcvt.s32.f32 %v1517
      %v1550 = vcvt.s32.f32 %v1518
      %v1551 = vcvt.s32.f32 %v1519
      %v1552 = vcvt.s32.f32 %v1520
      %v1553 = vcvt.s32.f32 %v1521
      %v1554 = vcvt.s32.f32 %v1522
      %v1555 = vcvt.s32.f32 %v1523
      %v1556 = vcvt.s32.f32 %v1524
      %vm1557 = vcmp.lt.s32.totalorder %v1397, 240
      %vm1558 = vcmp.lt.s32.totalorder %v1398, 240
      %vm1559 = vcmp.lt.s32.totalorder %v1399, 240
      %vm1560 = vcmp.lt.s32.totalorder %v1400, 240
      %vm1561 = vcmp.lt.s32.totalorder %v1401, 240
      %vm1562 = vcmp.lt.s32.totalorder %v1402, 240
      %vm1563 = vcmp.lt.s32.totalorder %v1403, 240
      %vm1564 = vcmp.lt.s32.totalorder %v1404, 240
      %vm1565 = vcmp.lt.s32.totalorder %v1405, 240
      %vm1566 = vcmp.lt.s32.totalorder %v1406, 240
      %vm1567 = vcmp.lt.s32.totalorder %v1407, 240
      %vm1568 = vcmp.lt.s32.totalorder %v1408, 240
      %vm1569 = vcmp.lt.s32.totalorder %v1409, 240
      %vm1570 = vcmp.lt.s32.totalorder %v1410, 240
      %vm1571 = vcmp.lt.s32.totalorder %v1411, 240
      %vm1572 = vcmp.lt.s32.totalorder %v1412, 240
      %vm1573 = vcmp.lt.s32.totalorder %v1413, 240
      %vm1574 = vcmp.lt.s32.totalorder %v1414, 240
      %vm1575 = vcmp.lt.s32.totalorder %v1415, 240
      %vm1576 = vcmp.lt.s32.totalorder %v1416, 240
      %vm1577 = vcmp.lt.s32.totalorder %v1417, 240
      %vm1578 = vcmp.lt.s32.totalorder %v1418, 240
      %vm1579 = vcmp.lt.s32.totalorder %v1419, 240
      %vm1580 = vcmp.lt.s32.totalorder %v1420, 240
      %vm1581 = vcmp.lt.s32.totalorder %v1421, 240
      %vm1582 = vcmp.lt.s32.totalorder %v1422, 240
      %vm1583 = vcmp.lt.s32.totalorder %v1423, 240
      %vm1584 = vcmp.lt.s32.totalorder %v1424, 240
      %vm1585 = vcmp.lt.s32.totalorder %v1425, 240
      %vm1586 = vcmp.lt.s32.totalorder %v1426, 240
      %vm1587 = vcmp.lt.s32.totalorder %v1427, 240
      %vm1588 = vcmp.lt.s32.totalorder %v1428, 240
      %v1589 = vsel %vm1557, 1, 0
      %v1590 = vsel %vm1558, 1, 0
      %v1591 = vsel %vm1559, 1, 0
      %v1592 = vsel %vm1560, 1, 0
      %v1593 = vsel %vm1561, 1, 0
      %v1594 = vsel %vm1562, 1, 0
      %v1595 = vsel %vm1563, 1, 0
      %v1596 = vsel %vm1564, 1, 0
      %v1597 = vsel %vm1565, 1, 0
      %v1598 = vsel %vm1566, 1, 0
      %v1599 = vsel %vm1567, 1, 0
      %v1600 = vsel %vm1568, 1, 0
      %v1601 = vsel %vm1569, 1, 0
      %v1602 = vsel %vm1570, 1, 0
      %v1603 = vsel %vm1571, 1, 0
      %v1604 = vsel %vm1572, 1, 0
      %v1605 = vsel %vm1573, 1, 0
      %v1606 = vsel %vm1574, 1, 0
      %v1607 = vsel %vm1575, 1, 0
      %v1608 = vsel %vm1576, 1, 0
      %v1609 = vsel %vm1577, 1, 0
      %v1610 = vsel %vm1578, 1, 0
      %v1611 = vsel %vm1579, 1, 0
      %v1612 = vsel %vm1580, 1, 0
      %v1613 = vsel %vm1581, 1, 0
      %v1614 = vsel %vm1582, 1, 0
      %v1615 = vsel %vm1583, 1, 0
      %v1616 = vsel %vm1584, 1, 0
      %v1617 = vsel %vm1585, 1, 0
      %v1618 = vsel %vm1586, 1, 0
      %v1619 = vsel %vm1587, 1, 0
      %v1620 = vsel %vm1588, 1, 0
      %v1621 = vcvt.s32.f32 %v1589
      %v1622 = vcvt.s32.f32 %v1590
      %v1623 = vcvt.s32.f32 %v1591
      %v1624 = vcvt.s32.f32 %v1592
      %v1625 = vcvt.s32.f32 %v1593
      %v1626 = vcvt.s32.f32 %v1594
      %v1627 = vcvt.s32.f32 %v1595
      %v1628 = vcvt.s32.f32 %v1596
      %v1629 = vcvt.s32.f32 %v1597
      %v1630 = vcvt.s32.f32 %v1598
      %v1631 = vcvt.s32.f32 %v1599
      %v1632 = vcvt.s32.f32 %v1600
      %v1633 = vcvt.s32.f32 %v1601
      %v1634 = vcvt.s32.f32 %v1602
      %v1635 = vcvt.s32.f32 %v1603
      %v1636 = vcvt.s32.f32 %v1604
      %v1637 = vcvt.s32.f32 %v1605
      %v1638 = vcvt.s32.f32 %v1606
      %v1639 = vcvt.s32.f32 %v1607
      %v1640 = vcvt.s32.f32 %v1608
      %v1641 = vcvt.s32.f32 %v1609
      %v1642 = vcvt.s32.f32 %v1610
      %v1643 = vcvt.s32.f32 %v1611
      %v1644 = vcvt.s32.f32 %v1612
      %v1645 = vcvt.s32.f32 %v1613
      %v1646 = vcvt.s32.f32 %v1614
      %v1647 = vcvt.s32.f32 %v1615
      %v1648 = vcvt.s32.f32 %v1616
      %v1649 = vcvt.s32.f32 %v1617
      %v1650 = vcvt.s32.f32 %v1618
      %v1651 = vcvt.s32.f32 %v1619
      %v1652 = vcvt.s32.f32 %v1620
      %vm1653 = vcmp.ge.s32.totalorder %v1429, 1
      %vm1654 = vcmp.ge.s32.totalorder %v1430, 1
      %vm1655 = vcmp.ge.s32.totalorder %v1431, 1
      %vm1656 = vcmp.ge.s32.totalorder %v1432, 1
      %vm1657 = vcmp.ge.s32.totalorder %v1433, 1
      %vm1658 = vcmp.ge.s32.totalorder %v1434, 1
      %vm1659 = vcmp.ge.s32.totalorder %v1435, 1
      %vm1660 = vcmp.ge.s32.totalorder %v1436, 1
      %vm1661 = vcmp.ge.s32.totalorder %v1437, 1
      %vm1662 = vcmp.ge.s32.totalorder %v1438, 1
      %vm1663 = vcmp.ge.s32.totalorder %v1439, 1
      %vm1664 = vcmp.ge.s32.totalorder %v1440, 1
      %vm1665 = vcmp.ge.s32.totalorder %v1441, 1
      %vm1666 = vcmp.ge.s32.totalorder %v1442, 1
      %vm1667 = vcmp.ge.s32.totalorder %v1443, 1
      %vm1668 = vcmp.ge.s32.totalorder %v1444, 1
      %vm1669 = vcmp.ge.s32.totalorder %v1445, 1
      %vm1670 = vcmp.ge.s32.totalorder %v1446, 1
      %vm1671 = vcmp.ge.s32.totalorder %v1447, 1
      %vm1672 = vcmp.ge.s32.totalorder %v1448, 1
      %vm1673 = vcmp.ge.s32.totalorder %v1449, 1
      %vm1674 = vcmp.ge.s32.totalorder %v1450, 1
      %vm1675 = vcmp.ge.s32.totalorder %v1451, 1
      %vm1676 = vcmp.ge.s32.totalorder %v1452, 1
      %vm1677 = vcmp.ge.s32.totalorder %v1453, 1
      %vm1678 = vcmp.ge.s32.totalorder %v1454, 1
      %vm1679 = vcmp.ge.s32.totalorder %v1455, 1
      %vm1680 = vcmp.ge.s32.totalorder %v1456, 1
      %vm1681 = vcmp.ge.s32.totalorder %v1457, 1
      %vm1682 = vcmp.ge.s32.totalorder %v1458, 1
      %vm1683 = vcmp.ge.s32.totalorder %v1459, 1
      %vm1684 = vcmp.ge.s32.totalorder %v1460, 1
      %v1685 = vsel %vm1653, 1, 0
      %v1686 = vsel %vm1654, 1, 0
      %v1687 = vsel %vm1655, 1, 0
      %v1688 = vsel %vm1656, 1, 0
      %v1689 = vsel %vm1657, 1, 0
      %v1690 = vsel %vm1658, 1, 0
      %v1691 = vsel %vm1659, 1, 0
      %v1692 = vsel %vm1660, 1, 0
      %v1693 = vsel %vm1661, 1, 0
      %v1694 = vsel %vm1662, 1, 0
      %v1695 = vsel %vm1663, 1, 0
      %v1696 = vsel %vm1664, 1, 0
      %v1697 = vsel %vm1665, 1, 0
      %v1698 = vsel %vm1666, 1, 0
      %v1699 = vsel %vm1667, 1, 0
      %v1700 = vsel %vm1668, 1, 0
      %v1701 = vsel %vm1669, 1, 0
      %v1702 = vsel %vm1670, 1, 0
      %v1703 = vsel %vm1671, 1, 0
      %v1704 = vsel %vm1672, 1, 0
      %v1705 = vsel %vm1673, 1, 0
      %v1706 = vsel %vm1674, 1, 0
      %v1707 = vsel %vm1675, 1, 0
      %v1708 = vsel %vm1676, 1, 0
      %v1709 = vsel %vm1677, 1, 0
      %v1710 = vsel %vm1678, 1, 0
      %v1711 = vsel %vm1679, 1, 0
      %v1712 = vsel %vm1680, 1, 0
      %v1713 = vsel %vm1681, 1, 0
      %v1714 = vsel %vm1682, 1, 0
      %v1715 = vsel %vm1683, 1, 0
      %v1716 = vsel %vm1684, 1, 0
      %v1717 = vcvt.s32.f32 %v1685
      %v1718 = vcvt.s32.f32 %v1686
      %v1719 = vcvt.s32.f32 %v1687
      %v1720 = vcvt.s32.f32 %v1688
      %v1721 = vcvt.s32.f32 %v1689
      %v1722 = vcvt.s32.f32 %v1690
      %v1723 = vcvt.s32.f32 %v1691
      %v1724 = vcvt.s32.f32 %v1692
      %v1725 = vcvt.s32.f32 %v1693
      %v1726 = vcvt.s32.f32 %v1694
      %v1727 = vcvt.s32.f32 %v1695
      %v1728 = vcvt.s32.f32 %v1696
      %v1729 = vcvt.s32.f32 %v1697
      %v1730 = vcvt.s32.f32 %v1698
      %v1731 = vcvt.s32.f32 %v1699
      %v1732 = vcvt.s32.f32 %v1700
      %v1733 = vcvt.s32.f32 %v1701
      %v1734 = vcvt.s32.f32 %v1702
      %v1735 = vcvt.s32.f32 %v1703
      %v1736 = vcvt.s32.f32 %v1704
      %v1737 = vcvt.s32.f32 %v1705
      %v1738 = vcvt.s32.f32 %v1706
      %v1739 = vcvt.s32.f32 %v1707
      %v1740 = vcvt.s32.f32 %v1708
      %v1741 = vcvt.s32.f32 %v1709
      %v1742 = vcvt.s32.f32 %v1710
      %v1743 = vcvt.s32.f32 %v1711
      %v1744 = vcvt.s32.f32 %v1712
      %v1745 = vcvt.s32.f32 %v1713
      %v1746 = vcvt.s32.f32 %v1714
      %v1747 = vcvt.s32.f32 %v1715
      %v1748 = vcvt.s32.f32 %v1716
      %vm1749 = vcmp.lt.s32.totalorder %v1429, 15
      %vm1750 = vcmp.lt.s32.totalorder %v1430, 15
      %vm1751 = vcmp.lt.s32.totalorder %v1431, 15
      %vm1752 = vcmp.lt.s32.totalorder %v1432, 15
      %vm1753 = vcmp.lt.s32.totalorder %v1433, 15
      %vm1754 = vcmp.lt.s32.totalorder %v1434, 15
      %vm1755 = vcmp.lt.s32.totalorder %v1435, 15
      %vm1756 = vcmp.lt.s32.totalorder %v1436, 15
      %vm1757 = vcmp.lt.s32.totalorder %v1437, 15
      %vm1758 = vcmp.lt.s32.totalorder %v1438, 15
      %vm1759 = vcmp.lt.s32.totalorder %v1439, 15
      %vm1760 = vcmp.lt.s32.totalorder %v1440, 15
      %vm1761 = vcmp.lt.s32.totalorder %v1441, 15
      %vm1762 = vcmp.lt.s32.totalorder %v1442, 15
      %vm1763 = vcmp.lt.s32.totalorder %v1443, 15
      %vm1764 = vcmp.lt.s32.totalorder %v1444, 15
      %vm1765 = vcmp.lt.s32.totalorder %v1445, 15
      %vm1766 = vcmp.lt.s32.totalorder %v1446, 15
      %vm1767 = vcmp.lt.s32.totalorder %v1447, 15
      %vm1768 = vcmp.lt.s32.totalorder %v1448, 15
      %vm1769 = vcmp.lt.s32.totalorder %v1449, 15
      %vm1770 = vcmp.lt.s32.totalorder %v1450, 15
      %vm1771 = vcmp.lt.s32.totalorder %v1451, 15
      %vm1772 = vcmp.lt.s32.totalorder %v1452, 15
      %vm1773 = vcmp.lt.s32.totalorder %v1453, 15
      %vm1774 = vcmp.lt.s32.totalorder %v1454, 15
      %vm1775 = vcmp.lt.s32.totalorder %v1455, 15
      %vm1776 = vcmp.lt.s32.totalorder %v1456, 15
      %vm1777 = vcmp.lt.s32.totalorder %v1457, 15
      %vm1778 = vcmp.lt.s32.totalorder %v1458, 15
      %vm1779 = vcmp.lt.s32.totalorder %v1459, 15
      %vm1780 = vcmp.lt.s32.totalorder %v1460, 15
      %v1781 = vsel %vm1749, 1, 0
      %v1782 = vsel %vm1750, 1, 0
      %v1783 = vsel %vm1751, 1, 0
      %v1784 = vsel %vm1752, 1, 0
      %v1785 = vsel %vm1753, 1, 0
      %v1786 = vsel %vm1754, 1, 0
      %v1787 = vsel %vm1755, 1, 0
      %v1788 = vsel %vm1756, 1, 0
      %v1789 = vsel %vm1757, 1, 0
      %v1790 = vsel %vm1758, 1, 0
      %v1791 = vsel %vm1759, 1, 0
      %v1792 = vsel %vm1760, 1, 0
      %v1793 = vsel %vm1761, 1, 0
      %v1794 = vsel %vm1762, 1, 0
      %v1795 = vsel %vm1763, 1, 0
      %v1796 = vsel %vm1764, 1, 0
      %v1797 = vsel %vm1765, 1, 0
      %v1798 = vsel %vm1766, 1, 0
      %v1799 = vsel %vm1767, 1, 0
      %v1800 = vsel %vm1768, 1, 0
      %v1801 = vsel %vm1769, 1, 0
      %v1802 = vsel %vm1770, 1, 0
      %v1803 = vsel %vm1771, 1, 0
      %v1804 = vsel %vm1772, 1, 0
      %v1805 = vsel %vm1773, 1, 0
      %v1806 = vsel %vm1774, 1, 0
      %v1807 = vsel %vm1775, 1, 0
      %v1808 = vsel %vm1776, 1, 0
      %v1809 = vsel %vm1777, 1, 0
      %v1810 = vsel %vm1778, 1, 0
      %v1811 = vsel %vm1779, 1, 0
      %v1812 = vsel %vm1780, 1, 0
      %v1813 = vcvt.s32.f32 %v1781
      %v1814 = vcvt.s32.f32 %v1782
      %v1815 = vcvt.s32.f32 %v1783
      %v1816 = vcvt.s32.f32 %v1784
      %v1817 = vcvt.s32.f32 %v1785
      %v1818 = vcvt.s32.f32 %v1786
      %v1819 = vcvt.s32.f32 %v1787
      %v1820 = vcvt.s32.f32 %v1788
      %v1821 = vcvt.s32.f32 %v1789
      %v1822 = vcvt.s32.f32 %v1790
      %v1823 = vcvt.s32.f32 %v1791
      %v1824 = vcvt.s32.f32 %v1792
      %v1825 = vcvt.s32.f32 %v1793
      %v1826 = vcvt.s32.f32 %v1794
      %v1827 = vcvt.s32.f32 %v1795
      %v1828 = vcvt.s32.f32 %v1796
      %v1829 = vcvt.s32.f32 %v1797
      %v1830 = vcvt.s32.f32 %v1798
      %v1831 = vcvt.s32.f32 %v1799
      %v1832 = vcvt.s32.f32 %v1800
      %v1833 = vcvt.s32.f32 %v1801
      %v1834 = vcvt.s32.f32 %v1802
      %v1835 = vcvt.s32.f32 %v1803
      %v1836 = vcvt.s32.f32 %v1804
      %v1837 = vcvt.s32.f32 %v1805
      %v1838 = vcvt.s32.f32 %v1806
      %v1839 = vcvt.s32.f32 %v1807
      %v1840 = vcvt.s32.f32 %v1808
      %v1841 = vcvt.s32.f32 %v1809
      %v1842 = vcvt.s32.f32 %v1810
      %v1843 = vcvt.s32.f32 %v1811
      %v1844 = vcvt.s32.f32 %v1812
      %v1845 = vld [vmem:[%s5] sm:$0xff]
      %v1846 = vld [vmem:[%s5 + $0x8] sm:$0x1]
      %v1847 = vmul.f32 %v1525, %v1717
      %v1848 = vmul.f32 %v1526, %v1718
      %v1849 = vmul.f32 %v1527, %v1719
      %v1850 = vmul.f32 %v1528, %v1720
      %v1851 = vmul.f32 %v1529, %v1721
      %v1852 = vmul.f32 %v1530, %v1722
      %v1853 = vmul.f32 %v1531, %v1723
      %v1854 = vmul.f32 %v1532, %v1724
      %v1855 = vmul.f32 %v1533, %v1725
      %v1856 = vmul.f32 %v1534, %v1726
      %v1857 = vmul.f32 %v1535, %v1727
      %v1858 = vmul.f32 %v1536, %v1728
      %v1859 = vmul.f32 %v1537, %v1729
      %v1860 = vmul.f32 %v1538, %v1730
      %v1861 = vmul.f32 %v1539, %v1731
      %v1862 = vmul.f32 %v1540, %v1732
      %v1863 = vmul.f32 %v1541, %v1733
      %v1864 = vmul.f32 %v1542, %v1734
      %v1865 = vmul.f32 %v1543, %v1735
      %v1866 = vmul.f32 %v1544, %v1736
      %v1867 = vmul.f32 %v1545, %v1737
      %v1868 = vmul.f32 %v1546, %v1738
      %v1869 = vmul.f32 %v1547, %v1739
      %v1870 = vmul.f32 %v1548, %v1740
      %v1871 = vmul.f32 %v1549, %v1741
      %v1872 = vmul.f32 %v1550, %v1742
      %v1873 = vmul.f32 %v1551, %v1743
      %v1874 = vmul.f32 %v1552, %v1744
      %v1875 = vmul.f32 %v1553, %v1745
      %v1876 = vmul.f32 %v1554, %v1746
      %v1877 = vmul.f32 %v1555, %v1747
      %v1878 = vmul.f32 %v1556, %v1748
      %v1879 = vld [vmem:[#allocation2] sm:$0xff]
      %v1880 = vld [vmem:[#allocation2 + $0x8] sm:$0xff]
      %v1881 = vld [vmem:[#allocation2 + $0x10] sm:$0xff]
      %v1882 = vld [vmem:[#allocation2 + $0x18] sm:$0xff]
      %v1883 = vld [vmem:[#allocation2 + $0x20] sm:$0xff]
      %v1884 = vld [vmem:[#allocation2 + $0x28] sm:$0xff]
      %v1885 = vld [vmem:[#allocation2 + $0x30] sm:$0xff]
      %v1886 = vld [vmem:[#allocation2 + $0x38] sm:$0xff]
      %v1887 = vld [vmem:[#allocation2 + $0x40] sm:$0xff]
      %v1888 = vld [vmem:[#allocation2 + $0x48] sm:$0xff]
      %v1889 = vld [vmem:[#allocation2 + $0x50] sm:$0xff]
      %v1890 = vld [vmem:[#allocation2 + $0x58] sm:$0xff]
      %v1891 = vld [vmem:[#allocation2 + $0x60] sm:$0xff]
      %v1892 = vld [vmem:[#allocation2 + $0x68] sm:$0xff]
      %v1893 = vld [vmem:[#allocation2 + $0x70] sm:$0xff]
      %v1894 = vld [vmem:[#allocation2 + $0x78] sm:$0xff]
      %v1895 = vld [vmem:[#allocation2 + $0x80] sm:$0xff]
      %v1896 = vld [vmem:[#allocation2 + $0x88] sm:$0xff]
      %v1897 = vld [vmem:[#allocation2 + $0x90] sm:$0xff]
      %v1898 = vld [vmem:[#allocation2 + $0x98] sm:$0xff]
      %v1899 = vld [vmem:[#allocation2 + $0xa0] sm:$0xff]
      %v1900 = vld [vmem:[#allocation2 + $0xa8] sm:$0xff]
      %v1901 = vld [vmem:[#allocation2 + $0xb0] sm:$0xff]
      %v1902 = vld [vmem:[#allocation2 + $0xb8] sm:$0xff]
      %v1903 = vld [vmem:[#allocation2 + $0xc0] sm:$0xff]
      %v1904 = vld [vmem:[#allocation2 + $0xc8] sm:$0xff]
      %v1905 = vld [vmem:[#allocation2 + $0xd0] sm:$0xff]
      %v1906 = vld [vmem:[#allocation2 + $0xd8] sm:$0xff]
      %v1907 = vld [vmem:[#allocation2 + $0xe0] sm:$0xff]
      %v1908 = vld [vmem:[#allocation2 + $0xe8] sm:$0xff]
      %v1909 = vld [vmem:[#allocation2 + $0xf0] sm:$0xff]
      %v1910 = vld [vmem:[#allocation2 + $0xf8] sm:$0xff]
      %v1911 = vmul.f32 %v1879, %v1847
      %v1912 = vmul.f32 %v1880, %v1848
      %v1913 = vmul.f32 %v1881, %v1849
      %v1914 = vmul.f32 %v1882, %v1850
      %v1915 = vmul.f32 %v1883, %v1851
      %v1916 = vmul.f32 %v1884, %v1852
      %v1917 = vmul.f32 %v1885, %v1853
      %v1918 = vmul.f32 %v1886, %v1854
      %v1919 = vmul.f32 %v1887, %v1855
      %v1920 = vmul.f32 %v1888, %v1856
      %v1921 = vmul.f32 %v1889, %v1857
      %v1922 = vmul.f32 %v1890, %v1858
      %v1923 = vmul.f32 %v1891, %v1859
      %v1924 = vmul.f32 %v1892, %v1860
      %v1925 = vmul.f32 %v1893, %v1861
      %v1926 = vmul.f32 %v1894, %v1862
      %v1927 = vmul.f32 %v1895, %v1863
      %v1928 = vmul.f32 %v1896, %v1864
      %v1929 = vmul.f32 %v1897, %v1865
      %v1930 = vmul.f32 %v1898, %v1866
      %v1931 = vmul.f32 %v1899, %v1867
      %v1932 = vmul.f32 %v1900, %v1868
      %v1933 = vmul.f32 %v1901, %v1869
      %v1934 = vmul.f32 %v1902, %v1870
      %v1935 = vmul.f32 %v1903, %v1871
      %v1936 = vmul.f32 %v1904, %v1872
      %v1937 = vmul.f32 %v1905, %v1873
      %v1938 = vmul.f32 %v1906, %v1874
      %v1939 = vmul.f32 %v1907, %v1875
      %v1940 = vmul.f32 %v1908, %v1876
      %v1941 = vmul.f32 %v1909, %v1877
      %v1942 = vmul.f32 %v1910, %v1878
      %v1943 = vlaneseq
      %v1944 = vshrl.u32 %v1943, 7
      %v1945 = vsub.s32 0, %v1944
      %v1946 = vrot.slane %v1845, %v1945
      %v1947 = vmul.f32 %v1911, %v1946
      %v1948 = vmul.f32 %v1912, %v1946
      %v1949 = vmul.f32 %v1913, %v1946
      %v1950 = vmul.f32 %v1914, %v1946
      %v1951 = vmul.f32 %v1915, %v1946
      %v1952 = vmul.f32 %v1916, %v1946
      %v1953 = vmul.f32 %v1917, %v1946
      %v1954 = vmul.f32 %v1918, %v1946
      %v1955 = vmul.f32 %v1919, %v1946
      %v1956 = vmul.f32 %v1920, %v1946
      %v1957 = vmul.f32 %v1921, %v1946
      %v1958 = vmul.f32 %v1922, %v1946
      %v1959 = vmul.f32 %v1923, %v1946
      %v1960 = vmul.f32 %v1924, %v1946
      %v1961 = vmul.f32 %v1925, %v1946
      %v1962 = vmul.f32 %v1926, %v1946
      %v1963 = vmul.f32 %v1927, %v1946
      %v1964 = vmul.f32 %v1928, %v1946
      %v1965 = vmul.f32 %v1929, %v1946
      %v1966 = vmul.f32 %v1930, %v1946
      %v1967 = vmul.f32 %v1931, %v1946
      %v1968 = vmul.f32 %v1932, %v1946
      %v1969 = vmul.f32 %v1933, %v1946
      %v1970 = vmul.f32 %v1934, %v1946
      %v1971 = vmul.f32 %v1935, %v1946
      %v1972 = vmul.f32 %v1936, %v1946
      %v1973 = vmul.f32 %v1937, %v1946
      %v1974 = vmul.f32 %v1938, %v1946
      %v1975 = vmul.f32 %v1939, %v1946
      %v1976 = vmul.f32 %v1940, %v1946
      %v1977 = vmul.f32 %v1941, %v1946
      %v1978 = vmul.f32 %v1942, %v1946
      %v1979 = vadd.f32 %v1947, 0.0
      %v1980 = vadd.f32 %v1948, 0.0
      %v1981 = vadd.f32 %v1949, 0.0
      %v1982 = vadd.f32 %v1950, 0.0
      %v1983 = vadd.f32 %v1951, 0.0
      %v1984 = vadd.f32 %v1952, 0.0
      %v1985 = vadd.f32 %v1953, 0.0
      %v1986 = vadd.f32 %v1954, 0.0
      %v1987 = vadd.f32 %v1955, 0.0
      %v1988 = vadd.f32 %v1956, 0.0
      %v1989 = vadd.f32 %v1957, 0.0
      %v1990 = vadd.f32 %v1958, 0.0
      %v1991 = vadd.f32 %v1959, 0.0
      %v1992 = vadd.f32 %v1960, 0.0
      %v1993 = vadd.f32 %v1961, 0.0
      %v1994 = vadd.f32 %v1962, 0.0
      %v1995 = vadd.f32 %v1963, 0.0
      %v1996 = vadd.f32 %v1964, 0.0
      %v1997 = vadd.f32 %v1965, 0.0
      %v1998 = vadd.f32 %v1966, 0.0
      %v1999 = vadd.f32 %v1967, 0.0
      %v2000 = vadd.f32 %v1968, 0.0
      %v2001 = vadd.f32 %v1969, 0.0
      %v2002 = vadd.f32 %v1970, 0.0
      %v2003 = vadd.f32 %v1971, 0.0
      %v2004 = vadd.f32 %v1972, 0.0
      %v2005 = vadd.f32 %v1973, 0.0
      %v2006 = vadd.f32 %v1974, 0.0
      %v2007 = vadd.f32 %v1975, 0.0
      %v2008 = vadd.f32 %v1976, 0.0
      %v2009 = vadd.f32 %v1977, 0.0
      %v2010 = vadd.f32 %v1978, 0.0
      %v2011 = vld [vmem:[#allocation2 + $0x1] sm:$0xff]
      %v2012 = vld [vmem:[#allocation2 + $0x9] sm:$0xff]
      %v2013 = vld [vmem:[#allocation2 + $0x11] sm:$0xff]
      %v2014 = vld [vmem:[#allocation2 + $0x19] sm:$0xff]
      %v2015 = vld [vmem:[#allocation2 + $0x21] sm:$0xff]
      %v2016 = vld [vmem:[#allocation2 + $0x29] sm:$0xff]
      %v2017 = vld [vmem:[#allocation2 + $0x31] sm:$0xff]
      %v2018 = vld [vmem:[#allocation2 + $0x39] sm:$0xff]
      %v2019 = vld [vmem:[#allocation2 + $0x41] sm:$0xff]
      %v2020 = vld [vmem:[#allocation2 + $0x49] sm:$0xff]
      %v2021 = vld [vmem:[#allocation2 + $0x51] sm:$0xff]
      %v2022 = vld [vmem:[#allocation2 + $0x59] sm:$0xff]
      %v2023 = vld [vmem:[#allocation2 + $0x61] sm:$0xff]
      %v2024 = vld [vmem:[#allocation2 + $0x69] sm:$0xff]
      %v2025 = vld [vmem:[#allocation2 + $0x71] sm:$0xff]
      %v2026 = vld [vmem:[#allocation2 + $0x79] sm:$0xff]
      %v2027 = vld [vmem:[#allocation2 + $0x81] sm:$0xff]
      %v2028 = vld [vmem:[#allocation2 + $0x89] sm:$0xff]
      %v2029 = vld [vmem:[#allocation2 + $0x91] sm:$0xff]
      %v2030 = vld [vmem:[#allocation2 + $0x99] sm:$0xff]
      %v2031 = vld [vmem:[#allocation2 + $0xa1] sm:$0xff]
      %v2032 = vld [vmem:[#allocation2 + $0xa9] sm:$0xff]
      %v2033 = vld [vmem:[#allocation2 + $0xb1] sm:$0xff]
      %v2034 = vld [vmem:[#allocation2 + $0xb9] sm:$0xff]
      %v2035 = vld [vmem:[#allocation2 + $0xc1] sm:$0xff]
      %v2036 = vld [vmem:[#allocation2 + $0xc9] sm:$0xff]
      %v2037 = vld [vmem:[#allocation2 + $0xd1] sm:$0xff]
      %v2038 = vld [vmem:[#allocation2 + $0xd9] sm:$0xff]
      %v2039 = vld [vmem:[#allocation2 + $0xe1] sm:$0xff]
      %v2040 = vld [vmem:[#allocation2 + $0xe9] sm:$0xff]
      %v2041 = vld [vmem:[#allocation2 + $0xf1] sm:$0xff]
      %v2042 = vld [vmem:[#allocation2 + $0xf9] sm:$0xff]
      %v2043 = vmul.f32 %v2011, %v1525
      %v2044 = vmul.f32 %v2012, %v1526
      %v2045 = vmul.f32 %v2013, %v1527
      %v2046 = vmul.f32 %v2014, %v1528
      %v2047 = vmul.f32 %v2015, %v1529
      %v2048 = vmul.f32 %v2016, %v1530
      %v2049 = vmul.f32 %v2017, %v1531
      %v2050 = vmul.f32 %v2018, %v1532
      %v2051 = vmul.f32 %v2019, %v1533
      %v2052 = vmul.f32 %v2020, %v1534
      %v2053 = vmul.f32 %v2021, %v1535
      %v2054 = vmul.f32 %v2022, %v1536
      %v2055 = vmul.f32 %v2023, %v1537
      %v2056 = vmul.f32 %v2024, %v1538
      %v2057 = vmul.f32 %v2025, %v1539
      %v2058 = vmul.f32 %v2026, %v1540
      %v2059 = vmul.f32 %v2027, %v1541
      %v2060 = vmul.f32 %v2028, %v1542
      %v2061 = vmul.f32 %v2029, %v1543
      %v2062 = vmul.f32 %v2030, %v1544
      %v2063 = vmul.f32 %v2031, %v1545
      %v2064 = vmul.f32 %v2032, %v1546
      %v2065 = vmul.f32 %v2033, %v1547
      %v2066 = vmul.f32 %v2034, %v1548
      %v2067 = vmul.f32 %v2035, %v1549
      %v2068 = vmul.f32 %v2036, %v1550
      %v2069 = vmul.f32 %v2037, %v1551
      %v2070 = vmul.f32 %v2038, %v1552
      %v2071 = vmul.f32 %v2039, %v1553
      %v2072 = vmul.f32 %v2040, %v1554
      %v2073 = vmul.f32 %v2041, %v1555
      %v2074 = vmul.f32 %v2042, %v1556
      %v2075 = vlaneseq
      %v2076 = vshrl.u32 %v2075, 7
      %v2077 = vsub.s32 1, %v2076
      %v2078 = vrot.slane %v1845, %v2077
      %v2079 = vmul.f32 %v2043, %v2078
      %v2080 = vmul.f32 %v2044, %v2078
      %v2081 = vmul.f32 %v2045, %v2078
      %v2082 = vmul.f32 %v2046, %v2078
      %v2083 = vmul.f32 %v2047, %v2078
      %v2084 = vmul.f32 %v2048, %v2078
      %v2085 = vmul.f32 %v2049, %v2078
      %v2086 = vmul.f32 %v2050, %v2078
      %v2087 = vmul.f32 %v2051, %v2078
      %v2088 = vmul.f32 %v2052, %v2078
      %v2089 = vmul.f32 %v2053, %v2078
      %v2090 = vmul.f32 %v2054, %v2078
      %v2091 = vmul.f32 %v2055, %v2078
      %v2092 = vmul.f32 %v2056, %v2078
      %v2093 = vmul.f32 %v2057, %v2078
      %v2094 = vmul.f32 %v2058, %v2078
      %v2095 = vmul.f32 %v2059, %v2078
      %v2096 = vmul.f32 %v2060, %v2078
      %v2097 = vmul.f32 %v2061, %v2078
      %v2098 = vmul.f32 %v2062, %v2078
      %v2099 = vmul.f32 %v2063, %v2078
      %v2100 = vmul.f32 %v2064, %v2078
      %v2101 = vmul.f32 %v2065, %v2078
      %v2102 = vmul.f32 %v2066, %v2078
      %v2103 = vmul.f32 %v2067, %v2078
      %v2104 = vmul.f32 %v2068, %v2078
      %v2105 = vmul.f32 %v2069, %v2078
      %v2106 = vmul.f32 %v2070, %v2078
      %v2107 = vmul.f32 %v2071, %v2078
      %v2108 = vmul.f32 %v2072, %v2078
      %v2109 = vmul.f32 %v2073, %v2078
      %v2110 = vmul.f32 %v2074, %v2078
      %v2111 = vadd.f32 %v1979, %v2079
      %v2112 = vadd.f32 %v1980, %v2080
      %v2113 = vadd.f32 %v1981, %v2081
      %v2114 = vadd.f32 %v1982, %v2082
      %v2115 = vadd.f32 %v1983, %v2083
      %v2116 = vadd.f32 %v1984, %v2084
      %v2117 = vadd.f32 %v1985, %v2085
      %v2118 = vadd.f32 %v1986, %v2086
      %v2119 = vadd.f32 %v1987, %v2087
      %v2120 = vadd.f32 %v1988, %v2088
      %v2121 = vadd.f32 %v1989, %v2089
      %v2122 = vadd.f32 %v1990, %v2090
      %v2123 = vadd.f32 %v1991, %v2091
      %v2124 = vadd.f32 %v1992, %v2092
      %v2125 = vadd.f32 %v1993, %v2093
      %v2126 = vadd.f32 %v1994, %v2094
      %v2127 = vadd.f32 %v1995, %v2095
      %v2128 = vadd.f32 %v1996, %v2096
      %v2129 = vadd.f32 %v1997, %v2097
      %v2130 = vadd.f32 %v1998, %v2098
      %v2131 = vadd.f32 %v1999, %v2099
      %v2132 = vadd.f32 %v2000, %v2100
      %v2133 = vadd.f32 %v2001, %v2101
      %v2134 = vadd.f32 %v2002, %v2102
      %v2135 = vadd.f32 %v2003, %v2103
      %v2136 = vadd.f32 %v2004, %v2104
      %v2137 = vadd.f32 %v2005, %v2105
      %v2138 = vadd.f32 %v2006, %v2106
      %v2139 = vadd.f32 %v2007, %v2107
      %v2140 = vadd.f32 %v2008, %v2108
      %v2141 = vadd.f32 %v2009, %v2109
      %v2142 = vadd.f32 %v2010, %v2110
      %v2143 = vmul.f32 %v1525, %v1813
      %v2144 = vmul.f32 %v1526, %v1814
      %v2145 = vmul.f32 %v1527, %v1815
      %v2146 = vmul.f32 %v1528, %v1816
      %v2147 = vmul.f32 %v1529, %v1817
      %v2148 = vmul.f32 %v1530, %v1818
      %v2149 = vmul.f32 %v1531, %v1819
      %v2150 = vmul.f32 %v1532, %v1820
      %v2151 = vmul.f32 %v1533, %v1821
      %v2152 = vmul.f32 %v1534, %v1822
      %v2153 = vmul.f32 %v1535, %v1823
      %v2154 = vmul.f32 %v1536, %v1824
      %v2155 = vmul.f32 %v1537, %v1825
      %v2156 = vmul.f32 %v1538, %v1826
      %v2157 = vmul.f32 %v1539, %v1827
      %v2158 = vmul.f32 %v1540, %v1828
      %v2159 = vmul.f32 %v1541, %v1829
      %v2160 = vmul.f32 %v1542, %v1830
      %v2161 = vmul.f32 %v1543, %v1831
      %v2162 = vmul.f32 %v1544, %v1832
      %v2163 = vmul.f32 %v1545, %v1833
      %v2164 = vmul.f32 %v1546, %v1834
      %v2165 = vmul.f32 %v1547, %v1835
      %v2166 = vmul.f32 %v1548, %v1836
      %v2167 = vmul.f32 %v1549, %v1837
      %v2168 = vmul.f32 %v1550, %v1838
      %v2169 = vmul.f32 %v1551, %v1839
      %v2170 = vmul.f32 %v1552, %v1840
      %v2171 = vmul.f32 %v1553, %v1841
      %v2172 = vmul.f32 %v1554, %v1842
      %v2173 = vmul.f32 %v1555, %v1843
      %v2174 = vmul.f32 %v1556, %v1844
      %v2175 = vld [vmem:[#allocation2 + $0x2] sm:$0xff]
      %v2176 = vld [vmem:[#allocation2 + $0xa] sm:$0xff]
      %v2177 = vld [vmem:[#allocation2 + $0x12] sm:$0xff]
      %v2178 = vld [vmem:[#allocation2 + $0x1a] sm:$0xff]
      %v2179 = vld [vmem:[#allocation2 + $0x22] sm:$0xff]
      %v2180 = vld [vmem:[#allocation2 + $0x2a] sm:$0xff]
      %v2181 = vld [vmem:[#allocation2 + $0x32] sm:$0xff]
      %v2182 = vld [vmem:[#allocation2 + $0x3a] sm:$0xff]
      %v2183 = vld [vmem:[#allocation2 + $0x42] sm:$0xff]
      %v2184 = vld [vmem:[#allocation2 + $0x4a] sm:$0xff]
      %v2185 = vld [vmem:[#allocation2 + $0x52] sm:$0xff]
      %v2186 = vld [vmem:[#allocation2 + $0x5a] sm:$0xff]
      %v2187 = vld [vmem:[#allocation2 + $0x62] sm:$0xff]
      %v2188 = vld [vmem:[#allocation2 + $0x6a] sm:$0xff]
      %v2189 = vld [vmem:[#allocation2 + $0x72] sm:$0xff]
      %v2190 = vld [vmem:[#allocation2 + $0x7a] sm:$0xff]
      %v2191 = vld [vmem:[#allocation2 + $0x82] sm:$0xff]
      %v2192 = vld [vmem:[#allocation2 + $0x8a] sm:$0xff]
      %v2193 = vld [vmem:[#allocation2 + $0x92] sm:$0xff]
      %v2194 = vld [vmem:[#allocation2 + $0x9a] sm:$0xff]
      %v2195 = vld [vmem:[#allocation2 + $0xa2] sm:$0xff]
      %v2196 = vld [vmem:[#allocation2 + $0xaa] sm:$0xff]
      %v2197 = vld [vmem:[#allocation2 + $0xb2] sm:$0xff]
      %v2198 = vld [vmem:[#allocation2 + $0xba] sm:$0xff]
      %v2199 = vld [vmem:[#allocation2 + $0xc2] sm:$0xff]
      %v2200 = vld [vmem:[#allocation2 + $0xca] sm:$0xff]
      %v2201 = vld [vmem:[#allocation2 + $0xd2] sm:$0xff]
      %v2202 = vld [vmem:[#allocation2 + $0xda] sm:$0xff]
      %v2203 = vld [vmem:[#allocation2 + $0xe2] sm:$0xff]
      %v2204 = vld [vmem:[#allocation2 + $0xea] sm:$0xff]
      %v2205 = vld [vmem:[#allocation2 + $0xf2] sm:$0xff]
      %v2206 = vld [vmem:[#allocation2 + $0xfa] sm:$0xff]
      %v2207 = vmul.f32 %v2175, %v2143
      %v2208 = vmul.f32 %v2176, %v2144
      %v2209 = vmul.f32 %v2177, %v2145
      %v2210 = vmul.f32 %v2178, %v2146
      %v2211 = vmul.f32 %v2179, %v2147
      %v2212 = vmul.f32 %v2180, %v2148
      %v2213 = vmul.f32 %v2181, %v2149
      %v2214 = vmul.f32 %v2182, %v2150
      %v2215 = vmul.f32 %v2183, %v2151
      %v2216 = vmul.f32 %v2184, %v2152
      %v2217 = vmul.f32 %v2185, %v2153
      %v2218 = vmul.f32 %v2186, %v2154
      %v2219 = vmul.f32 %v2187, %v2155
      %v2220 = vmul.f32 %v2188, %v2156
      %v2221 = vmul.f32 %v2189, %v2157
      %v2222 = vmul.f32 %v2190, %v2158
      %v2223 = vmul.f32 %v2191, %v2159
      %v2224 = vmul.f32 %v2192, %v2160
      %v2225 = vmul.f32 %v2193, %v2161
      %v2226 = vmul.f32 %v2194, %v2162
      %v2227 = vmul.f32 %v2195, %v2163
      %v2228 = vmul.f32 %v2196, %v2164
      %v2229 = vmul.f32 %v2197, %v2165
      %v2230 = vmul.f32 %v2198, %v2166
      %v2231 = vmul.f32 %v2199, %v2167
      %v2232 = vmul.f32 %v2200, %v2168
      %v2233 = vmul.f32 %v2201, %v2169
      %v2234 = vmul.f32 %v2202, %v2170
      %v2235 = vmul.f32 %v2203, %v2171
      %v2236 = vmul.f32 %v2204, %v2172
      %v2237 = vmul.f32 %v2205, %v2173
      %v2238 = vmul.f32 %v2206, %v2174
      %v2239 = vlaneseq
      %v2240 = vshrl.u32 %v2239, 7
      %v2241 = vsub.s32 2, %v2240
      %v2242 = vrot.slane %v1845, %v2241
      %v2243 = vmul.f32 %v2207, %v2242
      %v2244 = vmul.f32 %v2208, %v2242
      %v2245 = vmul.f32 %v2209, %v2242
      %v2246 = vmul.f32 %v2210, %v2242
      %v2247 = vmul.f32 %v2211, %v2242
      %v2248 = vmul.f32 %v2212, %v2242
      %v2249 = vmul.f32 %v2213, %v2242
      %v2250 = vmul.f32 %v2214, %v2242
      %v2251 = vmul.f32 %v2215, %v2242
      %v2252 = vmul.f32 %v2216, %v2242
      %v2253 = vmul.f32 %v2217, %v2242
      %v2254 = vmul.f32 %v2218, %v2242
      %v2255 = vmul.f32 %v2219, %v2242
      %v2256 = vmul.f32 %v2220, %v2242
      %v2257 = vmul.f32 %v2221, %v2242
      %v2258 = vmul.f32 %v2222, %v2242
      %v2259 = vmul.f32 %v2223, %v2242
      %v2260 = vmul.f32 %v2224, %v2242
      %v2261 = vmul.f32 %v2225, %v2242
      %v2262 = vmul.f32 %v2226, %v2242
      %v2263 = vmul.f32 %v2227, %v2242
      %v2264 = vmul.f32 %v2228, %v2242
      %v2265 = vmul.f32 %v2229, %v2242
      %v2266 = vmul.f32 %v2230, %v2242
      %v2267 = vmul.f32 %v2231, %v2242
      %v2268 = vmul.f32 %v2232, %v2242
      %v2269 = vmul.f32 %v2233, %v2242
      %v2270 = vmul.f32 %v2234, %v2242
      %v2271 = vmul.f32 %v2235, %v2242
      %v2272 = vmul.f32 %v2236, %v2242
      %v2273 = vmul.f32 %v2237, %v2242
      %v2274 = vmul.f32 %v2238, %v2242
      %v2275 = vadd.f32 %v2111, %v2243
      %v2276 = vadd.f32 %v2112, %v2244
      %v2277 = vadd.f32 %v2113, %v2245
      %v2278 = vadd.f32 %v2114, %v2246
      %v2279 = vadd.f32 %v2115, %v2247
      %v2280 = vadd.f32 %v2116, %v2248
      %v2281 = vadd.f32 %v2117, %v2249
      %v2282 = vadd.f32 %v2118, %v2250
      %v2283 = vadd.f32 %v2119, %v2251
      %v2284 = vadd.f32 %v2120, %v2252
      %v2285 = vadd.f32 %v2121, %v2253
      %v2286 = vadd.f32 %v2122, %v2254
      %v2287 = vadd.f32 %v2123, %v2255
      %v2288 = vadd.f32 %v2124, %v2256
      %v2289 = vadd.f32 %v2125, %v2257
      %v2290 = vadd.f32 %v2126, %v2258
      %v2291 = vadd.f32 %v2127, %v2259
      %v2292 = vadd.f32 %v2128, %v2260
      %v2293 = vadd.f32 %v2129, %v2261
      %v2294 = vadd.f32 %v2130, %v2262
      %v2295 = vadd.f32 %v2131, %v2263
      %v2296 = vadd.f32 %v2132, %v2264
      %v2297 = vadd.f32 %v2133, %v2265
      %v2298 = vadd.f32 %v2134, %v2266
      %v2299 = vadd.f32 %v2135, %v2267
      %v2300 = vadd.f32 %v2136, %v2268
      %v2301 = vadd.f32 %v2137, %v2269
      %v2302 = vadd.f32 %v2138, %v2270
      %v2303 = vadd.f32 %v2139, %v2271
      %v2304 = vadd.f32 %v2140, %v2272
      %v2305 = vadd.f32 %v2141, %v2273
      %v2306 = vadd.f32 %v2142, %v2274
      %v2307 = vld [vmem:[#allocation2 + $0x100] sm:$0xff]
      %v2308 = vld [vmem:[#allocation2 + $0x108] sm:$0xff]
      %v2309 = vmul.f32 %v1881, %v1717
      %v2310 = vmul.f32 %v1882, %v1718
      %v2311 = vmul.f32 %v1883, %v1719
      %v2312 = vmul.f32 %v1884, %v1720
      %v2313 = vmul.f32 %v1885, %v1721
      %v2314 = vmul.f32 %v1886, %v1722
      %v2315 = vmul.f32 %v1887, %v1723
      %v2316 = vmul.f32 %v1888, %v1724
      %v2317 = vmul.f32 %v1889, %v1725
      %v2318 = vmul.f32 %v1890, %v1726
      %v2319 = vmul.f32 %v1891, %v1727
      %v2320 = vmul.f32 %v1892, %v1728
      %v2321 = vmul.f32 %v1893, %v1729
      %v2322 = vmul.f32 %v1894, %v1730
      %v2323 = vmul.f32 %v1895, %v1731
      %v2324 = vmul.f32 %v1896, %v1732
      %v2325 = vmul.f32 %v1897, %v1733
      %v2326 = vmul.f32 %v1898, %v1734
      %v2327 = vmul.f32 %v1899, %v1735
      %v2328 = vmul.f32 %v1900, %v1736
      %v2329 = vmul.f32 %v1901, %v1737
      %v2330 = vmul.f32 %v1902, %v1738
      %v2331 = vmul.f32 %v1903, %v1739
      %v2332 = vmul.f32 %v1904, %v1740
      %v2333 = vmul.f32 %v1905, %v1741
      %v2334 = vmul.f32 %v1906, %v1742
      %v2335 = vmul.f32 %v1907, %v1743
      %v2336 = vmul.f32 %v1908, %v1744
      %v2337 = vmul.f32 %v1909, %v1745
      %v2338 = vmul.f32 %v1910, %v1746
      %v2339 = vmul.f32 %v2307, %v1747
      %v2340 = vmul.f32 %v2308, %v1748
      %v2341 = vlaneseq
      %v2342 = vshrl.u32 %v2341, 7
      %v2343 = vsub.s32 3, %v2342
      %v2344 = vrot.slane %v1845, %v2343
      %v2345 = vmul.f32 %v2309, %v2344
      %v2346 = vmul.f32 %v2310, %v2344
      %v2347 = vmul.f32 %v2311, %v2344
      %v2348 = vmul.f32 %v2312, %v2344
      %v2349 = vmul.f32 %v2313, %v2344
      %v2350 = vmul.f32 %v2314, %v2344
      %v2351 = vmul.f32 %v2315, %v2344
      %v2352 = vmul.f32 %v2316, %v2344
      %v2353 = vmul.f32 %v2317, %v2344
      %v2354 = vmul.f32 %v2318, %v2344
      %v2355 = vmul.f32 %v2319, %v2344
      %v2356 = vmul.f32 %v2320, %v2344
      %v2357 = vmul.f32 %v2321, %v2344
      %v2358 = vmul.f32 %v2322, %v2344
      %v2359 = vmul.f32 %v2323, %v2344
      %v2360 = vmul.f32 %v2324, %v2344
      %v2361 = vmul.f32 %v2325, %v2344
      %v2362 = vmul.f32 %v2326, %v2344
      %v2363 = vmul.f32 %v2327, %v2344
      %v2364 = vmul.f32 %v2328, %v2344
      %v2365 = vmul.f32 %v2329, %v2344
      %v2366 = vmul.f32 %v2330, %v2344
      %v2367 = vmul.f32 %v2331, %v2344
      %v2368 = vmul.f32 %v2332, %v2344
      %v2369 = vmul.f32 %v2333, %v2344
      %v2370 = vmul.f32 %v2334, %v2344
      %v2371 = vmul.f32 %v2335, %v2344
      %v2372 = vmul.f32 %v2336, %v2344
      %v2373 = vmul.f32 %v2337, %v2344
      %v2374 = vmul.f32 %v2338, %v2344
      %v2375 = vmul.f32 %v2339, %v2344
      %v2376 = vmul.f32 %v2340, %v2344
      %v2377 = vadd.f32 %v2275, %v2345
      %v2378 = vadd.f32 %v2276, %v2346
      %v2379 = vadd.f32 %v2277, %v2347
      %v2380 = vadd.f32 %v2278, %v2348
      %v2381 = vadd.f32 %v2279, %v2349
      %v2382 = vadd.f32 %v2280, %v2350
      %v2383 = vadd.f32 %v2281, %v2351
      %v2384 = vadd.f32 %v2282, %v2352
      %v2385 = vadd.f32 %v2283, %v2353
      %v2386 = vadd.f32 %v2284, %v2354
      %v2387 = vadd.f32 %v2285, %v2355
      %v2388 = vadd.f32 %v2286, %v2356
      %v2389 = vadd.f32 %v2287, %v2357
      %v2390 = vadd.f32 %v2288, %v2358
      %v2391 = vadd.f32 %v2289, %v2359
      %v2392 = vadd.f32 %v2290, %v2360
      %v2393 = vadd.f32 %v2291, %v2361
      %v2394 = vadd.f32 %v2292, %v2362
      %v2395 = vadd.f32 %v2293, %v2363
      %v2396 = vadd.f32 %v2294, %v2364
      %v2397 = vadd.f32 %v2295, %v2365
      %v2398 = vadd.f32 %v2296, %v2366
      %v2399 = vadd.f32 %v2297, %v2367
      %v2400 = vadd.f32 %v2298, %v2368
      %v2401 = vadd.f32 %v2299, %v2369
      %v2402 = vadd.f32 %v2300, %v2370
      %v2403 = vadd.f32 %v2301, %v2371
      %v2404 = vadd.f32 %v2302, %v2372
      %v2405 = vadd.f32 %v2303, %v2373
      %v2406 = vadd.f32 %v2304, %v2374
      %v2407 = vadd.f32 %v2305, %v2375
      %v2408 = vadd.f32 %v2306, %v2376
      %v2409 = vld [vmem:[#allocation2 + $0x101] sm:$0xff]
      %v2410 = vld [vmem:[#allocation2 + $0x109] sm:$0xff]
      %v2411 = vlaneseq
      %v2412 = vshrl.u32 %v2411, 7
      %v2413 = vsub.s32 4, %v2412
      %v2414 = vrot.slane %v1845, %v2413
      %v2415 = vmul.f32 %v2013, %v2414
      %v2416 = vmul.f32 %v2014, %v2414
      %v2417 = vmul.f32 %v2015, %v2414
      %v2418 = vmul.f32 %v2016, %v2414
      %v2419 = vmul.f32 %v2017, %v2414
      %v2420 = vmul.f32 %v2018, %v2414
      %v2421 = vmul.f32 %v2019, %v2414
      %v2422 = vmul.f32 %v2020, %v2414
      %v2423 = vmul.f32 %v2021, %v2414
      %v2424 = vmul.f32 %v2022, %v2414
      %v2425 = vmul.f32 %v2023, %v2414
      %v2426 = vmul.f32 %v2024, %v2414
      %v2427 = vmul.f32 %v2025, %v2414
      %v2428 = vmul.f32 %v2026, %v2414
      %v2429 = vmul.f32 %v2027, %v2414
      %v2430 = vmul.f32 %v2028, %v2414
      %v2431 = vmul.f32 %v2029, %v2414
      %v2432 = vmul.f32 %v2030, %v2414
      %v2433 = vmul.f32 %v2031, %v2414
      %v2434 = vmul.f32 %v2032, %v2414
      %v2435 = vmul.f32 %v2033, %v2414
      %v2436 = vmul.f32 %v2034, %v2414
      %v2437 = vmul.f32 %v2035, %v2414
      %v2438 = vmul.f32 %v2036, %v2414
      %v2439 = vmul.f32 %v2037, %v2414
      %v2440 = vmul.f32 %v2038, %v2414
      %v2441 = vmul.f32 %v2039, %v2414
      %v2442 = vmul.f32 %v2040, %v2414
      %v2443 = vmul.f32 %v2041, %v2414
      %v2444 = vmul.f32 %v2042, %v2414
      %v2445 = vmul.f32 %v2409, %v2414
      %v2446 = vmul.f32 %v2410, %v2414
      %v2447 = vadd.f32 %v2377, %v2415
      %v2448 = vadd.f32 %v2378, %v2416
      %v2449 = vadd.f32 %v2379, %v2417
      %v2450 = vadd.f32 %v2380, %v2418
      %v2451 = vadd.f32 %v2381, %v2419
      %v2452 = vadd.f32 %v2382, %v2420
      %v2453 = vadd.f32 %v2383, %v2421
      %v2454 = vadd.f32 %v2384, %v2422
      %v2455 = vadd.f32 %v2385, %v2423
      %v2456 = vadd.f32 %v2386, %v2424
      %v2457 = vadd.f32 %v2387, %v2425
      %v2458 = vadd.f32 %v2388, %v2426
      %v2459 = vadd.f32 %v2389, %v2427
      %v2460 = vadd.f32 %v2390, %v2428
      %v2461 = vadd.f32 %v2391, %v2429
      %v2462 = vadd.f32 %v2392, %v2430
      %v2463 = vadd.f32 %v2393, %v2431
      %v2464 = vadd.f32 %v2394, %v2432
      %v2465 = vadd.f32 %v2395, %v2433
      %v2466 = vadd.f32 %v2396, %v2434
      %v2467 = vadd.f32 %v2397, %v2435
      %v2468 = vadd.f32 %v2398, %v2436
      %v2469 = vadd.f32 %v2399, %v2437
      %v2470 = vadd.f32 %v2400, %v2438
      %v2471 = vadd.f32 %v2401, %v2439
      %v2472 = vadd.f32 %v2402, %v2440
      %v2473 = vadd.f32 %v2403, %v2441
      %v2474 = vadd.f32 %v2404, %v2442
      %v2475 = vadd.f32 %v2405, %v2443
      %v2476 = vadd.f32 %v2406, %v2444
      %v2477 = vadd.f32 %v2407, %v2445
      %v2478 = vadd.f32 %v2408, %v2446
      %v2479 = vld [vmem:[#allocation2 + $0x102] sm:$0xff]
      %v2480 = vld [vmem:[#allocation2 + $0x10a] sm:$0xff]
      %v2481 = vmul.f32 %v2177, %v1813
      %v2482 = vmul.f32 %v2178, %v1814
      %v2483 = vmul.f32 %v2179, %v1815
      %v2484 = vmul.f32 %v2180, %v1816
      %v2485 = vmul.f32 %v2181, %v1817
      %v2486 = vmul.f32 %v2182, %v1818
      %v2487 = vmul.f32 %v2183, %v1819
      %v2488 = vmul.f32 %v2184, %v1820
      %v2489 = vmul.f32 %v2185, %v1821
      %v2490 = vmul.f32 %v2186, %v1822
      %v2491 = vmul.f32 %v2187, %v1823
      %v2492 = vmul.f32 %v2188, %v1824
      %v2493 = vmul.f32 %v2189, %v1825
      %v2494 = vmul.f32 %v2190, %v1826
      %v2495 = vmul.f32 %v2191, %v1827
      %v2496 = vmul.f32 %v2192, %v1828
      %v2497 = vmul.f32 %v2193, %v1829
      %v2498 = vmul.f32 %v2194, %v1830
      %v2499 = vmul.f32 %v2195, %v1831
      %v2500 = vmul.f32 %v2196, %v1832
      %v2501 = vmul.f32 %v2197, %v1833
      %v2502 = vmul.f32 %v2198, %v1834
      %v2503 = vmul.f32 %v2199, %v1835
      %v2504 = vmul.f32 %v2200, %v1836
      %v2505 = vmul.f32 %v2201, %v1837
      %v2506 = vmul.f32 %v2202, %v1838
      %v2507 = vmul.f32 %v2203, %v1839
      %v2508 = vmul.f32 %v2204, %v1840
      %v2509 = vmul.f32 %v2205, %v1841
      %v2510 = vmul.f32 %v2206, %v1842
      %v2511 = vmul.f32 %v2479, %v1843
      %v2512 = vmul.f32 %v2480, %v1844
      %v2513 = vlaneseq
      %v2514 = vshrl.u32 %v2513, 7
      %v2515 = vsub.s32 5, %v2514
      %v2516 = vrot.slane %v1845, %v2515
      %v2517 = vmul.f32 %v2481, %v2516
      %v2518 = vmul.f32 %v2482, %v2516
      %v2519 = vmul.f32 %v2483, %v2516
      %v2520 = vmul.f32 %v2484, %v2516
      %v2521 = vmul.f32 %v2485, %v2516
      %v2522 = vmul.f32 %v2486, %v2516
      %v2523 = vmul.f32 %v2487, %v2516
      %v2524 = vmul.f32 %v2488, %v2516
      %v2525 = vmul.f32 %v2489, %v2516
      %v2526 = vmul.f32 %v2490, %v2516
      %v2527 = vmul.f32 %v2491, %v2516
      %v2528 = vmul.f32 %v2492, %v2516
      %v2529 = vmul.f32 %v2493, %v2516
      %v2530 = vmul.f32 %v2494, %v2516
      %v2531 = vmul.f32 %v2495, %v2516
      %v2532 = vmul.f32 %v2496, %v2516
      %v2533 = vmul.f32 %v2497, %v2516
      %v2534 = vmul.f32 %v2498, %v2516
      %v2535 = vmul.f32 %v2499, %v2516
      %v2536 = vmul.f32 %v2500, %v2516
      %v2537 = vmul.f32 %v2501, %v2516
      %v2538 = vmul.f32 %v2502, %v2516
      %v2539 = vmul.f32 %v2503, %v2516
      %v2540 = vmul.f32 %v2504, %v2516
      %v2541 = vmul.f32 %v2505, %v2516
      %v2542 = vmul.f32 %v2506, %v2516
      %v2543 = vmul.f32 %v2507, %v2516
      %v2544 = vmul.f32 %v2508, %v2516
      %v2545 = vmul.f32 %v2509, %v2516
      %v2546 = vmul.f32 %v2510, %v2516
      %v2547 = vmul.f32 %v2511, %v2516
      %v2548 = vmul.f32 %v2512, %v2516
      %v2549 = vadd.f32 %v2447, %v2517
      %v2550 = vadd.f32 %v2448, %v2518
      %v2551 = vadd.f32 %v2449, %v2519
      %v2552 = vadd.f32 %v2450, %v2520
      %v2553 = vadd.f32 %v2451, %v2521
      %v2554 = vadd.f32 %v2452, %v2522
      %v2555 = vadd.f32 %v2453, %v2523
      %v2556 = vadd.f32 %v2454, %v2524
      %v2557 = vadd.f32 %v2455, %v2525
      %v2558 = vadd.f32 %v2456, %v2526
      %v2559 = vadd.f32 %v2457, %v2527
      %v2560 = vadd.f32 %v2458, %v2528
      %v2561 = vadd.f32 %v2459, %v2529
      %v2562 = vadd.f32 %v2460, %v2530
      %v2563 = vadd.f32 %v2461, %v2531
      %v2564 = vadd.f32 %v2462, %v2532
      %v2565 = vadd.f32 %v2463, %v2533
      %v2566 = vadd.f32 %v2464, %v2534
      %v2567 = vadd.f32 %v2465, %v2535
      %v2568 = vadd.f32 %v2466, %v2536
      %v2569 = vadd.f32 %v2467, %v2537
      %v2570 = vadd.f32 %v2468, %v2538
      %v2571 = vadd.f32 %v2469, %v2539
      %v2572 = vadd.f32 %v2470, %v2540
      %v2573 = vadd.f32 %v2471, %v2541
      %v2574 = vadd.f32 %v2472, %v2542
      %v2575 = vadd.f32 %v2473, %v2543
      %v2576 = vadd.f32 %v2474, %v2544
      %v2577 = vadd.f32 %v2475, %v2545
      %v2578 = vadd.f32 %v2476, %v2546
      %v2579 = vadd.f32 %v2477, %v2547
      %v2580 = vadd.f32 %v2478, %v2548
      %v2581 = vmul.f32 %v1621, %v1717
      %v2582 = vmul.f32 %v1622, %v1718
      %v2583 = vmul.f32 %v1623, %v1719
      %v2584 = vmul.f32 %v1624, %v1720
      %v2585 = vmul.f32 %v1625, %v1721
      %v2586 = vmul.f32 %v1626, %v1722
      %v2587 = vmul.f32 %v1627, %v1723
      %v2588 = vmul.f32 %v1628, %v1724
      %v2589 = vmul.f32 %v1629, %v1725
      %v2590 = vmul.f32 %v1630, %v1726
      %v2591 = vmul.f32 %v1631, %v1727
      %v2592 = vmul.f32 %v1632, %v1728
      %v2593 = vmul.f32 %v1633, %v1729
      %v2594 = vmul.f32 %v1634, %v1730
      %v2595 = vmul.f32 %v1635, %v1731
      %v2596 = vmul.f32 %v1636, %v1732
      %v2597 = vmul.f32 %v1637, %v1733
      %v2598 = vmul.f32 %v1638, %v1734
      %v2599 = vmul.f32 %v1639, %v1735
      %v2600 = vmul.f32 %v1640, %v1736
      %v2601 = vmul.f32 %v1641, %v1737
      %v2602 = vmul.f32 %v1642, %v1738
      %v2603 = vmul.f32 %v1643, %v1739
      %v2604 = vmul.f32 %v1644, %v1740
      %v2605 = vmul.f32 %v1645, %v1741
      %v2606 = vmul.f32 %v1646, %v1742
      %v2607 = vmul.f32 %v1647, %v1743
      %v2608 = vmul.f32 %v1648, %v1744
      %v2609 = vmul.f32 %v1649, %v1745
      %v2610 = vmul.f32 %v1650, %v1746
      %v2611 = vmul.f32 %v1651, %v1747
      %v2612 = vmul.f32 %v1652, %v1748
      %v2613 = vld [vmem:[#allocation2 + $0x110] sm:$0xff]
      %v2614 = vld [vmem:[#allocation2 + $0x118] sm:$0xff]
      %v2615 = vmul.f32 %v1883, %v2581
      %v2616 = vmul.f32 %v1884, %v2582
      %v2617 = vmul.f32 %v1885, %v2583
      %v2618 = vmul.f32 %v1886, %v2584
      %v2619 = vmul.f32 %v1887, %v2585
      %v2620 = vmul.f32 %v1888, %v2586
      %v2621 = vmul.f32 %v1889, %v2587
      %v2622 = vmul.f32 %v1890, %v2588
      %v2623 = vmul.f32 %v1891, %v2589
      %v2624 = vmul.f32 %v1892, %v2590
      %v2625 = vmul.f32 %v1893, %v2591
      %v2626 = vmul.f32 %v1894, %v2592
      %v2627 = vmul.f32 %v1895, %v2593
      %v2628 = vmul.f32 %v1896, %v2594
      %v2629 = vmul.f32 %v1897, %v2595
      %v2630 = vmul.f32 %v1898, %v2596
      %v2631 = vmul.f32 %v1899, %v2597
      %v2632 = vmul.f32 %v1900, %v2598
      %v2633 = vmul.f32 %v1901, %v2599
      %v2634 = vmul.f32 %v1902, %v2600
      %v2635 = vmul.f32 %v1903, %v2601
      %v2636 = vmul.f32 %v1904, %v2602
      %v2637 = vmul.f32 %v1905, %v2603
      %v2638 = vmul.f32 %v1906, %v2604
      %v2639 = vmul.f32 %v1907, %v2605
      %v2640 = vmul.f32 %v1908, %v2606
      %v2641 = vmul.f32 %v1909, %v2607
      %v2642 = vmul.f32 %v1910, %v2608
      %v2643 = vmul.f32 %v2307, %v2609
      %v2644 = vmul.f32 %v2308, %v2610
      %v2645 = vmul.f32 %v2613, %v2611
      %v2646 = vmul.f32 %v2614, %v2612
      %v2647 = vlaneseq
      %v2648 = vshrl.u32 %v2647, 7
      %v2649 = vsub.s32 6, %v2648
      %v2650 = vrot.slane %v1845, %v2649
      %v2651 = vmul.f32 %v2615, %v2650
      %v2652 = vmul.f32 %v2616, %v2650
      %v2653 = vmul.f32 %v2617, %v2650
      %v2654 = vmul.f32 %v2618, %v2650
      %v2655 = vmul.f32 %v2619, %v2650
      %v2656 = vmul.f32 %v2620, %v2650
      %v2657 = vmul.f32 %v2621, %v2650
      %v2658 = vmul.f32 %v2622, %v2650
      %v2659 = vmul.f32 %v2623, %v2650
      %v2660 = vmul.f32 %v2624, %v2650
      %v2661 = vmul.f32 %v2625, %v2650
      %v2662 = vmul.f32 %v2626, %v2650
      %v2663 = vmul.f32 %v2627, %v2650
      %v2664 = vmul.f32 %v2628, %v2650
      %v2665 = vmul.f32 %v2629, %v2650
      %v2666 = vmul.f32 %v2630, %v2650
      %v2667 = vmul.f32 %v2631, %v2650
      %v2668 = vmul.f32 %v2632, %v2650
      %v2669 = vmul.f32 %v2633, %v2650
      %v2670 = vmul.f32 %v2634, %v2650
      %v2671 = vmul.f32 %v2635, %v2650
      %v2672 = vmul.f32 %v2636, %v2650
      %v2673 = vmul.f32 %v2637, %v2650
      %v2674 = vmul.f32 %v2638, %v2650
      %v2675 = vmul.f32 %v2639, %v2650
      %v2676 = vmul.f32 %v2640, %v2650
      %v2677 = vmul.f32 %v2641, %v2650
      %v2678 = vmul.f32 %v2642, %v2650
      %v2679 = vmul.f32 %v2643, %v2650
      %v2680 = vmul.f32 %v2644, %v2650
      %v2681 = vmul.f32 %v2645, %v2650
      %v2682 = vmul.f32 %v2646, %v2650
      %v2683 = vadd.f32 %v2549, %v2651
      %v2684 = vadd.f32 %v2550, %v2652
      %v2685 = vadd.f32 %v2551, %v2653
      %v2686 = vadd.f32 %v2552, %v2654
      %v2687 = vadd.f32 %v2553, %v2655
      %v2688 = vadd.f32 %v2554, %v2656
      %v2689 = vadd.f32 %v2555, %v2657
      %v2690 = vadd.f32 %v2556, %v2658
      %v2691 = vadd.f32 %v2557, %v2659
      %v2692 = vadd.f32 %v2558, %v2660
      %v2693 = vadd.f32 %v2559, %v2661
      %v2694 = vadd.f32 %v2560, %v2662
      %v2695 = vadd.f32 %v2561, %v2663
      %v2696 = vadd.f32 %v2562, %v2664
      %v2697 = vadd.f32 %v2563, %v2665
      %v2698 = vadd.f32 %v2564, %v2666
      %v2699 = vadd.f32 %v2565, %v2667
      %v2700 = vadd.f32 %v2566, %v2668
      %v2701 = vadd.f32 %v2567, %v2669
      %v2702 = vadd.f32 %v2568, %v2670
      %v2703 = vadd.f32 %v2569, %v2671
      %v2704 = vadd.f32 %v2570, %v2672
      %v2705 = vadd.f32 %v2571, %v2673
      %v2706 = vadd.f32 %v2572, %v2674
      %v2707 = vadd.f32 %v2573, %v2675
      %v2708 = vadd.f32 %v2574, %v2676
      %v2709 = vadd.f32 %v2575, %v2677
      %v2710 = vadd.f32 %v2576, %v2678
      %v2711 = vadd.f32 %v2577, %v2679
      %v2712 = vadd.f32 %v2578, %v2680
      %v2713 = vadd.f32 %v2579, %v2681
      %v2714 = vadd.f32 %v2580, %v2682
      %v2715 = vld [vmem:[#allocation2 + $0x111] sm:$0xff]
      %v2716 = vld [vmem:[#allocation2 + $0x119] sm:$0xff]
      %v2717 = vmul.f32 %v2015, %v1621
      %v2718 = vmul.f32 %v2016, %v1622
      %v2719 = vmul.f32 %v2017, %v1623
      %v2720 = vmul.f32 %v2018, %v1624
      %v2721 = vmul.f32 %v2019, %v1625
      %v2722 = vmul.f32 %v2020, %v1626
      %v2723 = vmul.f32 %v2021, %v1627
      %v2724 = vmul.f32 %v2022, %v1628
      %v2725 = vmul.f32 %v2023, %v1629
      %v2726 = vmul.f32 %v2024, %v1630
      %v2727 = vmul.f32 %v2025, %v1631
      %v2728 = vmul.f32 %v2026, %v1632
      %v2729 = vmul.f32 %v2027, %v1633
      %v2730 = vmul.f32 %v2028, %v1634
      %v2731 = vmul.f32 %v2029, %v1635
      %v2732 = vmul.f32 %v2030, %v1636
      %v2733 = vmul.f32 %v2031, %v1637
      %v2734 = vmul.f32 %v2032, %v1638
      %v2735 = vmul.f32 %v2033, %v1639
      %v2736 = vmul.f32 %v2034, %v1640
      %v2737 = vmul.f32 %v2035, %v1641
      %v2738 = vmul.f32 %v2036, %v1642
      %v2739 = vmul.f32 %v2037, %v1643
      %v2740 = vmul.f32 %v2038, %v1644
      %v2741 = vmul.f32 %v2039, %v1645
      %v2742 = vmul.f32 %v2040, %v1646
      %v2743 = vmul.f32 %v2041, %v1647
      %v2744 = vmul.f32 %v2042, %v1648
      %v2745 = vmul.f32 %v2409, %v1649
      %v2746 = vmul.f32 %v2410, %v1650
      %v2747 = vmul.f32 %v2715, %v1651
      %v2748 = vmul.f32 %v2716, %v1652
      %v2749 = vlaneseq
      %v2750 = vshrl.u32 %v2749, 7
      %v2751 = vsub.s32 7, %v2750
      %v2752 = vrot.slane %v1845, %v2751
      %v2753 = vmul.f32 %v2717, %v2752
      %v2754 = vmul.f32 %v2718, %v2752
      %v2755 = vmul.f32 %v2719, %v2752
      %v2756 = vmul.f32 %v2720, %v2752
      %v2757 = vmul.f32 %v2721, %v2752
      %v2758 = vmul.f32 %v2722, %v2752
      %v2759 = vmul.f32 %v2723, %v2752
      %v2760 = vmul.f32 %v2724, %v2752
      %v2761 = vmul.f32 %v2725, %v2752
      %v2762 = vmul.f32 %v2726, %v2752
      %v2763 = vmul.f32 %v2727, %v2752
      %v2764 = vmul.f32 %v2728, %v2752
      %v2765 = vmul.f32 %v2729, %v2752
      %v2766 = vmul.f32 %v2730, %v2752
      %v2767 = vmul.f32 %v2731, %v2752
      %v2768 = vmul.f32 %v2732, %v2752
      %v2769 = vmul.f32 %v2733, %v2752
      %v2770 = vmul.f32 %v2734, %v2752
      %v2771 = vmul.f32 %v2735, %v2752
      %v2772 = vmul.f32 %v2736, %v2752
      %v2773 = vmul.f32 %v2737, %v2752
      %v2774 = vmul.f32 %v2738, %v2752
      %v2775 = vmul.f32 %v2739, %v2752
      %v2776 = vmul.f32 %v2740, %v2752
      %v2777 = vmul.f32 %v2741, %v2752
      %v2778 = vmul.f32 %v2742, %v2752
      %v2779 = vmul.f32 %v2743, %v2752
      %v2780 = vmul.f32 %v2744, %v2752
      %v2781 = vmul.f32 %v2745, %v2752
      %v2782 = vmul.f32 %v2746, %v2752
      %v2783 = vmul.f32 %v2747, %v2752
      %v2784 = vmul.f32 %v2748, %v2752
      %v2785 = vadd.f32 %v2683, %v2753
      %v2786 = vadd.f32 %v2684, %v2754
      %v2787 = vadd.f32 %v2685, %v2755
      %v2788 = vadd.f32 %v2686, %v2756
      %v2789 = vadd.f32 %v2687, %v2757
      %v2790 = vadd.f32 %v2688, %v2758
      %v2791 = vadd.f32 %v2689, %v2759
      %v2792 = vadd.f32 %v2690, %v2760
      %v2793 = vadd.f32 %v2691, %v2761
      %v2794 = vadd.f32 %v2692, %v2762
      %v2795 = vadd.f32 %v2693, %v2763
      %v2796 = vadd.f32 %v2694, %v2764
      %v2797 = vadd.f32 %v2695, %v2765
      %v2798 = vadd.f32 %v2696, %v2766
      %v2799 = vadd.f32 %v2697, %v2767
      %v2800 = vadd.f32 %v2698, %v2768
      %v2801 = vadd.f32 %v2699, %v2769
      %v2802 = vadd.f32 %v2700, %v2770
      %v2803 = vadd.f32 %v2701, %v2771
      %v2804 = vadd.f32 %v2702, %v2772
      %v2805 = vadd.f32 %v2703, %v2773
      %v2806 = vadd.f32 %v2704, %v2774
      %v2807 = vadd.f32 %v2705, %v2775
      %v2808 = vadd.f32 %v2706, %v2776
      %v2809 = vadd.f32 %v2707, %v2777
      %v2810 = vadd.f32 %v2708, %v2778
      %v2811 = vadd.f32 %v2709, %v2779
      %v2812 = vadd.f32 %v2710, %v2780
      %v2813 = vadd.f32 %v2711, %v2781
      %v2814 = vadd.f32 %v2712, %v2782
      %v2815 = vadd.f32 %v2713, %v2783
      %v2816 = vadd.f32 %v2714, %v2784
      %v2817 = vmul.f32 %v1621, %v1813
      %v2818 = vmul.f32 %v1622, %v1814
      %v2819 = vmul.f32 %v1623, %v1815
      %v2820 = vmul.f32 %v1624, %v1816
      %v2821 = vmul.f32 %v1625, %v1817
      %v2822 = vmul.f32 %v1626, %v1818
      %v2823 = vmul.f32 %v1627, %v1819
      %v2824 = vmul.f32 %v1628, %v1820
      %v2825 = vmul.f32 %v1629, %v1821
      %v2826 = vmul.f32 %v1630, %v1822
      %v2827 = vmul.f32 %v1631, %v1823
      %v2828 = vmul.f32 %v1632, %v1824
      %v2829 = vmul.f32 %v1633, %v1825
      %v2830 = vmul.f32 %v1634, %v1826
      %v2831 = vmul.f32 %v1635, %v1827
      %v2832 = vmul.f32 %v1636, %v1828
      %v2833 = vmul.f32 %v1637, %v1829
      %v2834 = vmul.f32 %v1638, %v1830
      %v2835 = vmul.f32 %v1639, %v1831
      %v2836 = vmul.f32 %v1640, %v1832
      %v2837 = vmul.f32 %v1641, %v1833
      %v2838 = vmul.f32 %v1642, %v1834
      %v2839 = vmul.f32 %v1643, %v1835
      %v2840 = vmul.f32 %v1644, %v1836
      %v2841 = vmul.f32 %v1645, %v1837
      %v2842 = vmul.f32 %v1646, %v1838
      %v2843 = vmul.f32 %v1647, %v1839
      %v2844 = vmul.f32 %v1648, %v1840
      %v2845 = vmul.f32 %v1649, %v1841
      %v2846 = vmul.f32 %v1650, %v1842
      %v2847 = vmul.f32 %v1651, %v1843
      %v2848 = vmul.f32 %v1652, %v1844
      %v2849 = vld [vmem:[#allocation2 + $0x112] sm:$0xff]
      %v2850 = vld [vmem:[#allocation2 + $0x11a] sm:$0xff]
      %v2851 = vmul.f32 %v2179, %v2817
      %v2852 = vmul.f32 %v2180, %v2818
      %v2853 = vmul.f32 %v2181, %v2819
      %v2854 = vmul.f32 %v2182, %v2820
      %v2855 = vmul.f32 %v2183, %v2821
      %v2856 = vmul.f32 %v2184, %v2822
      %v2857 = vmul.f32 %v2185, %v2823
      %v2858 = vmul.f32 %v2186, %v2824
      %v2859 = vmul.f32 %v2187, %v2825
      %v2860 = vmul.f32 %v2188, %v2826
      %v2861 = vmul.f32 %v2189, %v2827
      %v2862 = vmul.f32 %v2190, %v2828
      %v2863 = vmul.f32 %v2191, %v2829
      %v2864 = vmul.f32 %v2192, %v2830
      %v2865 = vmul.f32 %v2193, %v2831
      %v2866 = vmul.f32 %v2194, %v2832
      %v2867 = vmul.f32 %v2195, %v2833
      %v2868 = vmul.f32 %v2196, %v2834
      %v2869 = vmul.f32 %v2197, %v2835
      %v2870 = vmul.f32 %v2198, %v2836
      %v2871 = vmul.f32 %v2199, %v2837
      %v2872 = vmul.f32 %v2200, %v2838
      %v2873 = vmul.f32 %v2201, %v2839
      %v2874 = vmul.f32 %v2202, %v2840
      %v2875 = vmul.f32 %v2203, %v2841
      %v2876 = vmul.f32 %v2204, %v2842
      %v2877 = vmul.f32 %v2205, %v2843
      %v2878 = vmul.f32 %v2206, %v2844
      %v2879 = vmul.f32 %v2479, %v2845
      %v2880 = vmul.f32 %v2480, %v2846
      %v2881 = vmul.f32 %v2849, %v2847
      %v2882 = vmul.f32 %v2850, %v2848
      %v2883 = vlaneseq
      %v2884 = vshrl.u32 %v2883, 7
      %v2885 = vsub.s32 0, %v2884
      %v2886 = vrot.slane %v1846, %v2885
      %v2887 = vmul.f32 %v2851, %v2886
      %v2888 = vmul.f32 %v2852, %v2886
      %v2889 = vmul.f32 %v2853, %v2886
      %v2890 = vmul.f32 %v2854, %v2886
      %v2891 = vmul.f32 %v2855, %v2886
      %v2892 = vmul.f32 %v2856, %v2886
      %v2893 = vmul.f32 %v2857, %v2886
      %v2894 = vmul.f32 %v2858, %v2886
      %v2895 = vmul.f32 %v2859, %v2886
      %v2896 = vmul.f32 %v2860, %v2886
      %v2897 = vmul.f32 %v2861, %v2886
      %v2898 = vmul.f32 %v2862, %v2886
      %v2899 = vmul.f32 %v2863, %v2886
      %v2900 = vmul.f32 %v2864, %v2886
      %v2901 = vmul.f32 %v2865, %v2886
      %v2902 = vmul.f32 %v2866, %v2886
      %v2903 = vmul.f32 %v2867, %v2886
      %v2904 = vmul.f32 %v2868, %v2886
      %v2905 = vmul.f32 %v2869, %v2886
      %v2906 = vmul.f32 %v2870, %v2886
      %v2907 = vmul.f32 %v2871, %v2886
      %v2908 = vmul.f32 %v2872, %v2886
      %v2909 = vmul.f32 %v2873, %v2886
      %v2910 = vmul.f32 %v2874, %v2886
      %v2911 = vmul.f32 %v2875, %v2886
      %v2912 = vmul.f32 %v2876, %v2886
      %v2913 = vmul.f32 %v2877, %v2886
      %v2914 = vmul.f32 %v2878, %v2886
      %v2915 = vmul.f32 %v2879, %v2886
      %v2916 = vmul.f32 %v2880, %v2886
      %v2917 = vmul.f32 %v2881, %v2886
      %v2918 = vmul.f32 %v2882, %v2886
      %v2919 = vadd.f32 %v2785, %v2887
      %v2920 = vadd.f32 %v2786, %v2888
      %v2921 = vadd.f32 %v2787, %v2889
      %v2922 = vadd.f32 %v2788, %v2890
      %v2923 = vadd.f32 %v2789, %v2891
      %v2924 = vadd.f32 %v2790, %v2892
      %v2925 = vadd.f32 %v2791, %v2893
      %v2926 = vadd.f32 %v2792, %v2894
      %v2927 = vadd.f32 %v2793, %v2895
      %v2928 = vadd.f32 %v2794, %v2896
      %v2929 = vadd.f32 %v2795, %v2897
      %v2930 = vadd.f32 %v2796, %v2898
      %v2931 = vadd.f32 %v2797, %v2899
      %v2932 = vadd.f32 %v2798, %v2900
      %v2933 = vadd.f32 %v2799, %v2901
      %v2934 = vadd.f32 %v2800, %v2902
      %v2935 = vadd.f32 %v2801, %v2903
      %v2936 = vadd.f32 %v2802, %v2904
      %v2937 = vadd.f32 %v2803, %v2905
      %v2938 = vadd.f32 %v2804, %v2906
      %v2939 = vadd.f32 %v2805, %v2907
      %v2940 = vadd.f32 %v2806, %v2908
      %v2941 = vadd.f32 %v2807, %v2909
      %v2942 = vadd.f32 %v2808, %v2910
      %v2943 = vadd.f32 %v2809, %v2911
      %v2944 = vadd.f32 %v2810, %v2912
      %v2945 = vadd.f32 %v2811, %v2913
      %v2946 = vadd.f32 %v2812, %v2914
      %v2947 = vadd.f32 %v2813, %v2915
      %v2948 = vadd.f32 %v2814, %v2916
      %v2949 = vadd.f32 %v2815, %v2917
      %v2950 = vadd.f32 %v2816, %v2918
      %v2951 = vld [vmem:[%s6] sm:$0x1]
      %v2953 = vlaneseq
      %v2954 = vshrl.u32 %v2953, 7
      %v2955 = vsub.s32 0, %v2954
      %v2956 = vrot.slane %v2951, %v2955
      %v2958 = vadd.f32 %v2919, %v2956
      %v2959 = vadd.f32 %v2920, %v2956
      %v2960 = vadd.f32 %v2921, %v2956
      %v2961 = vadd.f32 %v2922, %v2956
      %v2962 = vadd.f32 %v2923, %v2956
      %v2963 = vadd.f32 %v2924, %v2956
      %v2964 = vadd.f32 %v2925, %v2956
      %v2965 = vadd.f32 %v2926, %v2956
      %v2966 = vadd.f32 %v2927, %v2956
      %v2967 = vadd.f32 %v2928, %v2956
      %v2968 = vadd.f32 %v2929, %v2956
      %v2969 = vadd.f32 %v2930, %v2956
      %v2970 = vadd.f32 %v2931, %v2956
      %v2971 = vadd.f32 %v2932, %v2956
      %v2972 = vadd.f32 %v2933, %v2956
      %v2973 = vadd.f32 %v2934, %v2956
      %v2974 = vadd.f32 %v2935, %v2956
      %v2975 = vadd.f32 %v2936, %v2956
      %v2976 = vadd.f32 %v2937, %v2956
      %v2977 = vadd.f32 %v2938, %v2956
      %v2978 = vadd.f32 %v2939, %v2956
      %v2979 = vadd.f32 %v2940, %v2956
      %v2980 = vadd.f32 %v2941, %v2956
      %v2981 = vadd.f32 %v2942, %v2956
      %v2982 = vadd.f32 %v2943, %v2956
      %v2983 = vadd.f32 %v2944, %v2956
      %v2984 = vadd.f32 %v2945, %v2956
      %v2985 = vadd.f32 %v2946, %v2956
      %v2986 = vadd.f32 %v2947, %v2956
      %v2987 = vadd.f32 %v2948, %v2956
      %v2988 = vadd.f32 %v2949, %v2956
      %v2989 = vadd.f32 %v2950, %v2956
      %3022 = vrot.lane.b32.xlu0 %v2958, 124
      %v3023 = vpop.permute.xlu0 %3022
      %3024 = vrot.lane.b32.xlu0 %v2959, 124
      %v3025 = vpop.permute.xlu0 %3024
      %3026 = vrot.lane.b32.xlu0 %v2960, 124
      %v3027 = vpop.permute.xlu0 %3026
      %3028 = vrot.lane.b32.xlu0 %v2961, 124
      %v3029 = vpop.permute.xlu0 %3028
      %3030 = vrot.lane.b32.xlu0 %v2962, 124
      %v3031 = vpop.permute.xlu0 %3030
      %3032 = vrot.lane.b32.xlu0 %v2963, 124
      %v3033 = vpop.permute.xlu0 %3032
      %3034 = vrot.lane.b32.xlu0 %v2964, 124
      %v3035 = vpop.permute.xlu0 %3034
      %3036 = vrot.lane.b32.xlu0 %v2965, 124
      %v3037 = vpop.permute.xlu0 %3036
      %3038 = vrot.lane.b32.xlu0 %v2966, 124
      %v3039 = vpop.permute.xlu0 %3038
      %3040 = vrot.lane.b32.xlu0 %v2967, 124
      %v3041 = vpop.permute.xlu0 %3040
      %3042 = vrot.lane.b32.xlu0 %v2968, 124
      %v3043 = vpop.permute.xlu0 %3042
      %3044 = vrot.lane.b32.xlu0 %v2969, 124
      %v3045 = vpop.permute.xlu0 %3044
      %3046 = vrot.lane.b32.xlu0 %v2970, 124
      %v3047 = vpop.permute.xlu0 %3046
      %3048 = vrot.lane.b32.xlu0 %v2971, 124
      %v3049 = vpop.permute.xlu0 %3048
      %3050 = vrot.lane.b32.xlu0 %v2972, 124
      %v3051 = vpop.permute.xlu0 %3050
      %3052 = vrot.lane.b32.xlu0 %v2973, 124
      %v3053 = vpop.permute.xlu0 %3052
      %3054 = vrot.lane.b32.xlu0 %v2974, 124
      %v3055 = vpop.permute.xlu0 %3054
      %3056 = vrot.lane.b32.xlu0 %v2975, 124
      %v3057 = vpop.permute.xlu0 %3056
      %3058 = vrot.lane.b32.xlu0 %v2976, 124
      %v3059 = vpop.permute.xlu0 %3058
      %3060 = vrot.lane.b32.xlu0 %v2977, 124
      %v3061 = vpop.permute.xlu0 %3060
      %3062 = vrot.lane.b32.xlu0 %v2978, 124
      %v3063 = vpop.permute.xlu0 %3062
      %3064 = vrot.lane.b32.xlu0 %v2979, 124
      %v3065 = vpop.permute.xlu0 %3064
      %3066 = vrot.lane.b32.xlu0 %v2980, 124
      %v3067 = vpop.permute.xlu0 %3066
      %3068 = vrot.lane.b32.xlu0 %v2981, 124
      %v3069 = vpop.permute.xlu0 %3068
      %3070 = vrot.lane.b32.xlu0 %v2982, 124
      %v3071 = vpop.permute.xlu0 %3070
      %3072 = vrot.lane.b32.xlu0 %v2983, 124
      %v3073 = vpop.permute.xlu0 %3072
      %3074 = vrot.lane.b32.xlu0 %v2984, 124
      %v3075 = vpop.permute.xlu0 %3074
      %3076 = vrot.lane.b32.xlu0 %v2985, 124
      %v3077 = vpop.permute.xlu0 %3076
      %3078 = vrot.lane.b32.xlu0 %v2986, 124
      %v3079 = vpop.permute.xlu0 %3078
      %3080 = vrot.lane.b32.xlu0 %v2987, 124
      %v3081 = vpop.permute.xlu0 %3080
      %3082 = vrot.lane.b32.xlu0 %v2988, 124
      %v3083 = vpop.permute.xlu0 %3082
      %3084 = vrot.lane.b32.xlu0 %v2989, 124
      %v3085 = vpop.permute.xlu0 %3084
      %v3118 = vmul.f32 %v2958, %v3023
      %v3119 = vmul.f32 %v2959, %v3025
      %v3120 = vmul.f32 %v2960, %v3027
      %v3121 = vmul.f32 %v2961, %v3029
      %v3122 = vmul.f32 %v2962, %v3031
      %v3123 = vmul.f32 %v2963, %v3033
      %v3124 = vmul.f32 %v2964, %v3035
      %v3125 = vmul.f32 %v2965, %v3037
      %v3126 = vmul.f32 %v2966, %v3039
      %v3127 = vmul.f32 %v2967, %v3041
      %v3128 = vmul.f32 %v2968, %v3043
      %v3129 = vmul.f32 %v2969, %v3045
      %v3130 = vmul.f32 %v2970, %v3047
      %v3131 = vmul.f32 %v2971, %v3049
      %v3132 = vmul.f32 %v2972, %v3051
      %v3133 = vmul.f32 %v2973, %v3053
      %v3134 = vmul.f32 %v2974, %v3055
      %v3135 = vmul.f32 %v2975, %v3057
      %v3136 = vmul.f32 %v2976, %v3059
      %v3137 = vmul.f32 %v2977, %v3061
      %v3138 = vmul.f32 %v2978, %v3063
      %v3139 = vmul.f32 %v2979, %v3065
      %v3140 = vmul.f32 %v2980, %v3067
      %v3141 = vmul.f32 %v2981, %v3069
      %v3142 = vmul.f32 %v2982, %v3071
      %v3143 = vmul.f32 %v2983, %v3073
      %v3144 = vmul.f32 %v2984, %v3075
      %v3145 = vmul.f32 %v2985, %v3077
      %v3146 = vmul.f32 %v2986, %v3079
      %v3147 = vmul.f32 %v2987, %v3081
      %v3148 = vmul.f32 %v2988, %v3083
      %v3149 = vmul.f32 %v2989, %v3085
      %v3150 = vld [vmem:[%s7] sm:$0x1]
      %v3152 = vlaneseq
      %v3153 = vshrl.u32 %v3152, 7
      %v3154 = vsub.s32 0, %v3153
      %v3155 = vrot.slane %v3150, %v3154
      %v3157 = vmul.f32 %v3118, %v3155
      %v3158 = vmul.f32 %v3119, %v3155
      %v3159 = vmul.f32 %v3120, %v3155
      %v3160 = vmul.f32 %v3121, %v3155
      %v3161 = vmul.f32 %v3122, %v3155
      %v3162 = vmul.f32 %v3123, %v3155
      %v3163 = vmul.f32 %v3124, %v3155
      %v3164 = vmul.f32 %v3125, %v3155
      %v3165 = vmul.f32 %v3126, %v3155
      %v3166 = vmul.f32 %v3127, %v3155
      %v3167 = vmul.f32 %v3128, %v3155
      %v3168 = vmul.f32 %v3129, %v3155
      %v3169 = vmul.f32 %v3130, %v3155
      %v3170 = vmul.f32 %v3131, %v3155
      %v3171 = vmul.f32 %v3132, %v3155
      %v3172 = vmul.f32 %v3133, %v3155
      %v3173 = vmul.f32 %v3134, %v3155
      %v3174 = vmul.f32 %v3135, %v3155
      %v3175 = vmul.f32 %v3136, %v3155
      %v3176 = vmul.f32 %v3137, %v3155
      %v3177 = vmul.f32 %v3138, %v3155
      %v3178 = vmul.f32 %v3139, %v3155
      %v3179 = vmul.f32 %v3140, %v3155
      %v3180 = vmul.f32 %v3141, %v3155
      %v3181 = vmul.f32 %v3142, %v3155
      %v3182 = vmul.f32 %v3143, %v3155
      %v3183 = vmul.f32 %v3144, %v3155
      %v3184 = vmul.f32 %v3145, %v3155
      %v3185 = vmul.f32 %v3146, %v3155
      %v3186 = vmul.f32 %v3147, %v3155
      %v3187 = vmul.f32 %v3148, %v3155
      %v3188 = vmul.f32 %v3149, %v3155
      %v3189 = vadd.f32 %v495, %v3157
      %v3190 = vadd.f32 %v496, %v3158
      %v3191 = vadd.f32 %v497, %v3159
      %v3192 = vadd.f32 %v498, %v3160
      %v3193 = vadd.f32 %v499, %v3161
      %v3194 = vadd.f32 %v500, %v3162
      %v3195 = vadd.f32 %v501, %v3163
      %v3196 = vadd.f32 %v502, %v3164
      %v3197 = vadd.f32 %v503, %v3165
      %v3198 = vadd.f32 %v504, %v3166
      %v3199 = vadd.f32 %v505, %v3167
      %v3200 = vadd.f32 %v506, %v3168
      %v3201 = vadd.f32 %v507, %v3169
      %v3202 = vadd.f32 %v508, %v3170
      %v3203 = vadd.f32 %v509, %v3171
      %v3204 = vadd.f32 %v510, %v3172
      %v3205 = vadd.f32 %v511, %v3173
      %v3206 = vadd.f32 %v512, %v3174
      %v3207 = vadd.f32 %v513, %v3175
      %v3208 = vadd.f32 %v514, %v3176
      %v3209 = vadd.f32 %v515, %v3177
      %v3210 = vadd.f32 %v516, %v3178
      %v3211 = vadd.f32 %v517, %v3179
      %v3212 = vadd.f32 %v518, %v3180
      %v3213 = vadd.f32 %v519, %v3181
      %v3214 = vadd.f32 %v520, %v3182
      %v3215 = vadd.f32 %v521, %v3183
      %v3216 = vadd.f32 %v522, %v3184
      %v3217 = vadd.f32 %v523, %v3185
      %v3218 = vadd.f32 %v524, %v3186
      %v3219 = vadd.f32 %v525, %v3187
      %v3220 = vadd.f32 %v526, %v3188
      %v3221 = vsel %vm527, %v3189, 0.0
      %3222 = vadd.xlane.f32.xlu0 %v3221
      %v3223 = vpop.xlane.xlu0 %3222
      %v3224 = vsel %vm527, %v3190, 0.0
      %3225 = vadd.xlane.f32.xlu0 %v3224
      %v3226 = vpop.xlane.xlu0 %3225
      %v3227 = vsel %vm527, %v3191, 0.0
      %3228 = vadd.xlane.f32.xlu0 %v3227
      %v3229 = vpop.xlane.xlu0 %3228
      %v3230 = vsel %vm527, %v3192, 0.0
      %3231 = vadd.xlane.f32.xlu0 %v3230
      %v3232 = vpop.xlane.xlu0 %3231
      %v3233 = vsel %vm527, %v3193, 0.0
      %3234 = vadd.xlane.f32.xlu0 %v3233
      %v3235 = vpop.xlane.xlu0 %3234
      %v3236 = vsel %vm527, %v3194, 0.0
      %3237 = vadd.xlane.f32.xlu0 %v3236
      %v3238 = vpop.xlane.xlu0 %3237
      %v3239 = vsel %vm527, %v3195, 0.0
      %3240 = vadd.xlane.f32.xlu0 %v3239
      %v3241 = vpop.xlane.xlu0 %3240
      %v3242 = vsel %vm527, %v3196, 0.0
      %3243 = vadd.xlane.f32.xlu0 %v3242
      %v3244 = vpop.xlane.xlu0 %3243
      %v3245 = vsel %vm527, %v3197, 0.0
      %3246 = vadd.xlane.f32.xlu0 %v3245
      %v3247 = vpop.xlane.xlu0 %3246
      %v3248 = vsel %vm527, %v3198, 0.0
      %3249 = vadd.xlane.f32.xlu0 %v3248
      %v3250 = vpop.xlane.xlu0 %3249
      %v3251 = vsel %vm527, %v3199, 0.0
      %3252 = vadd.xlane.f32.xlu0 %v3251
      %v3253 = vpop.xlane.xlu0 %3252
      %v3254 = vsel %vm527, %v3200, 0.0
      %3255 = vadd.xlane.f32.xlu0 %v3254
      %v3256 = vpop.xlane.xlu0 %3255
      %v3257 = vsel %vm527, %v3201, 0.0
      %3258 = vadd.xlane.f32.xlu0 %v3257
      %v3259 = vpop.xlane.xlu0 %3258
      %v3260 = vsel %vm527, %v3202, 0.0
      %3261 = vadd.xlane.f32.xlu0 %v3260
      %v3262 = vpop.xlane.xlu0 %3261
      %v3263 = vsel %vm527, %v3203, 0.0
      %3264 = vadd.xlane.f32.xlu0 %v3263
      %v3265 = vpop.xlane.xlu0 %3264
      %v3266 = vsel %vm527, %v3204, 0.0
      %3267 = vadd.xlane.f32.xlu0 %v3266
      %v3268 = vpop.xlane.xlu0 %3267
      %v3269 = vsel %vm527, %v3205, 0.0
      %3270 = vadd.xlane.f32.xlu0 %v3269
      %v3271 = vpop.xlane.xlu0 %3270
      %v3272 = vsel %vm527, %v3206, 0.0
      %3273 = vadd.xlane.f32.xlu0 %v3272
      %v3274 = vpop.xlane.xlu0 %3273
      %v3275 = vsel %vm527, %v3207, 0.0
      %3276 = vadd.xlane.f32.xlu0 %v3275
      %v3277 = vpop.xlane.xlu0 %3276
      %v3278 = vsel %vm527, %v3208, 0.0
      %3279 = vadd.xlane.f32.xlu0 %v3278
      %v3280 = vpop.xlane.xlu0 %3279
      %v3281 = vsel %vm527, %v3209, 0.0
      %3282 = vadd.xlane.f32.xlu0 %v3281
      %v3283 = vpop.xlane.xlu0 %3282
      %v3284 = vsel %vm527, %v3210, 0.0
      %3285 = vadd.xlane.f32.xlu0 %v3284
      %v3286 = vpop.xlane.xlu0 %3285
      %v3287 = vsel %vm527, %v3211, 0.0
      %3288 = vadd.xlane.f32.xlu0 %v3287
      %v3289 = vpop.xlane.xlu0 %3288
      %v3290 = vsel %vm527, %v3212, 0.0
      %3291 = vadd.xlane.f32.xlu0 %v3290
      %v3292 = vpop.xlane.xlu0 %3291
      %v3293 = vsel %vm527, %v3213, 0.0
      %3294 = vadd.xlane.f32.xlu0 %v3293
      %v3295 = vpop.xlane.xlu0 %3294
      %v3296 = vsel %vm527, %v3214, 0.0
      %3297 = vadd.xlane.f32.xlu0 %v3296
      %v3298 = vpop.xlane.xlu0 %3297
      %v3299 = vsel %vm527, %v3215, 0.0
      %3300 = vadd.xlane.f32.xlu0 %v3299
      %v3301 = vpop.xlane.xlu0 %3300
      %v3302 = vsel %vm527, %v3216, 0.0
      %3303 = vadd.xlane.f32.xlu0 %v3302
      %v3304 = vpop.xlane.xlu0 %3303
      %v3305 = vsel %vm527, %v3217, 0.0
      %3306 = vadd.xlane.f32.xlu0 %v3305
      %v3307 = vpop.xlane.xlu0 %3306
      %v3308 = vsel %vm527, %v3218, 0.0
      %3309 = vadd.xlane.f32.xlu0 %v3308
      %v3310 = vpop.xlane.xlu0 %3309
      %v3311 = vsel %vm527, %v3219, 0.0
      %3312 = vadd.xlane.f32.xlu0 %v3311
      %v3313 = vpop.xlane.xlu0 %3312
      %v3314 = vsel %vm527, %v3220, 0.0
      %3315 = vadd.xlane.f32.xlu0 %v3314
      %v3316 = vpop.xlane.xlu0 %3315
      %v3317 = vmul.f32 %v3223, %v624
      %v3318 = vmul.f32 %v3226, %v624
      %v3319 = vmul.f32 %v3229, %v624
      %v3320 = vmul.f32 %v3232, %v624
      %v3321 = vmul.f32 %v3235, %v624
      %v3322 = vmul.f32 %v3238, %v624
      %v3323 = vmul.f32 %v3241, %v624
      %v3324 = vmul.f32 %v3244, %v624
      %v3325 = vmul.f32 %v3247, %v624
      %v3326 = vmul.f32 %v3250, %v624
      %v3327 = vmul.f32 %v3253, %v624
      %v3328 = vmul.f32 %v3256, %v624
      %v3329 = vmul.f32 %v3259, %v624
      %v3330 = vmul.f32 %v3262, %v624
      %v3331 = vmul.f32 %v3265, %v624
      %v3332 = vmul.f32 %v3268, %v624
      %v3333 = vmul.f32 %v3271, %v624
      %v3334 = vmul.f32 %v3274, %v624
      %v3335 = vmul.f32 %v3277, %v624
      %v3336 = vmul.f32 %v3280, %v624
      %v3337 = vmul.f32 %v3283, %v624
      %v3338 = vmul.f32 %v3286, %v624
      %v3339 = vmul.f32 %v3289, %v624
      %v3340 = vmul.f32 %v3292, %v624
      %v3341 = vmul.f32 %v3295, %v624
      %v3342 = vmul.f32 %v3298, %v624
      %v3343 = vmul.f32 %v3301, %v624
      %v3344 = vmul.f32 %v3304, %v624
      %v3345 = vmul.f32 %v3307, %v624
      %v3346 = vmul.f32 %v3310, %v624
      %v3347 = vmul.f32 %v3313, %v624
      %v3348 = vmul.f32 %v3316, %v624
      %v3349 = vsub.f32 %v3189, %v3317
      %v3350 = vsub.f32 %v3190, %v3318
      %v3351 = vsub.f32 %v3191, %v3319
      %v3352 = vsub.f32 %v3192, %v3320
      %v3353 = vsub.f32 %v3193, %v3321
      %v3354 = vsub.f32 %v3194, %v3322
      %v3355 = vsub.f32 %v3195, %v3323
      %v3356 = vsub.f32 %v3196, %v3324
      %v3357 = vsub.f32 %v3197, %v3325
      %v3358 = vsub.f32 %v3198, %v3326
      %v3359 = vsub.f32 %v3199, %v3327
      %v3360 = vsub.f32 %v3200, %v3328
      %v3361 = vsub.f32 %v3201, %v3329
      %v3362 = vsub.f32 %v3202, %v3330
      %v3363 = vsub.f32 %v3203, %v3331
      %v3364 = vsub.f32 %v3204, %v3332
      %v3365 = vsub.f32 %v3205, %v3333
      %v3366 = vsub.f32 %v3206, %v3334
      %v3367 = vsub.f32 %v3207, %v3335
      %v3368 = vsub.f32 %v3208, %v3336
      %v3369 = vsub.f32 %v3209, %v3337
      %v3370 = vsub.f32 %v3210, %v3338
      %v3371 = vsub.f32 %v3211, %v3339
      %v3372 = vsub.f32 %v3212, %v3340
      %v3373 = vsub.f32 %v3213, %v3341
      %v3374 = vsub.f32 %v3214, %v3342
      %v3375 = vsub.f32 %v3215, %v3343
      %v3376 = vsub.f32 %v3216, %v3344
      %v3377 = vsub.f32 %v3217, %v3345
      %v3378 = vsub.f32 %v3218, %v3346
      %v3379 = vsub.f32 %v3219, %v3347
      %v3380 = vsub.f32 %v3220, %v3348
      %v3381 = vmul.f32 %v3349, %v3349
      %v3382 = vmul.f32 %v3350, %v3350
      %v3383 = vmul.f32 %v3351, %v3351
      %v3384 = vmul.f32 %v3352, %v3352
      %v3385 = vmul.f32 %v3353, %v3353
      %v3386 = vmul.f32 %v3354, %v3354
      %v3387 = vmul.f32 %v3355, %v3355
      %v3388 = vmul.f32 %v3356, %v3356
      %v3389 = vmul.f32 %v3357, %v3357
      %v3390 = vmul.f32 %v3358, %v3358
      %v3391 = vmul.f32 %v3359, %v3359
      %v3392 = vmul.f32 %v3360, %v3360
      %v3393 = vmul.f32 %v3361, %v3361
      %v3394 = vmul.f32 %v3362, %v3362
      %v3395 = vmul.f32 %v3363, %v3363
      %v3396 = vmul.f32 %v3364, %v3364
      %v3397 = vmul.f32 %v3365, %v3365
      %v3398 = vmul.f32 %v3366, %v3366
      %v3399 = vmul.f32 %v3367, %v3367
      %v3400 = vmul.f32 %v3368, %v3368
      %v3401 = vmul.f32 %v3369, %v3369
      %v3402 = vmul.f32 %v3370, %v3370
      %v3403 = vmul.f32 %v3371, %v3371
      %v3404 = vmul.f32 %v3372, %v3372
      %v3405 = vmul.f32 %v3373, %v3373
      %v3406 = vmul.f32 %v3374, %v3374
      %v3407 = vmul.f32 %v3375, %v3375
      %v3408 = vmul.f32 %v3376, %v3376
      %v3409 = vmul.f32 %v3377, %v3377
      %v3410 = vmul.f32 %v3378, %v3378
      %v3411 = vmul.f32 %v3379, %v3379
      %v3412 = vmul.f32 %v3380, %v3380
      %v3413 = vsel %vm527, %v3381, 0.0
      %3414 = vadd.xlane.f32.xlu0 %v3413
      %v3415 = vpop.xlane.xlu0 %3414
      %v3416 = vsel %vm527, %v3382, 0.0
      %3417 = vadd.xlane.f32.xlu0 %v3416
      %v3418 = vpop.xlane.xlu0 %3417
      %v3419 = vsel %vm527, %v3383, 0.0
      %3420 = vadd.xlane.f32.xlu0 %v3419
      %v3421 = vpop.xlane.xlu0 %3420
      %v3422 = vsel %vm527, %v3384, 0.0
      %3423 = vadd.xlane.f32.xlu0 %v3422
      %v3424 = vpop.xlane.xlu0 %3423
      %v3425 = vsel %vm527, %v3385, 0.0
      %3426 = vadd.xlane.f32.xlu0 %v3425
      %v3427 = vpop.xlane.xlu0 %3426
      %v3428 = vsel %vm527, %v3386, 0.0
      %3429 = vadd.xlane.f32.xlu0 %v3428
      %v3430 = vpop.xlane.xlu0 %3429
      %v3431 = vsel %vm527, %v3387, 0.0
      %3432 = vadd.xlane.f32.xlu0 %v3431
      %v3433 = vpop.xlane.xlu0 %3432
      %v3434 = vsel %vm527, %v3388, 0.0
      %3435 = vadd.xlane.f32.xlu0 %v3434
      %v3436 = vpop.xlane.xlu0 %3435
      %v3437 = vsel %vm527, %v3389, 0.0
      %3438 = vadd.xlane.f32.xlu0 %v3437
      %v3439 = vpop.xlane.xlu0 %3438
      %v3440 = vsel %vm527, %v3390, 0.0
      %3441 = vadd.xlane.f32.xlu0 %v3440
      %v3442 = vpop.xlane.xlu0 %3441
      %v3443 = vsel %vm527, %v3391, 0.0
      %3444 = vadd.xlane.f32.xlu0 %v3443
      %v3445 = vpop.xlane.xlu0 %3444
      %v3446 = vsel %vm527, %v3392, 0.0
      %3447 = vadd.xlane.f32.xlu0 %v3446
      %v3448 = vpop.xlane.xlu0 %3447
      %v3449 = vsel %vm527, %v3393, 0.0
      %3450 = vadd.xlane.f32.xlu0 %v3449
      %v3451 = vpop.xlane.xlu0 %3450
      %v3452 = vsel %vm527, %v3394, 0.0
      %3453 = vadd.xlane.f32.xlu0 %v3452
      %v3454 = vpop.xlane.xlu0 %3453
      %v3455 = vsel %vm527, %v3395, 0.0
      %3456 = vadd.xlane.f32.xlu0 %v3455
      %v3457 = vpop.xlane.xlu0 %3456
      %v3458 = vsel %vm527, %v3396, 0.0
      %3459 = vadd.xlane.f32.xlu0 %v3458
      %v3460 = vpop.xlane.xlu0 %3459
      %v3461 = vsel %vm527, %v3397, 0.0
      %3462 = vadd.xlane.f32.xlu0 %v3461
      %v3463 = vpop.xlane.xlu0 %3462
      %v3464 = vsel %vm527, %v3398, 0.0
      %3465 = vadd.xlane.f32.xlu0 %v3464
      %v3466 = vpop.xlane.xlu0 %3465
      %v3467 = vsel %vm527, %v3399, 0.0
      %3468 = vadd.xlane.f32.xlu0 %v3467
      %v3469 = vpop.xlane.xlu0 %3468
      %v3470 = vsel %vm527, %v3400, 0.0
      %3471 = vadd.xlane.f32.xlu0 %v3470
      %v3472 = vpop.xlane.xlu0 %3471
      %v3473 = vsel %vm527, %v3401, 0.0
      %3474 = vadd.xlane.f32.xlu0 %v3473
      %v3475 = vpop.xlane.xlu0 %3474
      %v3476 = vsel %vm527, %v3402, 0.0
      %3477 = vadd.xlane.f32.xlu0 %v3476
      %v3478 = vpop.xlane.xlu0 %3477
      %v3479 = vsel %vm527, %v3403, 0.0
      %3480 = vadd.xlane.f32.xlu0 %v3479
      %v3481 = vpop.xlane.xlu0 %3480
      %v3482 = vsel %vm527, %v3404, 0.0
      %3483 = vadd.xlane.f32.xlu0 %v3482
      %v3484 = vpop.xlane.xlu0 %3483
      %v3485 = vsel %vm527, %v3405, 0.0
      %3486 = vadd.xlane.f32.xlu0 %v3485
      %v3487 = vpop.xlane.xlu0 %3486
      %v3488 = vsel %vm527, %v3406, 0.0
      %3489 = vadd.xlane.f32.xlu0 %v3488
      %v3490 = vpop.xlane.xlu0 %3489
      %v3491 = vsel %vm527, %v3407, 0.0
      %3492 = vadd.xlane.f32.xlu0 %v3491
      %v3493 = vpop.xlane.xlu0 %3492
      %v3494 = vsel %vm527, %v3408, 0.0
      %3495 = vadd.xlane.f32.xlu0 %v3494
      %v3496 = vpop.xlane.xlu0 %3495
      %v3497 = vsel %vm527, %v3409, 0.0
      %3498 = vadd.xlane.f32.xlu0 %v3497
      %v3499 = vpop.xlane.xlu0 %3498
      %v3500 = vsel %vm527, %v3410, 0.0
      %3501 = vadd.xlane.f32.xlu0 %v3500
      %v3502 = vpop.xlane.xlu0 %3501
      %v3503 = vsel %vm527, %v3411, 0.0
      %3504 = vadd.xlane.f32.xlu0 %v3503
      %v3505 = vpop.xlane.xlu0 %3504
      %v3506 = vsel %vm527, %v3412, 0.0
      %3507 = vadd.xlane.f32.xlu0 %v3506
      %v3508 = vpop.xlane.xlu0 %3507
      %v3509 = vmul.f32 %v3415, %v624
      %v3510 = vmul.f32 %v3418, %v624
      %v3511 = vmul.f32 %v3421, %v624
      %v3512 = vmul.f32 %v3424, %v624
      %v3513 = vmul.f32 %v3427, %v624
      %v3514 = vmul.f32 %v3430, %v624
      %v3515 = vmul.f32 %v3433, %v624
      %v3516 = vmul.f32 %v3436, %v624
      %v3517 = vmul.f32 %v3439, %v624
      %v3518 = vmul.f32 %v3442, %v624
      %v3519 = vmul.f32 %v3445, %v624
      %v3520 = vmul.f32 %v3448, %v624
      %v3521 = vmul.f32 %v3451, %v624
      %v3522 = vmul.f32 %v3454, %v624
      %v3523 = vmul.f32 %v3457, %v624
      %v3524 = vmul.f32 %v3460, %v624
      %v3525 = vmul.f32 %v3463, %v624
      %v3526 = vmul.f32 %v3466, %v624
      %v3527 = vmul.f32 %v3469, %v624
      %v3528 = vmul.f32 %v3472, %v624
      %v3529 = vmul.f32 %v3475, %v624
      %v3530 = vmul.f32 %v3478, %v624
      %v3531 = vmul.f32 %v3481, %v624
      %v3532 = vmul.f32 %v3484, %v624
      %v3533 = vmul.f32 %v3487, %v624
      %v3534 = vmul.f32 %v3490, %v624
      %v3535 = vmul.f32 %v3493, %v624
      %v3536 = vmul.f32 %v3496, %v624
      %v3537 = vmul.f32 %v3499, %v624
      %v3538 = vmul.f32 %v3502, %v624
      %v3539 = vmul.f32 %v3505, %v624
      %v3540 = vmul.f32 %v3508, %v624
      %v3541 = vadd.f32 %v3509, 1e-06
      %v3542 = vadd.f32 %v3510, 1e-06
      %v3543 = vadd.f32 %v3511, 1e-06
      %v3544 = vadd.f32 %v3512, 1e-06
      %v3545 = vadd.f32 %v3513, 1e-06
      %v3546 = vadd.f32 %v3514, 1e-06
      %v3547 = vadd.f32 %v3515, 1e-06
      %v3548 = vadd.f32 %v3516, 1e-06
      %v3549 = vadd.f32 %v3517, 1e-06
      %v3550 = vadd.f32 %v3518, 1e-06
      %v3551 = vadd.f32 %v3519, 1e-06
      %v3552 = vadd.f32 %v3520, 1e-06
      %v3553 = vadd.f32 %v3521, 1e-06
      %v3554 = vadd.f32 %v3522, 1e-06
      %v3555 = vadd.f32 %v3523, 1e-06
      %v3556 = vadd.f32 %v3524, 1e-06
      %v3557 = vadd.f32 %v3525, 1e-06
      %v3558 = vadd.f32 %v3526, 1e-06
      %v3559 = vadd.f32 %v3527, 1e-06
      %v3560 = vadd.f32 %v3528, 1e-06
      %v3561 = vadd.f32 %v3529, 1e-06
      %v3562 = vadd.f32 %v3530, 1e-06
      %v3563 = vadd.f32 %v3531, 1e-06
      %v3564 = vadd.f32 %v3532, 1e-06
      %v3565 = vadd.f32 %v3533, 1e-06
      %v3566 = vadd.f32 %v3534, 1e-06
      %v3567 = vadd.f32 %v3535, 1e-06
      %v3568 = vadd.f32 %v3536, 1e-06
      %v3569 = vadd.f32 %v3537, 1e-06
      %v3570 = vadd.f32 %v3538, 1e-06
      %v3571 = vadd.f32 %v3539, 1e-06
      %v3572 = vadd.f32 %v3540, 1e-06
      %v3573 = vrsqrt.pop %v3541
      %v3574 = vrsqrt.pop %v3542
      %v3575 = vrsqrt.pop %v3543
      %v3576 = vrsqrt.pop %v3544
      %v3577 = vrsqrt.pop %v3545
      %v3578 = vrsqrt.pop %v3546
      %v3579 = vrsqrt.pop %v3547
      %v3580 = vrsqrt.pop %v3548
      %v3581 = vrsqrt.pop %v3549
      %v3582 = vrsqrt.pop %v3550
      %v3583 = vrsqrt.pop %v3551
      %v3584 = vrsqrt.pop %v3552
      %v3585 = vrsqrt.pop %v3553
      %v3586 = vrsqrt.pop %v3554
      %v3587 = vrsqrt.pop %v3555
      %v3588 = vrsqrt.pop %v3556
      %v3589 = vrsqrt.pop %v3557
      %v3590 = vrsqrt.pop %v3558
      %v3591 = vrsqrt.pop %v3559
      %v3592 = vrsqrt.pop %v3560
      %v3593 = vrsqrt.pop %v3561
      %v3594 = vrsqrt.pop %v3562
      %v3595 = vrsqrt.pop %v3563
      %v3596 = vrsqrt.pop %v3564
      %v3597 = vrsqrt.pop %v3565
      %v3598 = vrsqrt.pop %v3566
      %v3599 = vrsqrt.pop %v3567
      %v3600 = vrsqrt.pop %v3568
      %v3601 = vrsqrt.pop %v3569
      %v3602 = vrsqrt.pop %v3570
      %v3603 = vrsqrt.pop %v3571
      %v3604 = vrsqrt.pop %v3572
      %v3605 = vmul.f32 %v3349, %v3573
      %v3606 = vmul.f32 %v3350, %v3574
      %v3607 = vmul.f32 %v3351, %v3575
      %v3608 = vmul.f32 %v3352, %v3576
      %v3609 = vmul.f32 %v3353, %v3577
      %v3610 = vmul.f32 %v3354, %v3578
      %v3611 = vmul.f32 %v3355, %v3579
      %v3612 = vmul.f32 %v3356, %v3580
      %v3613 = vmul.f32 %v3357, %v3581
      %v3614 = vmul.f32 %v3358, %v3582
      %v3615 = vmul.f32 %v3359, %v3583
      %v3616 = vmul.f32 %v3360, %v3584
      %v3617 = vmul.f32 %v3361, %v3585
      %v3618 = vmul.f32 %v3362, %v3586
      %v3619 = vmul.f32 %v3363, %v3587
      %v3620 = vmul.f32 %v3364, %v3588
      %v3621 = vmul.f32 %v3365, %v3589
      %v3622 = vmul.f32 %v3366, %v3590
      %v3623 = vmul.f32 %v3367, %v3591
      %v3624 = vmul.f32 %v3368, %v3592
      %v3625 = vmul.f32 %v3369, %v3593
      %v3626 = vmul.f32 %v3370, %v3594
      %v3627 = vmul.f32 %v3371, %v3595
      %v3628 = vmul.f32 %v3372, %v3596
      %v3629 = vmul.f32 %v3373, %v3597
      %v3630 = vmul.f32 %v3374, %v3598
      %v3631 = vmul.f32 %v3375, %v3599
      %v3632 = vmul.f32 %v3376, %v3600
      %v3633 = vmul.f32 %v3377, %v3601
      %v3634 = vmul.f32 %v3378, %v3602
      %v3635 = vmul.f32 %v3379, %v3603
      %v3636 = vmul.f32 %v3380, %v3604
      %v3637 = vld [vmem:[%s8] sm:$0x1]
      %v3639 = vlaneseq
      %v3640 = vshrl.u32 %v3639, 7
      %v3641 = vsub.s32 0, %v3640
      %v3642 = vrot.slane %v3637, %v3641
      %v3644 = vmul.f32 %v3605, %v3642
      %v3645 = vmul.f32 %v3606, %v3642
      %v3646 = vmul.f32 %v3607, %v3642
      %v3647 = vmul.f32 %v3608, %v3642
      %v3648 = vmul.f32 %v3609, %v3642
      %v3649 = vmul.f32 %v3610, %v3642
      %v3650 = vmul.f32 %v3611, %v3642
      %v3651 = vmul.f32 %v3612, %v3642
      %v3652 = vmul.f32 %v3613, %v3642
      %v3653 = vmul.f32 %v3614, %v3642
      %v3654 = vmul.f32 %v3615, %v3642
      %v3655 = vmul.f32 %v3616, %v3642
      %v3656 = vmul.f32 %v3617, %v3642
      %v3657 = vmul.f32 %v3618, %v3642
      %v3658 = vmul.f32 %v3619, %v3642
      %v3659 = vmul.f32 %v3620, %v3642
      %v3660 = vmul.f32 %v3621, %v3642
      %v3661 = vmul.f32 %v3622, %v3642
      %v3662 = vmul.f32 %v3623, %v3642
      %v3663 = vmul.f32 %v3624, %v3642
      %v3664 = vmul.f32 %v3625, %v3642
      %v3665 = vmul.f32 %v3626, %v3642
      %v3666 = vmul.f32 %v3627, %v3642
      %v3667 = vmul.f32 %v3628, %v3642
      %v3668 = vmul.f32 %v3629, %v3642
      %v3669 = vmul.f32 %v3630, %v3642
      %v3670 = vmul.f32 %v3631, %v3642
      %v3671 = vmul.f32 %v3632, %v3642
      %v3672 = vmul.f32 %v3633, %v3642
      %v3673 = vmul.f32 %v3634, %v3642
      %v3674 = vmul.f32 %v3635, %v3642
      %v3675 = vmul.f32 %v3636, %v3642
      %v3676 = vld [vmem:[%s9] sm:$0x1]
      %v3678 = vlaneseq
      %v3679 = vshrl.u32 %v3678, 7
      %v3680 = vsub.s32 0, %v3679
      %v3681 = vrot.slane %v3676, %v3680
      %v3683 = vadd.f32 %v3644, %v3681
      %v3684 = vadd.f32 %v3645, %v3681
      %v3685 = vadd.f32 %v3646, %v3681
      %v3686 = vadd.f32 %v3647, %v3681
      %v3687 = vadd.f32 %v3648, %v3681
      %v3688 = vadd.f32 %v3649, %v3681
      %v3689 = vadd.f32 %v3650, %v3681
      %v3690 = vadd.f32 %v3651, %v3681
      %v3691 = vadd.f32 %v3652, %v3681
      %v3692 = vadd.f32 %v3653, %v3681
      %v3693 = vadd.f32 %v3654, %v3681
      %v3694 = vadd.f32 %v3655, %v3681
      %v3695 = vadd.f32 %v3656, %v3681
      %v3696 = vadd.f32 %v3657, %v3681
      %v3697 = vadd.f32 %v3658, %v3681
      %v3698 = vadd.f32 %v3659, %v3681
      %v3699 = vadd.f32 %v3660, %v3681
      %v3700 = vadd.f32 %v3661, %v3681
      %v3701 = vadd.f32 %v3662, %v3681
      %v3702 = vadd.f32 %v3663, %v3681
      %v3703 = vadd.f32 %v3664, %v3681
      %v3704 = vadd.f32 %v3665, %v3681
      %v3705 = vadd.f32 %v3666, %v3681
      %v3706 = vadd.f32 %v3667, %v3681
      %v3707 = vadd.f32 %v3668, %v3681
      %v3708 = vadd.f32 %v3669, %v3681
      %v3709 = vadd.f32 %v3670, %v3681
      %v3710 = vadd.f32 %v3671, %v3681
      %v3711 = vadd.f32 %v3672, %v3681
      %v3712 = vadd.f32 %v3673, %v3681
      %v3713 = vadd.f32 %v3674, %v3681
      %v3714 = vadd.f32 %v3675, %v3681
      %v3715 = vld [vmem:[%s10] sm:$0xf]
      %v3716 = vld [vmem:[%s11] sm:$0x1]
      %v3718 = vlaneseq
      %v3719 = vshrl.u32 %v3718, 7
      %v3720 = vsub.s32 0, %v3719
      %v3721 = vrot.slane %v3716, %v3720
      %v3724 = vsel %vm527, %v3683, 0
      %v3727 = vsel %vm527, %v3684, 0
      %v3730 = vsel %vm527, %v3685, 0
      %v3733 = vsel %vm527, %v3686, 0
      %v3736 = vsel %vm527, %v3687, 0
      %v3739 = vsel %vm527, %v3688, 0
      %v3742 = vsel %vm527, %v3689, 0
      %v3745 = vsel %vm527, %v3690, 0
      %v3748 = vsel %vm527, %v3691, 0
      %v3751 = vsel %vm527, %v3692, 0
      %v3754 = vsel %vm527, %v3693, 0
      %v3757 = vsel %vm527, %v3694, 0
      %v3760 = vsel %vm527, %v3695, 0
      %v3763 = vsel %vm527, %v3696, 0
      %v3766 = vsel %vm527, %v3697, 0
      %v3769 = vsel %vm527, %v3698, 0
      %v3772 = vsel %vm527, %v3699, 0
      %v3775 = vsel %vm527, %v3700, 0
      %v3778 = vsel %vm527, %v3701, 0
      %v3781 = vsel %vm527, %v3702, 0
      %v3784 = vsel %vm527, %v3703, 0
      %v3787 = vsel %vm527, %v3704, 0
      %v3790 = vsel %vm527, %v3705, 0
      %v3793 = vsel %vm527, %v3706, 0
      %v3796 = vsel %vm527, %v3707, 0
      %v3799 = vsel %vm527, %v3708, 0
      %v3802 = vsel %vm527, %v3709, 0
      %v3805 = vsel %vm527, %v3710, 0
      %v3808 = vsel %vm527, %v3711, 0
      %v3811 = vsel %vm527, %v3712, 0
      %v3814 = vsel %vm527, %v3713, 0
      %v3817 = vsel %vm527, %v3714, 0
      %v3820 = vsel %vm1127, %v3715, 0
      %3822 = vmatprep.subr.mxu0 0.0
      %3823 = vmatpush1.msra.mxu0 %v3820
      %3824 = vmatprep.subr.mxu0 0.0
      %3825 = vmatpush1.msra.mxu0 0.0
      %3826 = vmatprep.subr.mxu0 0.0
      %3827 = vmatpush1.msra.mxu0 0.0
      %3828 = vmatprep.subr.mxu0 0.0
      %3829 = vmatpush1.msra.mxu0 0.0
      %3830 = vmatprep.subr.mxu0 0.0
      %3831 = vmatpush1.msra.mxu0 0.0
      %3832 = vmatprep.subr.mxu0 0.0
      %3833 = vmatpush1.msra.mxu0 0.0
      %3834 = vmatprep.subr.mxu0 0.0
      %3835 = vmatpush1.msra.mxu0 0.0
      %3836 = vmatprep.subr.mxu0 0.0
      %3837 = vmatpush1.msra.mxu0 0.0
      %3838 = vmatprep.subr.mxu0 0.0
      %3839 = vmatpush1.msra.mxu0 0.0
      %3840 = vmatprep.subr.mxu0 0.0
      %3841 = vmatpush1.msra.mxu0 0.0
      %3842 = vmatprep.subr.mxu0 0.0
      %3843 = vmatpush1.msra.mxu0 0.0
      %3844 = vmatprep.subr.mxu0 0.0
      %3845 = vmatpush1.msra.mxu0 0.0
      %3846 = vmatprep.subr.mxu0 0.0
      %3847 = vmatpush1.msra.mxu0 0.0
      %3848 = vmatprep.subr.mxu0 0.0
      %3849 = vmatpush1.msra.mxu0 0.0
      %3850 = vmatprep.subr.mxu0 0.0
      %3851 = vmatpush1.msra.mxu0 0.0
      %3852 = vmatprep.subr.mxu0 0.0
      %3853 = vmatpush1.msra.mxu0 0.0
      %3854 = vmatprep.subr.mxu0 0.0
      %3855 = vmatpush1.msra.mxu0 0.0
      %3856 = vmatprep.subr.mxu0 0.0
      %3857 = vmatpush1.msra.mxu0 0.0
      %3858 = vmatprep.subr.mxu0 0.0
      %3859 = vmatpush1.msra.mxu0 0.0
      %3860 = vmatprep.subr.mxu0 0.0
      %3861 = vmatpush1.msra.mxu0 0.0
      %3862 = vmatprep.subr.mxu0 0.0
      %3863 = vmatpush1.msra.mxu0 0.0
      %3864 = vmatprep.subr.mxu0 0.0
      %3865 = vmatpush1.msra.mxu0 0.0
      %3866 = vmatprep.subr.mxu0 0.0
      %3867 = vmatpush1.msra.mxu0 0.0
      %3868 = vmatprep.subr.mxu0 0.0
      %3869 = vmatpush1.msra.mxu0 0.0
      %3870 = vmatprep.subr.mxu0 0.0
      %3871 = vmatpush1.msra.mxu0 0.0
      %3872 = vmatprep.subr.mxu0 0.0
      %3873 = vmatpush1.msra.mxu0 0.0
      %3874 = vmatprep.subr.mxu0 0.0
      %3875 = vmatpush1.msra.mxu0 0.0
      %3876 = vmatprep.subr.mxu0 0.0
      %3877 = vmatpush1.msra.mxu0 0.0
      %3878 = vmatprep.subr.mxu0 0.0
      %3879 = vmatpush1.msra.mxu0 0.0
      %3880 = vmatprep.subr.mxu0 0.0
      %3881 = vmatpush1.msra.mxu0 0.0
      %3882 = vmatprep.subr.mxu0 0.0
      %3883 = vmatpush1.msra.mxu0 0.0
      %3884 = vmatprep.subr.mxu0 0.0
      %3885 = vmatpush1.msra.mxu0 0.0
      %3886 = vmatprep.mubr.f32.mxu0 0.0
      %3887 = vmatmul.mubr.f32.gmra.mrb[0].mxu0 %v3724
      %v3888 = vpop.f32.mrb[0].mxu0
      %v3889 = vadd.f32 %v3721, %v3888
      %v3890 = vpop.f32.mrb[0].mxu0
      %3891 = vmatprep.mubr.f32.mxu0 0.0
      %3892 = vmatmul.mubr.f32.gmra.mrb[0].mxu0 %v3727
      %v3893 = vpop.f32.mrb[0].mxu0
      %v3894 = vadd.f32 %v3721, %v3893
      %v3895 = vpop.f32.mrb[0].mxu0
      %3896 = vmatprep.mubr.f32.mxu0 0.0
      %3897 = vmatmul.mubr.f32.gmra.mrb[0].mxu0 %v3730
      %v3898 = vpop.f32.mrb[0].mxu0
      %v3899 = vadd.f32 %v3721, %v3898
      %v3900 = vpop.f32.mrb[0].mxu0
      %3901 = vmatprep.mubr.f32.mxu0 0.0
      %3902 = vmatmul.mubr.f32.gmra.mrb[0].mxu0 %v3733
      %v3903 = vpop.f32.mrb[0].mxu0
      %v3904 = vadd.f32 %v3721, %v3903
      %v3905 = vpop.f32.mrb[0].mxu0
      %3906 = vmatprep.mubr.f32.mxu0 0.0
      %3907 = vmatmul.mubr.f32.gmra.mrb[0].mxu0 %v3736
      %v3908 = vpop.f32.mrb[0].mxu0
      %v3909 = vadd.f32 %v3721, %v3908
      %v3910 = vpop.f32.mrb[0].mxu0
      %3911 = vmatprep.mubr.f32.mxu0 0.0
      %3912 = vmatmul.mubr.f32.gmra.mrb[0].mxu0 %v3739
      %v3913 = vpop.f32.mrb[0].mxu0
      %v3914 = vadd.f32 %v3721, %v3913
      %v3915 = vpop.f32.mrb[0].mxu0
      %3916 = vmatprep.mubr.f32.mxu0 0.0
      %3917 = vmatmul.mubr.f32.gmra.mrb[0].mxu0 %v3742
      %v3918 = vpop.f32.mrb[0].mxu0
      %v3919 = vadd.f32 %v3721, %v3918
      %v3920 = vpop.f32.mrb[0].mxu0
      %3921 = vmatprep.mubr.f32.mxu0 0.0
      %3922 = vmatmul.mubr.f32.gmra.mrb[0].mxu0 %v3745
      %v3923 = vpop.f32.mrb[0].mxu0
      %v3924 = vadd.f32 %v3721, %v3923
      %v3925 = vpop.f32.mrb[0].mxu0
      %3926 = vmatprep.mubr.f32.mxu0 0.0
      %3927 = vmatmul.mubr.f32.gmra.mrb[0].mxu0 %v3748
      %v3928 = vpop.f32.mrb[0].mxu0
      %v3929 = vadd.f32 %v3721, %v3928
      %v3930 = vpop.f32.mrb[0].mxu0
      %3931 = vmatprep.mubr.f32.mxu0 0.0
      %3932 = vmatmul.mubr.f32.gmra.mrb[0].mxu0 %v3751
      %v3933 = vpop.f32.mrb[0].mxu0
      %v3934 = vadd.f32 %v3721, %v3933
      %v3935 = vpop.f32.mrb[0].mxu0
      %3936 = vmatprep.mubr.f32.mxu0 0.0
      %3937 = vmatmul.mubr.f32.gmra.mrb[0].mxu0 %v3754
      %v3938 = vpop.f32.mrb[0].mxu0
      %v3939 = vadd.f32 %v3721, %v3938
      %v3940 = vpop.f32.mrb[0].mxu0
      %3941 = vmatprep.mubr.f32.mxu0 0.0
      %3942 = vmatmul.mubr.f32.gmra.mrb[0].mxu0 %v3757
      %v3943 = vpop.f32.mrb[0].mxu0
      %v3944 = vadd.f32 %v3721, %v3943
      %v3945 = vpop.f32.mrb[0].mxu0
      %3946 = vmatprep.mubr.f32.mxu0 0.0
      %3947 = vmatmul.mubr.f32.gmra.mrb[0].mxu0 %v3760
      %v3948 = vpop.f32.mrb[0].mxu0
      %v3949 = vadd.f32 %v3721, %v3948
      %v3950 = vpop.f32.mrb[0].mxu0
      %3951 = vmatprep.mubr.f32.mxu0 0.0
      %3952 = vmatmul.mubr.f32.gmra.mrb[0].mxu0 %v3763
      %v3953 = vpop.f32.mrb[0].mxu0
      %v3954 = vadd.f32 %v3721, %v3953
      %v3955 = vpop.f32.mrb[0].mxu0
      %3956 = vmatprep.mubr.f32.mxu0 0.0
      %3957 = vmatmul.mubr.f32.gmra.mrb[0].mxu0 %v3766
      %v3958 = vpop.f32.mrb[0].mxu0
      %v3959 = vadd.f32 %v3721, %v3958
      %v3960 = vpop.f32.mrb[0].mxu0
      %3961 = vmatprep.mubr.f32.mxu0 0.0
      %3962 = vmatmul.mubr.f32.gmra.mrb[0].mxu0 %v3769
      %v3963 = vpop.f32.mrb[0].mxu0
      %v3964 = vadd.f32 %v3721, %v3963
      %v3965 = vpop.f32.mrb[0].mxu0
      %3966 = vmatprep.mubr.f32.mxu0 0.0
      %3967 = vmatmul.mubr.f32.gmra.mrb[0].mxu0 %v3772
      %v3968 = vpop.f32.mrb[0].mxu0
      %v3969 = vadd.f32 %v3721, %v3968
      %v3970 = vpop.f32.mrb[0].mxu0
      %3971 = vmatprep.mubr.f32.mxu0 0.0
      %3972 = vmatmul.mubr.f32.gmra.mrb[0].mxu0 %v3775
      %v3973 = vpop.f32.mrb[0].mxu0
      %v3974 = vadd.f32 %v3721, %v3973
      %v3975 = vpop.f32.mrb[0].mxu0
      %3976 = vmatprep.mubr.f32.mxu0 0.0
      %3977 = vmatmul.mubr.f32.gmra.mrb[0].mxu0 %v3778
      %v3978 = vpop.f32.mrb[0].mxu0
      %v3979 = vadd.f32 %v3721, %v3978
      %v3980 = vpop.f32.mrb[0].mxu0
      %3981 = vmatprep.mubr.f32.mxu0 0.0
      %3982 = vmatmul.mubr.f32.gmra.mrb[0].mxu0 %v3781
      %v3983 = vpop.f32.mrb[0].mxu0
      %v3984 = vadd.f32 %v3721, %v3983
      %v3985 = vpop.f32.mrb[0].mxu0
      %3986 = vmatprep.mubr.f32.mxu0 0.0
      %3987 = vmatmul.mubr.f32.gmra.mrb[0].mxu0 %v3784
      %v3988 = vpop.f32.mrb[0].mxu0
      %v3989 = vadd.f32 %v3721, %v3988
      %v3990 = vpop.f32.mrb[0].mxu0
      %3991 = vmatprep.mubr.f32.mxu0 0.0
      %3992 = vmatmul.mubr.f32.gmra.mrb[0].mxu0 %v3787
      %v3993 = vpop.f32.mrb[0].mxu0
      %v3994 = vadd.f32 %v3721, %v3993
      %v3995 = vpop.f32.mrb[0].mxu0
      %3996 = vmatprep.mubr.f32.mxu0 0.0
      %3997 = vmatmul.mubr.f32.gmra.mrb[0].mxu0 %v3790
      %v3998 = vpop.f32.mrb[0].mxu0
      %v3999 = vadd.f32 %v3721, %v3998
      %v4000 = vpop.f32.mrb[0].mxu0
      %4001 = vmatprep.mubr.f32.mxu0 0.0
      %4002 = vmatmul.mubr.f32.gmra.mrb[0].mxu0 %v3793
      %v4003 = vpop.f32.mrb[0].mxu0
      %v4004 = vadd.f32 %v3721, %v4003
      %v4005 = vpop.f32.mrb[0].mxu0
      %4006 = vmatprep.mubr.f32.mxu0 0.0
      %4007 = vmatmul.mubr.f32.gmra.mrb[0].mxu0 %v3796
      %v4008 = vpop.f32.mrb[0].mxu0
      %v4009 = vadd.f32 %v3721, %v4008
      %v4010 = vpop.f32.mrb[0].mxu0
      %4011 = vmatprep.mubr.f32.mxu0 0.0
      %4012 = vmatmul.mubr.f32.gmra.mrb[0].mxu0 %v3799
      %v4013 = vpop.f32.mrb[0].mxu0
      %v4014 = vadd.f32 %v3721, %v4013
      %v4015 = vpop.f32.mrb[0].mxu0
      %4016 = vmatprep.mubr.f32.mxu0 0.0
      %4017 = vmatmul.mubr.f32.gmra.mrb[0].mxu0 %v3802
      %v4018 = vpop.f32.mrb[0].mxu0
      %v4019 = vadd.f32 %v3721, %v4018
      %v4020 = vpop.f32.mrb[0].mxu0
      %4021 = vmatprep.mubr.f32.mxu0 0.0
      %4022 = vmatmul.mubr.f32.gmra.mrb[0].mxu0 %v3805
      %v4023 = vpop.f32.mrb[0].mxu0
      %v4024 = vadd.f32 %v3721, %v4023
      %v4025 = vpop.f32.mrb[0].mxu0
      %4026 = vmatprep.mubr.f32.mxu0 0.0
      %4027 = vmatmul.mubr.f32.gmra.mrb[0].mxu0 %v3808
      %v4028 = vpop.f32.mrb[0].mxu0
      %v4029 = vadd.f32 %v3721, %v4028
      %v4030 = vpop.f32.mrb[0].mxu0
      %4031 = vmatprep.mubr.f32.mxu0 0.0
      %4032 = vmatmul.mubr.f32.gmra.mrb[0].mxu0 %v3811
      %v4033 = vpop.f32.mrb[0].mxu0
      %v4034 = vadd.f32 %v3721, %v4033
      %v4035 = vpop.f32.mrb[0].mxu0
      %4036 = vmatprep.mubr.f32.mxu0 0.0
      %4037 = vmatmul.mubr.f32.gmra.mrb[0].mxu0 %v3814
      %v4038 = vpop.f32.mrb[0].mxu0
      %v4039 = vadd.f32 %v3721, %v4038
      %v4040 = vpop.f32.mrb[0].mxu0
      %4041 = vmatprep.mubr.f32.mxu0 0.0
      %4042 = vmatmul.mubr.f32.gmra.mrb[0].mxu0 %v3817
      %v4043 = vpop.f32.mrb[0].mxu0
      %v4044 = vadd.f32 %v3721, %v4043
      %v4045 = vpop.f32.mrb[0].mxu0
      %4046 = vdwg.mxu0
      %4079 = vrot.lane.b32.xlu0 %v3889, 124
      %v4080 = vpop.permute.xlu0 %4079
      %4081 = vrot.lane.b32.xlu0 %v3894, 124
      %v4082 = vpop.permute.xlu0 %4081
      %4083 = vrot.lane.b32.xlu0 %v3899, 124
      %v4084 = vpop.permute.xlu0 %4083
      %4085 = vrot.lane.b32.xlu0 %v3904, 124
      %v4086 = vpop.permute.xlu0 %4085
      %4087 = vrot.lane.b32.xlu0 %v3909, 124
      %v4088 = vpop.permute.xlu0 %4087
      %4089 = vrot.lane.b32.xlu0 %v3914, 124
      %v4090 = vpop.permute.xlu0 %4089
      %4091 = vrot.lane.b32.xlu0 %v3919, 124
      %v4092 = vpop.permute.xlu0 %4091
      %4093 = vrot.lane.b32.xlu0 %v3924, 124
      %v4094 = vpop.permute.xlu0 %4093
      %4095 = vrot.lane.b32.xlu0 %v3929, 124
      %v4096 = vpop.permute.xlu0 %4095
      %4097 = vrot.lane.b32.xlu0 %v3934, 124
      %v4098 = vpop.permute.xlu0 %4097
      %4099 = vrot.lane.b32.xlu0 %v3939, 124
      %v4100 = vpop.permute.xlu0 %4099
      %4101 = vrot.lane.b32.xlu0 %v3944, 124
      %v4102 = vpop.permute.xlu0 %4101
      %4103 = vrot.lane.b32.xlu0 %v3949, 124
      %v4104 = vpop.permute.xlu0 %4103
      %4105 = vrot.lane.b32.xlu0 %v3954, 124
      %v4106 = vpop.permute.xlu0 %4105
      %4107 = vrot.lane.b32.xlu0 %v3959, 124
      %v4108 = vpop.permute.xlu0 %4107
      %4109 = vrot.lane.b32.xlu0 %v3964, 124
      %v4110 = vpop.permute.xlu0 %4109
      %4111 = vrot.lane.b32.xlu0 %v3969, 124
      %v4112 = vpop.permute.xlu0 %4111
      %4113 = vrot.lane.b32.xlu0 %v3974, 124
      %v4114 = vpop.permute.xlu0 %4113
      %4115 = vrot.lane.b32.xlu0 %v3979, 124
      %v4116 = vpop.permute.xlu0 %4115
      %4117 = vrot.lane.b32.xlu0 %v3984, 124
      %v4118 = vpop.permute.xlu0 %4117
      %4119 = vrot.lane.b32.xlu0 %v3989, 124
      %v4120 = vpop.permute.xlu0 %4119
      %4121 = vrot.lane.b32.xlu0 %v3994, 124
      %v4122 = vpop.permute.xlu0 %4121
      %4123 = vrot.lane.b32.xlu0 %v3999, 124
      %v4124 = vpop.permute.xlu0 %4123
      %4125 = vrot.lane.b32.xlu0 %v4004, 124
      %v4126 = vpop.permute.xlu0 %4125
      %4127 = vrot.lane.b32.xlu0 %v4009, 124
      %v4128 = vpop.permute.xlu0 %4127
      %4129 = vrot.lane.b32.xlu0 %v4014, 124
      %v4130 = vpop.permute.xlu0 %4129
      %4131 = vrot.lane.b32.xlu0 %v4019, 124
      %v4132 = vpop.permute.xlu0 %4131
      %4133 = vrot.lane.b32.xlu0 %v4024, 124
      %v4134 = vpop.permute.xlu0 %4133
      %4135 = vrot.lane.b32.xlu0 %v4029, 124
      %v4136 = vpop.permute.xlu0 %4135
      %4137 = vrot.lane.b32.xlu0 %v4034, 124
      %v4138 = vpop.permute.xlu0 %4137
      %4139 = vrot.lane.b32.xlu0 %v4039, 124
      %v4140 = vpop.permute.xlu0 %4139
      %4141 = vrot.lane.b32.xlu0 %v4044, 124
      %v4142 = vpop.permute.xlu0 %4141
      %v4175 = vmul.f32 %v3889, %v4080
      %v4176 = vmul.f32 %v3894, %v4082
      %v4177 = vmul.f32 %v3899, %v4084
      %v4178 = vmul.f32 %v3904, %v4086
      %v4179 = vmul.f32 %v3909, %v4088
      %v4180 = vmul.f32 %v3914, %v4090
      %v4181 = vmul.f32 %v3919, %v4092
      %v4182 = vmul.f32 %v3924, %v4094
      %v4183 = vmul.f32 %v3929, %v4096
      %v4184 = vmul.f32 %v3934, %v4098
      %v4185 = vmul.f32 %v3939, %v4100
      %v4186 = vmul.f32 %v3944, %v4102
      %v4187 = vmul.f32 %v3949, %v4104
      %v4188 = vmul.f32 %v3954, %v4106
      %v4189 = vmul.f32 %v3959, %v4108
      %v4190 = vmul.f32 %v3964, %v4110
      %v4191 = vmul.f32 %v3969, %v4112
      %v4192 = vmul.f32 %v3974, %v4114
      %v4193 = vmul.f32 %v3979, %v4116
      %v4194 = vmul.f32 %v3984, %v4118
      %v4195 = vmul.f32 %v3989, %v4120
      %v4196 = vmul.f32 %v3994, %v4122
      %v4197 = vmul.f32 %v3999, %v4124
      %v4198 = vmul.f32 %v4004, %v4126
      %v4199 = vmul.f32 %v4009, %v4128
      %v4200 = vmul.f32 %v4014, %v4130
      %v4201 = vmul.f32 %v4019, %v4132
      %v4202 = vmul.f32 %v4024, %v4134
      %v4203 = vmul.f32 %v4029, %v4136
      %v4204 = vmul.f32 %v4034, %v4138
      %v4205 = vmul.f32 %v4039, %v4140
      %v4206 = vmul.f32 %v4044, %v4142
      %v4207 = vld [vmem:[%s12] sm:$0xf]
      %v4208 = vld [vmem:[%s13] sm:$0x1]
      %v4210 = vlaneseq
      %v4211 = vshrl.u32 %v4210, 7
      %v4212 = vsub.s32 0, %v4211
      %v4213 = vrot.slane %v4208, %v4212
      %v4216 = vsel %vm527, %v4175, 0
      %v4219 = vsel %vm527, %v4176, 0
      %v4222 = vsel %vm527, %v4177, 0
      %v4225 = vsel %vm527, %v4178, 0
      %v4228 = vsel %vm527, %v4179, 0
      %v4231 = vsel %vm527, %v4180, 0
      %v4234 = vsel %vm527, %v4181, 0
      %v4237 = vsel %vm527, %v4182, 0
      %v4240 = vsel %vm527, %v4183, 0
      %v4243 = vsel %vm527, %v4184, 0
      %v4246 = vsel %vm527, %v4185, 0
      %v4249 = vsel %vm527, %v4186, 0
      %v4252 = vsel %vm527, %v4187, 0
      %v4255 = vsel %vm527, %v4188, 0
      %v4258 = vsel %vm527, %v4189, 0
      %v4261 = vsel %vm527, %v4190, 0
      %v4264 = vsel %vm527, %v4191, 0
      %v4267 = vsel %vm527, %v4192, 0
      %v4270 = vsel %vm527, %v4193, 0
      %v4273 = vsel %vm527, %v4194, 0
      %v4276 = vsel %vm527, %v4195, 0
      %v4279 = vsel %vm527, %v4196, 0
      %v4282 = vsel %vm527, %v4197, 0
      %v4285 = vsel %vm527, %v4198, 0
      %v4288 = vsel %vm527, %v4199, 0
      %v4291 = vsel %vm527, %v4200, 0
      %v4294 = vsel %vm527, %v4201, 0
      %v4297 = vsel %vm527, %v4202, 0
      %v4300 = vsel %vm527, %v4203, 0
      %v4303 = vsel %vm527, %v4204, 0
      %v4306 = vsel %vm527, %v4205, 0
      %v4309 = vsel %vm527, %v4206, 0
      %v4312 = vsel %vm1127, %v4207, 0
      %4314 = vmatprep.subr.mxu0 0.0
      %4315 = vmatpush1.msra.mxu0 %v4312
      %4316 = vmatprep.subr.mxu0 0.0
      %4317 = vmatpush1.msra.mxu0 0.0
      %4318 = vmatprep.subr.mxu0 0.0
      %4319 = vmatpush1.msra.mxu0 0.0
      %4320 = vmatprep.subr.mxu0 0.0
      %4321 = vmatpush1.msra.mxu0 0.0
      %4322 = vmatprep.subr.mxu0 0.0
      %4323 = vmatpush1.msra.mxu0 0.0
      %4324 = vmatprep.subr.mxu0 0.0
      %4325 = vmatpush1.msra.mxu0 0.0
      %4326 = vmatprep.subr.mxu0 0.0
      %4327 = vmatpush1.msra.mxu0 0.0
      %4328 = vmatprep.subr.mxu0 0.0
      %4329 = vmatpush1.msra.mxu0 0.0
      %4330 = vmatprep.subr.mxu0 0.0
      %4331 = vmatpush1.msra.mxu0 0.0
      %4332 = vmatprep.subr.mxu0 0.0
      %4333 = vmatpush1.msra.mxu0 0.0
      %4334 = vmatprep.subr.mxu0 0.0
      %4335 = vmatpush1.msra.mxu0 0.0
      %4336 = vmatprep.subr.mxu0 0.0
      %4337 = vmatpush1.msra.mxu0 0.0
      %4338 = vmatprep.subr.mxu0 0.0
      %4339 = vmatpush1.msra.mxu0 0.0
      %4340 = vmatprep.subr.mxu0 0.0
      %4341 = vmatpush1.msra.mxu0 0.0
      %4342 = vmatprep.subr.mxu0 0.0
      %4343 = vmatpush1.msra.mxu0 0.0
      %4344 = vmatprep.subr.mxu0 0.0
      %4345 = vmatpush1.msra.mxu0 0.0
      %4346 = vmatprep.subr.mxu0 0.0
      %4347 = vmatpush1.msra.mxu0 0.0
      %4348 = vmatprep.subr.mxu0 0.0
      %4349 = vmatpush1.msra.mxu0 0.0
      %4350 = vmatprep.subr.mxu0 0.0
      %4351 = vmatpush1.msra.mxu0 0.0
      %4352 = vmatprep.subr.mxu0 0.0
      %4353 = vmatpush1.msra.mxu0 0.0
      %4354 = vmatprep.subr.mxu0 0.0
      %4355 = vmatpush1.msra.mxu0 0.0
      %4356 = vmatprep.subr.mxu0 0.0
      %4357 = vmatpush1.msra.mxu0 0.0
      %4358 = vmatprep.subr.mxu0 0.0
      %4359 = vmatpush1.msra.mxu0 0.0
      %4360 = vmatprep.subr.mxu0 0.0
      %4361 = vmatpush1.msra.mxu0 0.0
      %4362 = vmatprep.subr.mxu0 0.0
      %4363 = vmatpush1.msra.mxu0 0.0
      %4364 = vmatprep.subr.mxu0 0.0
      %4365 = vmatpush1.msra.mxu0 0.0
      %4366 = vmatprep.subr.mxu0 0.0
      %4367 = vmatpush1.msra.mxu0 0.0
      %4368 = vmatprep.subr.mxu0 0.0
      %4369 = vmatpush1.msra.mxu0 0.0
      %4370 = vmatprep.subr.mxu0 0.0
      %4371 = vmatpush1.msra.mxu0 0.0
      %4372 = vmatprep.subr.mxu0 0.0
      %4373 = vmatpush1.msra.mxu0 0.0
      %4374 = vmatprep.subr.mxu0 0.0
      %4375 = vmatpush1.msra.mxu0 0.0
      %4376 = vmatprep.subr.mxu0 0.0
      %4377 = vmatpush1.msra.mxu0 0.0
      %4378 = vmatprep.mubr.f32.mxu0 0.0
      %4379 = vmatmul.mubr.f32.gmra.mrb[0].mxu0 %v4216
      %v4380 = vpop.f32.mrb[0].mxu0
      %v4381 = vadd.f32 %v4213, %v4380
      %v4382 = vpop.f32.mrb[0].mxu0
      %4383 = vmatprep.mubr.f32.mxu0 0.0
      %4384 = vmatmul.mubr.f32.gmra.mrb[0].mxu0 %v4219
      %v4385 = vpop.f32.mrb[0].mxu0
      %v4386 = vadd.f32 %v4213, %v4385
      %v4387 = vpop.f32.mrb[0].mxu0
      %4388 = vmatprep.mubr.f32.mxu0 0.0
      %4389 = vmatmul.mubr.f32.gmra.mrb[0].mxu0 %v4222
      %v4390 = vpop.f32.mrb[0].mxu0
      %v4391 = vadd.f32 %v4213, %v4390
      %v4392 = vpop.f32.mrb[0].mxu0
      %4393 = vmatprep.mubr.f32.mxu0 0.0
      %4394 = vmatmul.mubr.f32.gmra.mrb[0].mxu0 %v4225
      %v4395 = vpop.f32.mrb[0].mxu0
      %v4396 = vadd.f32 %v4213, %v4395
      %v4397 = vpop.f32.mrb[0].mxu0
      %4398 = vmatprep.mubr.f32.mxu0 0.0
      %4399 = vmatmul.mubr.f32.gmra.mrb[0].mxu0 %v4228
      %v4400 = vpop.f32.mrb[0].mxu0
      %v4401 = vadd.f32 %v4213, %v4400
      %v4402 = vpop.f32.mrb[0].mxu0
      %4403 = vmatprep.mubr.f32.mxu0 0.0
      %4404 = vmatmul.mubr.f32.gmra.mrb[0].mxu0 %v4231
      %v4405 = vpop.f32.mrb[0].mxu0
      %v4406 = vadd.f32 %v4213, %v4405
      %v4407 = vpop.f32.mrb[0].mxu0
      %4408 = vmatprep.mubr.f32.mxu0 0.0
      %4409 = vmatmul.mubr.f32.gmra.mrb[0].mxu0 %v4234
      %v4410 = vpop.f32.mrb[0].mxu0
      %v4411 = vadd.f32 %v4213, %v4410
      %v4412 = vpop.f32.mrb[0].mxu0
      %4413 = vmatprep.mubr.f32.mxu0 0.0
      %4414 = vmatmul.mubr.f32.gmra.mrb[0].mxu0 %v4237
      %v4415 = vpop.f32.mrb[0].mxu0
      %v4416 = vadd.f32 %v4213, %v4415
      %v4417 = vpop.f32.mrb[0].mxu0
      %4418 = vmatprep.mubr.f32.mxu0 0.0
      %4419 = vmatmul.mubr.f32.gmra.mrb[0].mxu0 %v4240
      %v4420 = vpop.f32.mrb[0].mxu0
      %v4421 = vadd.f32 %v4213, %v4420
      %v4422 = vpop.f32.mrb[0].mxu0
      %4423 = vmatprep.mubr.f32.mxu0 0.0
      %4424 = vmatmul.mubr.f32.gmra.mrb[0].mxu0 %v4243
      %v4425 = vpop.f32.mrb[0].mxu0
      %v4426 = vadd.f32 %v4213, %v4425
      %v4427 = vpop.f32.mrb[0].mxu0
      %4428 = vmatprep.mubr.f32.mxu0 0.0
      %4429 = vmatmul.mubr.f32.gmra.mrb[0].mxu0 %v4246
      %v4430 = vpop.f32.mrb[0].mxu0
      %v4431 = vadd.f32 %v4213, %v4430
      %v4432 = vpop.f32.mrb[0].mxu0
      %4433 = vmatprep.mubr.f32.mxu0 0.0
      %4434 = vmatmul.mubr.f32.gmra.mrb[0].mxu0 %v4249
      %v4435 = vpop.f32.mrb[0].mxu0
      %v4436 = vadd.f32 %v4213, %v4435
      %v4437 = vpop.f32.mrb[0].mxu0
      %4438 = vmatprep.mubr.f32.mxu0 0.0
      %4439 = vmatmul.mubr.f32.gmra.mrb[0].mxu0 %v4252
      %v4440 = vpop.f32.mrb[0].mxu0
      %v4441 = vadd.f32 %v4213, %v4440
      %v4442 = vpop.f32.mrb[0].mxu0
      %4443 = vmatprep.mubr.f32.mxu0 0.0
      %4444 = vmatmul.mubr.f32.gmra.mrb[0].mxu0 %v4255
      %v4445 = vpop.f32.mrb[0].mxu0
      %v4446 = vadd.f32 %v4213, %v4445
      %v4447 = vpop.f32.mrb[0].mxu0
      %4448 = vmatprep.mubr.f32.mxu0 0.0
      %4449 = vmatmul.mubr.f32.gmra.mrb[0].mxu0 %v4258
      %v4450 = vpop.f32.mrb[0].mxu0
      %v4451 = vadd.f32 %v4213, %v4450
      %v4452 = vpop.f32.mrb[0].mxu0
      %4453 = vmatprep.mubr.f32.mxu0 0.0
      %4454 = vmatmul.mubr.f32.gmra.mrb[0].mxu0 %v4261
      %v4455 = vpop.f32.mrb[0].mxu0
      %v4456 = vadd.f32 %v4213, %v4455
      %v4457 = vpop.f32.mrb[0].mxu0
      %4458 = vmatprep.mubr.f32.mxu0 0.0
      %4459 = vmatmul.mubr.f32.gmra.mrb[0].mxu0 %v4264
      %v4460 = vpop.f32.mrb[0].mxu0
      %v4461 = vadd.f32 %v4213, %v4460
      %v4462 = vpop.f32.mrb[0].mxu0
      %4463 = vmatprep.mubr.f32.mxu0 0.0
      %4464 = vmatmul.mubr.f32.gmra.mrb[0].mxu0 %v4267
      %v4465 = vpop.f32.mrb[0].mxu0
      %v4466 = vadd.f32 %v4213, %v4465
      %v4467 = vpop.f32.mrb[0].mxu0
      %4468 = vmatprep.mubr.f32.mxu0 0.0
      %4469 = vmatmul.mubr.f32.gmra.mrb[0].mxu0 %v4270
      %v4470 = vpop.f32.mrb[0].mxu0
      %v4471 = vadd.f32 %v4213, %v4470
      %v4472 = vpop.f32.mrb[0].mxu0
      %4473 = vmatprep.mubr.f32.mxu0 0.0
      %4474 = vmatmul.mubr.f32.gmra.mrb[0].mxu0 %v4273
      %v4475 = vpop.f32.mrb[0].mxu0
      %v4476 = vadd.f32 %v4213, %v4475
      %v4477 = vpop.f32.mrb[0].mxu0
      %4478 = vmatprep.mubr.f32.mxu0 0.0
      %4479 = vmatmul.mubr.f32.gmra.mrb[0].mxu0 %v4276
      %v4480 = vpop.f32.mrb[0].mxu0
      %v4481 = vadd.f32 %v4213, %v4480
      %v4482 = vpop.f32.mrb[0].mxu0
      %4483 = vmatprep.mubr.f32.mxu0 0.0
      %4484 = vmatmul.mubr.f32.gmra.mrb[0].mxu0 %v4279
      %v4485 = vpop.f32.mrb[0].mxu0
      %v4486 = vadd.f32 %v4213, %v4485
      %v4487 = vpop.f32.mrb[0].mxu0
      %4488 = vmatprep.mubr.f32.mxu0 0.0
      %4489 = vmatmul.mubr.f32.gmra.mrb[0].mxu0 %v4282
      %v4490 = vpop.f32.mrb[0].mxu0
      %v4491 = vadd.f32 %v4213, %v4490
      %v4492 = vpop.f32.mrb[0].mxu0
      %4493 = vmatprep.mubr.f32.mxu0 0.0
      %4494 = vmatmul.mubr.f32.gmra.mrb[0].mxu0 %v4285
      %v4495 = vpop.f32.mrb[0].mxu0
      %v4496 = vadd.f32 %v4213, %v4495
      %v4497 = vpop.f32.mrb[0].mxu0
      %4498 = vmatprep.mubr.f32.mxu0 0.0
      %4499 = vmatmul.mubr.f32.gmra.mrb[0].mxu0 %v4288
      %v4500 = vpop.f32.mrb[0].mxu0
      %v4501 = vadd.f32 %v4213, %v4500
      %v4502 = vpop.f32.mrb[0].mxu0
      %4503 = vmatprep.mubr.f32.mxu0 0.0
      %4504 = vmatmul.mubr.f32.gmra.mrb[0].mxu0 %v4291
      %v4505 = vpop.f32.mrb[0].mxu0
      %v4506 = vadd.f32 %v4213, %v4505
      %v4507 = vpop.f32.mrb[0].mxu0
      %4508 = vmatprep.mubr.f32.mxu0 0.0
      %4509 = vmatmul.mubr.f32.gmra.mrb[0].mxu0 %v4294
      %v4510 = vpop.f32.mrb[0].mxu0
      %v4511 = vadd.f32 %v4213, %v4510
      %v4512 = vpop.f32.mrb[0].mxu0
      %4513 = vmatprep.mubr.f32.mxu0 0.0
      %4514 = vmatmul.mubr.f32.gmra.mrb[0].mxu0 %v4297
      %v4515 = vpop.f32.mrb[0].mxu0
      %v4516 = vadd.f32 %v4213, %v4515
      %v4517 = vpop.f32.mrb[0].mxu0
      %4518 = vmatprep.mubr.f32.mxu0 0.0
      %4519 = vmatmul.mubr.f32.gmra.mrb[0].mxu0 %v4300
      %v4520 = vpop.f32.mrb[0].mxu0
      %v4521 = vadd.f32 %v4213, %v4520
      %v4522 = vpop.f32.mrb[0].mxu0
      %4523 = vmatprep.mubr.f32.mxu0 0.0
      %4524 = vmatmul.mubr.f32.gmra.mrb[0].mxu0 %v4303
      %v4525 = vpop.f32.mrb[0].mxu0
      %v4526 = vadd.f32 %v4213, %v4525
      %v4527 = vpop.f32.mrb[0].mxu0
      %4528 = vmatprep.mubr.f32.mxu0 0.0
      %4529 = vmatmul.mubr.f32.gmra.mrb[0].mxu0 %v4306
      %v4530 = vpop.f32.mrb[0].mxu0
      %v4531 = vadd.f32 %v4213, %v4530
      %v4532 = vpop.f32.mrb[0].mxu0
      %4533 = vmatprep.mubr.f32.mxu0 0.0
      %4534 = vmatmul.mubr.f32.gmra.mrb[0].mxu0 %v4309
      %v4535 = vpop.f32.mrb[0].mxu0
      %v4536 = vadd.f32 %v4213, %v4535
      %v4537 = vpop.f32.mrb[0].mxu0
      %4538 = vdwg.mxu0
      %v4539 = vld [vmem:[%s14] sm:$0x1]
      %v4541 = vlaneseq
      %v4542 = vshrl.u32 %v4541, 7
      %v4543 = vsub.s32 0, %v4542
      %v4544 = vrot.slane %v4539, %v4543
      %v4546 = vmul.f32 %v4381, %v4544
      %v4547 = vmul.f32 %v4386, %v4544
      %v4548 = vmul.f32 %v4391, %v4544
      %v4549 = vmul.f32 %v4396, %v4544
      %v4550 = vmul.f32 %v4401, %v4544
      %v4551 = vmul.f32 %v4406, %v4544
      %v4552 = vmul.f32 %v4411, %v4544
      %v4553 = vmul.f32 %v4416, %v4544
      %v4554 = vmul.f32 %v4421, %v4544
      %v4555 = vmul.f32 %v4426, %v4544
      %v4556 = vmul.f32 %v4431, %v4544
      %v4557 = vmul.f32 %v4436, %v4544
      %v4558 = vmul.f32 %v4441, %v4544
      %v4559 = vmul.f32 %v4446, %v4544
      %v4560 = vmul.f32 %v4451, %v4544
      %v4561 = vmul.f32 %v4456, %v4544
      %v4562 = vmul.f32 %v4461, %v4544
      %v4563 = vmul.f32 %v4466, %v4544
      %v4564 = vmul.f32 %v4471, %v4544
      %v4565 = vmul.f32 %v4476, %v4544
      %v4566 = vmul.f32 %v4481, %v4544
      %v4567 = vmul.f32 %v4486, %v4544
      %v4568 = vmul.f32 %v4491, %v4544
      %v4569 = vmul.f32 %v4496, %v4544
      %v4570 = vmul.f32 %v4501, %v4544
      %v4571 = vmul.f32 %v4506, %v4544
      %v4572 = vmul.f32 %v4511, %v4544
      %v4573 = vmul.f32 %v4516, %v4544
      %v4574 = vmul.f32 %v4521, %v4544
      %v4575 = vmul.f32 %v4526, %v4544
      %v4576 = vmul.f32 %v4531, %v4544
      %v4577 = vmul.f32 %v4536, %v4544
      %v4578 = vadd.f32 %v3189, %v4546
      %v4579 = vadd.f32 %v3190, %v4547
      %v4580 = vadd.f32 %v3191, %v4548
      %v4581 = vadd.f32 %v3192, %v4549
      %v4582 = vadd.f32 %v3193, %v4550
      %v4583 = vadd.f32 %v3194, %v4551
      %v4584 = vadd.f32 %v3195, %v4552
      %v4585 = vadd.f32 %v3196, %v4553
      %v4586 = vadd.f32 %v3197, %v4554
      %v4587 = vadd.f32 %v3198, %v4555
      %v4588 = vadd.f32 %v3199, %v4556
      %v4589 = vadd.f32 %v3200, %v4557
      %v4590 = vadd.f32 %v3201, %v4558
      %v4591 = vadd.f32 %v3202, %v4559
      %v4592 = vadd.f32 %v3203, %v4560
      %v4593 = vadd.f32 %v3204, %v4561
      %v4594 = vadd.f32 %v3205, %v4562
      %v4595 = vadd.f32 %v3206, %v4563
      %v4596 = vadd.f32 %v3207, %v4564
      %v4597 = vadd.f32 %v3208, %v4565
      %v4598 = vadd.f32 %v3209, %v4566
      %v4599 = vadd.f32 %v3210, %v4567
      %v4600 = vadd.f32 %v3211, %v4568
      %v4601 = vadd.f32 %v3212, %v4569
      %v4602 = vadd.f32 %v3213, %v4570
      %v4603 = vadd.f32 %v3214, %v4571
      %v4604 = vadd.f32 %v3215, %v4572
      %v4605 = vadd.f32 %v3216, %v4573
      %v4606 = vadd.f32 %v3217, %v4574
      %v4607 = vadd.f32 %v3218, %v4575
      %v4608 = vadd.f32 %v3219, %v4576
      %v4609 = vadd.f32 %v3220, %v4577
      %4610 = vst.msk [vmem:[%s494] sm:$0xff] %vm527, %v4578
      %4611 = vst.msk [vmem:[%s494 + $0x8] sm:$0xff] %vm527, %v4579
      %4612 = vst.msk [vmem:[%s494 + $0x10] sm:$0xff] %vm527, %v4580
      %4613 = vst.msk [vmem:[%s494 + $0x18] sm:$0xff] %vm527, %v4581
      %4614 = vst.msk [vmem:[%s494 + $0x20] sm:$0xff] %vm527, %v4582
      %4615 = vst.msk [vmem:[%s494 + $0x28] sm:$0xff] %vm527, %v4583
      %4616 = vst.msk [vmem:[%s494 + $0x30] sm:$0xff] %vm527, %v4584
      %4617 = vst.msk [vmem:[%s494 + $0x38] sm:$0xff] %vm527, %v4585
      %4618 = vst.msk [vmem:[%s494 + $0x40] sm:$0xff] %vm527, %v4586
      %4619 = vst.msk [vmem:[%s494 + $0x48] sm:$0xff] %vm527, %v4587
      %4620 = vst.msk [vmem:[%s494 + $0x50] sm:$0xff] %vm527, %v4588
      %4621 = vst.msk [vmem:[%s494 + $0x58] sm:$0xff] %vm527, %v4589
      %4622 = vst.msk [vmem:[%s494 + $0x60] sm:$0xff] %vm527, %v4590
      %4623 = vst.msk [vmem:[%s494 + $0x68] sm:$0xff] %vm527, %v4591
      %4624 = vst.msk [vmem:[%s494 + $0x70] sm:$0xff] %vm527, %v4592
      %4625 = vst.msk [vmem:[%s494 + $0x78] sm:$0xff] %vm527, %v4593
      %4626 = vst.msk [vmem:[%s494 + $0x80] sm:$0xff] %vm527, %v4594
      %4627 = vst.msk [vmem:[%s494 + $0x88] sm:$0xff] %vm527, %v4595
      %4628 = vst.msk [vmem:[%s494 + $0x90] sm:$0xff] %vm527, %v4596
      %4629 = vst.msk [vmem:[%s494 + $0x98] sm:$0xff] %vm527, %v4597
      %4630 = vst.msk [vmem:[%s494 + $0xa0] sm:$0xff] %vm527, %v4598
      %4631 = vst.msk [vmem:[%s494 + $0xa8] sm:$0xff] %vm527, %v4599
      %4632 = vst.msk [vmem:[%s494 + $0xb0] sm:$0xff] %vm527, %v4600
      %4633 = vst.msk [vmem:[%s494 + $0xb8] sm:$0xff] %vm527, %v4601
      %4634 = vst.msk [vmem:[%s494 + $0xc0] sm:$0xff] %vm527, %v4602
      %4635 = vst.msk [vmem:[%s494 + $0xc8] sm:$0xff] %vm527, %v4603
      %4636 = vst.msk [vmem:[%s494 + $0xd0] sm:$0xff] %vm527, %v4604
      %4637 = vst.msk [vmem:[%s494 + $0xd8] sm:$0xff] %vm527, %v4605
      %4638 = vst.msk [vmem:[%s494 + $0xe0] sm:$0xff] %vm527, %v4606
      %4639 = vst.msk [vmem:[%s494 + $0xe8] sm:$0xff] %vm527, %v4607
      %4640 = vst.msk [vmem:[%s494 + $0xf0] sm:$0xff] %vm527, %v4608
      %4641 = vst.msk [vmem:[%s494 + $0xf8] sm:$0xff] %vm527, %v4609
      %p4642 = scmp.lt.s32.totalorder %s26, 1
      %s4643 = scalar_select %p4642, %s26, 1
      %s4644 = smul.addr %s4643, 32
      %s4645 = smul.addr %s4644, 8
      %s4646 = scalar_lea.vmem %s15, %s4645
      // Predicated region
      $region81: #{tpu_custom_call.1} parent=79 // pred_check
        %p4647 = pneg %p364
      $region82: #{tpu_custom_call.1} parent=79 // pred_check_branch
        %4649 = sbr.rel (%p4647) target = $region84
      $region83: #{tpu_custom_call.1} parent=79 // pred_region
        _
      $region84: #{tpu_custom_call.1} parent=79 // pred_fallthru
        _
    $region80: #{tpu_custom_call.1} parent=5 // pred_fallthru
      _
    %p4650 = scmp.le.s32.totalorder 2, %s21
    // Predicated region
    $region85: #{tpu_custom_call.1} parent=5 // pred_check
      %p4651 = pneg %p4650
    $region86: #{tpu_custom_call.1} parent=5 // pred_check_branch
      %4653 = sbr.rel (%p4651) target = $region88
    $region87: #{tpu_custom_call.1} parent=5 // pred_region
      %s4654 = ssub.s32 %s21, 2
      // Predicated region
      $region89: #{tpu_custom_call.1} parent=87 // pred_check
        %p4655 = pneg %p370
      $region90: #{tpu_custom_call.1} parent=87 // pred_check_branch
        %4657 = sbr.rel (%p4655) target = $region92
      $region91: #{tpu_custom_call.1} parent=87 // pred_region
        %p4658 = scmp.lt.s32.totalorder %s27, 1
        %s4659 = scalar_select %p4658, %s27, 1
        %s4660 = smul.addr %s4659, 32
        %s4661 = smul.addr %s4660, 8
        %s4662 = scalar_lea.vmem %s15, %s4661
      $region92: #{tpu_custom_call.1} parent=87 // pred_fallthru
        _
    $region88: #{tpu_custom_call.1} parent=5 // pred_fallthru
      _
  $region6: #{tpu_custom_call.1} parent=0 // loop_footer
    %s25 = sadd.s32 1, %s21
  $region7: #{tpu_custom_call.1} parent=0 // loop_footer_branch
    %20 = sbr.rel target = $region3
  $region8: #{tpu_custom_call.1} parent=0 // loop_exit
    _

</llo_original>
